<compile_context>
chip_gen: v7x
topology: tpu7x:2x2x1
jax: 0.10.0
libtpu: 0.0.40
codegen_flags: <defaults>
</compile_context>

<pallas_src>
import functools
import numpy as np
import jax
import jax.numpy as jnp
from jax.experimental import pallas as pl
from jax.experimental.pallas import tpu as pltpu


def _rup(x, m=128):
    return ((int(x) + m - 1) // m) * m


# --------------------------------------------------------------------------- #
# host-side interpolation-matrix builders (cached)
# --------------------------------------------------------------------------- #
@functools.lru_cache(maxsize=None)
def _interp_matrix(in_size, out_size):
    """align_corners=True linear interpolation along one axis as (in, out)."""
    in_size, out_size = int(in_size), int(out_size)
    if out_size == 1:
        src = np.zeros((1,), np.float64)
    else:
        src = np.arange(out_size, dtype=np.float64) * (in_size - 1) / (out_size - 1)
    lo = np.clip(np.floor(src).astype(np.int64), 0, in_size - 1)
    hi = np.clip(lo + 1, 0, in_size - 1)
    frac = src - lo
    w = np.zeros((in_size, out_size), np.float32)
    idx = np.arange(out_size)
    np.add.at(w, (lo, idx), 1.0 - frac)
    np.add.at(w, (hi, idx), frac)
    return w


@functools.lru_cache(maxsize=None)
def _crop_interp_matrix(full_size, start, stop, out_size):
    """Crop [start:stop) of an axis of length `full_size`, then align_corners
    resize to `out_size`, as one (full_size, out_size) matrix (crop offsets
    baked in -> every crop has the same operand shape)."""
    full_size, start, stop, out_size = int(full_size), int(start), int(stop), int(out_size)
    in_size = stop - start
    if out_size == 1:
        src = np.zeros((1,), np.float64)
    else:
        src = np.arange(out_size, dtype=np.float64) * (in_size - 1) / (out_size - 1)
    src = src + start
    lo = np.clip(np.floor(src).astype(np.int64), 0, full_size - 1)
    hi = np.clip(lo + 1, 0, full_size - 1)
    frac = src - lo
    w = np.zeros((full_size, out_size), np.float32)
    idx = np.arange(out_size)
    np.add.at(w, (lo, idx), 1.0 - frac)
    np.add.at(w, (hi, idx), frac)
    return w


@functools.lru_cache(maxsize=None)
def _comb_matrix(full_size, start, stop, mid_size, out_size):
    """Crop -> mid_size -> out_size (two chained align_corners resizes) composed
    into one (full_size, out_size) matrix (exact: both steps are linear)."""
    return (_crop_interp_matrix(full_size, start, stop, mid_size)
            @ _interp_matrix(mid_size, out_size)).astype(np.float32)


# --------------------------------------------------------------------------- #
# Pallas kernel — all matmuls on the MXU, bf16 inputs / f32 accumulation
# --------------------------------------------------------------------------- #
def _fused_crop_decoder_kernel(
        c2b_ref,                      # scalar prefetch: crop -> batch index (SMEM)
        xde2_ref, xe1_ref,            # (1,Cde2*D2,HW2p) f32, (1,Ce1*D1,HW1p) f32
        khw_de2_ref, khw_e1_ref,      # (1,HW2p,HWmp) bf16,   (1,HW1p,HWmp) bf16
        k1_ref, b1e_ref,              # (1,hid*Sd,Kcat) bf16, (hid*Sd,1) f32
        k2_ref, b2e_ref,              # (cout*Sd,hid*Sd) bf16,(cout*Sd,1) f32
        kd_out_ref, khw_out_ref,      # (1,cout*Dmax,cout*Sd) bf16, (1,HWmp,HWop) bf16
        out_ref,                      # (1, cout*Dmax, HWop) f32
        xcat_ref):                    # scratch VMEM (Kcat, HWmp) bf16
    f32, bf16 = jnp.float32, jnp.bfloat16
    rows_de2 = xde2_ref.shape[1]
    rows_e1 = xe1_ref.shape[1]

    # (1) H/W (lane-axis) interpolation of both cropped feature slabs (MXU),
    #     written into one scratch so the first conv is a single dot.
    xcat_ref[0:rows_de2, :] = jnp.dot(
        xde2_ref[0].astype(bf16), khw_de2_ref[0],
        preferred_element_type=f32).astype(bf16)
    xcat_ref[rows_de2:rows_de2 + rows_e1, :] = jnp.dot(
        xe1_ref[0].astype(bf16), khw_e1_ref[0],
        preferred_element_type=f32).astype(bf16)

    # (2) first 1x1x1 conv with the per-crop DEPTH interpolation folded into the
    #     Kron-expanded weights -> one MXU dot, no VPU depth contraction.
    h = jnp.dot(k1_ref[0], xcat_ref[...], preferred_element_type=f32) + b1e_ref[...]
    h = jnp.maximum(h, 0.0)                                   # (hid*Sd, HWmp)

    # (3) second 1x1x1 conv + sigmoid.
    y = jnp.dot(k2_ref[...], h.astype(bf16), preferred_element_type=f32) + b2e_ref[...]
    y = jax.nn.sigmoid(y)                                     # (cout*Sd, HWmp)

    # (4) final per-crop upsample: depth (Sd -> Dmax) FIRST while lanes are the
    #     small Sh*Sw axis (block-diagonal matmul), then the big H/W upsample.
    z = jnp.dot(kd_out_ref[0], y.astype(bf16), preferred_element_type=f32)   # (cout*Dmax, HWmp)
    out_ref[0] = jnp.dot(z.astype(bf16), khw_out_ref[0],
                         preferred_element_type=f32)          # lane-dense store


# --------------------------------------------------------------------------- #
# synthetic `net` parameters
# TODO(synk): the original `self.net` is an externally injected submodule that
# is not defined in this file; a small synthetic decoder (trilinear 2x upsample
# + skip concat + two 1x1x1 convs -> 3 NOC channels) stands in for it.
# --------------------------------------------------------------------------- #
def init_net_params(c_de2, c_e1, hidden=8, c_out=3):
    k = jax.random.PRNGKey(42)
    k1, k2, k3, k4 = jax.random.split(k, 4)
    return {
        "w1": jax.random.normal(k1, (hidden, c_de2 + c_e1), jnp.float32) * 0.2,
        "b1": jax.random.normal(k2, (hidden,), jnp.float32) * 0.05,
        "w2": jax.random.normal(k3, (c_out, hidden), jnp.float32) * 0.2,
        "b2": jax.random.normal(k4, (c_out,), jnp.float32) * 0.05,
    }


# shared (non-per-crop) Kron-expanded conv operands, cached per params
_SHARED_CACHE = {}


def _shared_net_operands(params, Sd):
    key = (id(params["w1"]), id(params["b1"]), id(params["w2"]), id(params["b2"]), int(Sd))
    cached = _SHARED_CACHE.get(key)
    if cached is not None:
        return cached
    w2 = np.asarray(params["w2"], np.float64)
    b1 = np.asarray(params["b1"], np.float64)
    b2 = np.asarray(params["b2"], np.float64)
    eye = np.eye(Sd, dtype=np.float64)
    k2 = jnp.asarray(np.kron(w2, eye).astype(np.float32), dtype=jnp.bfloat16)
    b1e = jnp.asarray(np.repeat(b1, Sd)[:, None].astype(np.float32))
    b2e = jnp.asarray(np.repeat(b2, Sd)[:, None].astype(np.float32))
    cached = (k2, b1e, b2e)
    _SHARED_CACHE[key] = cached
    return cached


# --------------------------------------------------------------------------- #
# BNocDec2.forward equivalent (one fused pallas_call for all crops / batches)
# --------------------------------------------------------------------------- #
def bnocdec2_forward(params, x_d2, x_e2, x_e1, bbbox_lvl0, bbox_shape):
    bbox_shape = np.asarray(bbox_shape, np.int64)
    Td, Th, Tw = [int(v) for v in bbox_shape]            # level-2 crop target
    Sd, Sh, Sw = [int(v) for v in (2 * bbox_shape)]      # net / e1-crop spatial
    N, C_d2 = int(x_d2.shape[0]), int(x_d2.shape[1])
    C_e2, C_e1 = int(x_e2.shape[1]), int(x_e1.shape[1])
    Cde2 = C_d2 + C_e2
    D2, H2, W2 = [int(v) for v in x_d2.shape[2:]]
    D1, H1, W1 = [int(v) for v in x_e1.shape[2:]]
    HW2, HW1, HWm = H2 * W2, H1 * W1, Sh * Sw

    hid = int(params["w1"].shape[0])
    cout = int(params["w2"].shape[0])
    w1_np = np.asarray(params["w1"], np.float64)

    # ---- flatten the per-batch crop lists.
    # NOTE: crops of the same batch element MUST stay contiguous in grid order
    # so consecutive grid steps present the same (c2b[i],0,0) block index and
    # Pallas skips re-DMA of the batch feature volumes.
    crop_b, boxes0 = [], []
    for B in range(len(bbbox_lvl0)):
        bb = np.atleast_2d(np.asarray(bbbox_lvl0[B]))
        for j in range(bb.shape[0]):
            crop_b.append(B)
            boxes0.append(bb[j].astype(np.int64))
    n_crops = len(boxes0)
    if n_crops == 0:
        return [[] for _ in bbbox_lvl0]

    out_sizes = [tuple(int(v) for v in (b[3:6] - b[0:3])) for b in boxes0]
    Dmax = max(s[0] for s in out_sizes)
    Hmax = max(s[1] for s in out_sizes)
    Wmax = max(s[2] for s in out_sizes)
    HWo = Hmax * Wmax

    # lane axes padded to 128 multiples -> unmasked loads/stores for any bbox
    HW2p, HW1p, HWmp, HWop = _rup(HW2), _rup(HW1), _rup(HWm), _rup(HWo)

    # ---- per-crop operands (numpy, interpolation builders lru_cached) --------
    khw_de2, khw_e1, khw_out, k1_list, kd_out = [], [], [], [], []
    for b0, (Df, Hf, Wf) in zip(boxes0, out_sizes):
        bl2 = (b0.astype(np.float64) / 4.0).astype(np.int64)   # torch `.int()` trunc
        d0, h0, w0, d1, h1, w1 = [int(v) for v in bl2]

        # cat(d2,e2) path: crop (lvl-2 grid) -> bbox_shape -> 2*bbox_shape, composed
        m = np.zeros((HW2p, HWmp), np.float32)
        m[:HW2, :HWm] = np.kron(_comb_matrix(H2, h0, h1, Th, Sh),
                                _comb_matrix(W2, w0, w1, Tw, Sw))
        khw_de2.append(m)
        md_de2 = _comb_matrix(D2, d0, d1, Td, Sd)               # (D2, Sd)

        # e1 skip path: crop (lvl-1 grid, bbox_lvl2*2) -> 2*bbox_shape
        # TODO(synk): for production-size e1 levels (HW1 >= 4096) the khw_e1
        # Kron should be K-tiled (extra "arbitrary" grid axis) on v7x (64 MiB VMEM).
        m = np.zeros((HW1p, HWmp), np.float32)
        m[:HW1, :HWm] = np.kron(_crop_interp_matrix(H1, 2 * h0, 2 * h1, Sh),
                                _crop_interp_matrix(W1, 2 * w0, 2 * w1, Sw))
        khw_e1.append(m)
        md_e1 = _crop_interp_matrix(D1, 2 * d0, 2 * d1, Sd)     # (D1, Sd)

        # first conv with the per-crop depth interpolation folded in:
        #   k1' = [ w1[:, :Cde2] (x) md_de2^T | w1[:, Cde2:] (x) md_e1^T ]
        k1_list.append(np.concatenate(
            [np.kron(w1_np[:, :Cde2], md_de2.T.astype(np.float64)),
             np.kron(w1_np[:, Cde2:], md_e1.T.astype(np.float64))],
            axis=1).astype(np.float32))                         # (hid*Sd, Cde2*D2+Ce1*D1)

        # final upsample 2*bbox_shape -> (Df,Hf,Wf), zero-padded to the batch max
        mo_d = np.zeros((Sd, Dmax), np.float32); mo_d[:, :Df] = _interp_matrix(Sd, Df)
        mo_h = np.zeros((Sh, Hmax), np.float32); mo_h[:, :Hf] = _interp_matrix(Sh, Hf)
        mo_w = np.zeros((Sw, Wmax), np.float32); mo_w[:, :Wf] = _interp_matrix(Sw, Wf)
        kd_out.append(np.kron(np.eye(cout, dtype=np.float32), mo_d.T))  # (cout*Dmax, cout*Sd)
        m = np.zeros((HWmp, HWop), np.float32)
        m[:HWm, :HWo] = np.kron(mo_h, mo_w)
        khw_out.append(m)

    bf16_stack = lambda lst: jnp.asarray(np.stack(lst), dtype=jnp.bfloat16)

    # ---- device operands ------------------------------------------------------
    x_de2_all = jnp.concatenate([x_d2, x_e2], axis=1).astype(jnp.float32)
    x_de2_all = x_de2_all.reshape(N, Cde2 * D2, HW2)
    x_e1_all = x_e1.astype(jnp.float32).reshape(N, C_e1 * D1, HW1)
    if HW2p != HW2:
        x_de2_all = jnp.pad(x_de2_all, ((0, 0), (0, 0), (0, HW2p - HW2)))
    if HW1p != HW1:
        x_e1_all = jnp.pad(x_e1_all, ((0, 0), (0, 0), (0, HW1p - HW1)))
    crop2b = jnp.asarray(np.asarray(crop_b, np.int32))

    k2, b1e, b2e = _shared_net_operands(params, Sd)
    khw_de2_d, khw_e1_d = bf16_stack(khw_de2), bf16_stack(khw_e1)
    k1_d, kd_out_d, khw_out_d = bf16_stack(k1_list), bf16_stack(kd_out), bf16_stack(khw_out)

    R_de2, R_e1 = Cde2 * D2, C_e1 * D1
    Kcat = R_de2 + R_e1

    def _run(buffer_count):
        def pc_spec(shape, index_map):
            # per-crop operand spec; deeper buffering hides the per-crop DMA
            if buffer_count is not None:
                try:
                    return pl.BlockSpec(shape, index_map,
                                        pipeline_mode=pl.Buffered(buffer_count))
                except Exception:
                    pass
            return pl.BlockSpec(shape, index_map)

        grid_spec = pltpu.PrefetchScalarGridSpec(
            num_scalar_prefetch=1,
            grid=(n_crops,),
            in_specs=[
                pl.BlockSpec((1, R_de2, HW2p), lambda i, c2b: (c2b[i], 0, 0)),
                pl.BlockSpec((1, R_e1, HW1p), lambda i, c2b: (c2b[i], 0, 0)),
                pc_spec((1, HW2p, HWmp), lambda i, c2b: (i, 0, 0)),
                pc_spec((1, HW1p, HWmp), lambda i, c2b: (i, 0, 0)),
                pc_spec((1, hid * Sd, Kcat), lambda i, c2b: (i, 0, 0)),
                pl.BlockSpec((hid * Sd, 1), lambda i, c2b: (0, 0)),
                pl.BlockSpec((cout * Sd, hid * Sd), lambda i, c2b: (0, 0)),
                pl.BlockSpec((cout * Sd, 1), lambda i, c2b: (0, 0)),
                pc_spec((1, cout * Dmax, cout * Sd), lambda i, c2b: (i, 0, 0)),
                pc_spec((1, HWmp, HWop), lambda i, c2b: (i, 0, 0)),
            ],
            out_specs=pl.BlockSpec((1, cout * Dmax, HWop), lambda i, c2b: (i, 0, 0)),
            scratch_shapes=[pltpu.VMEM((Kcat, HWmp), jnp.bfloat16)],
        )
        return pl.pallas_call(
            _fused_crop_decoder_kernel,
            out_shape=jax.ShapeDtypeStruct((n_crops, cout * Dmax, HWop), jnp.float32),
            grid_spec=grid_spec,
            compiler_params=pltpu.CompilerParams(
                dimension_semantics=("parallel",),
                vmem_limit_bytes=48 * 1024 * 1024,   # <= v7x's 64 MiB physical VMEM
            ),
        )(crop2b, x_de2_all, x_e1_all, khw_de2_d, khw_e1_d,
          k1_d, b1e, k2, b2e, kd_out_d, khw_out_d)

    try:
        out = _run(3)          # triple-buffer the per-crop matrices
    except Exception:
        out = _run(None)       # conservative fallback: default double-buffering

    # ---- host: strip lane padding, reshape, slice off per-crop padding --------
    out5 = out[:, :, :HWo].reshape(n_crops, cout, Dmax, Hmax, Wmax)
    results = [[] for _ in bbbox_lvl0]
    for idx, (B, (Df, Hf, Wf)) in enumerate(zip(crop_b, out_sizes)):
        results[B].append(out5[idx:idx + 1, :, :Df, :Hf, :Wf])
    return results
    # TODO(synk): loss / validation_step / training_step of BNocDec2 are
    # host-side torch bookkeeping (Kabsch, symmetry search, dict plumbing) and
    # are not part of the forward pass implemented here.


# --------------------------------------------------------------------------- #
# pure numpy (float64) reference of the same forward, for validation
# --------------------------------------------------------------------------- #
def _np_resize(x, out_size):
    do, ho, wo = [int(v) for v in out_size]
    md = _interp_matrix(x.shape[1], do).astype(np.float64)
    mh = _interp_matrix(x.shape[2], ho).astype(np.float64)
    mw = _interp_matrix(x.shape[3], wo).astype(np.float64)
    y = np.einsum('cdhw,dp->cphw', x, md)
    y = np.einsum('cphw,hq->cpqw', y, mh)
    return np.einsum('cpqw,wr->cpqr', y, mw)


def _reference_forward(params, x_d2, x_e2, x_e1, bbbox_lvl0, bbox_shape):
    w1 = np.asarray(params["w1"], np.float64); b1 = np.asarray(params["b1"], np.float64)
    w2 = np.asarray(params["w2"], np.float64); b2 = np.asarray(params["b2"], np.float64)
    xd2, xe2, xe1 = [np.asarray(a, np.float64) for a in (x_d2, x_e2, x_e1)]
    bbox_shape = np.asarray(bbox_shape, np.int64)
    outs = []
    for B in range(len(bbbox_lvl0)):
        bb = np.atleast_2d(np.asarray(bbbox_lvl0[B]))
        x_de2 = np.concatenate([xd2[B], xe2[B]], axis=0)
        per_b = []
        for j in range(bb.shape[0]):
            b0 = bb[j].astype(np.int64)
            bl2 = (b0.astype(np.float64) / 4.0).astype(np.int64)
            d0, h0, w0, d1, h1, w1v = [int(v) for v in bl2]
            crop_de2 = x_de2[:, d0:d1, h0:h1, w0:w1v]
            crop_e1 = xe1[B][:, 2 * d0:2 * d1, 2 * h0:2 * h1, 2 * w0:2 * w1v]
            r_de2 = _np_resize(crop_de2, bbox_shape)
            r_e1 = _np_resize(crop_e1, 2 * bbox_shape)
            up = _np_resize(r_de2, 2 * bbox_shape)
            xc = np.concatenate([up, r_e1], axis=0)
            h = np.maximum(np.einsum('oc,cdhw->odhw', w1, xc) + b1[:, None, None, None], 0.0)
            y = np.einsum('oc,cdhw->odhw', w2, h) + b2[:, None, None, None]
            y = 1.0 / (1.0 + np.exp(-y))
            per_b.append(_np_resize(y, b0[3:6] - b0[0:3])[None])
        outs.append(per_b)
    return outs


# --------------------------------------------------------------------------- #
if __name__ == "__main__":
    key = jax.random.PRNGKey(0)
    k1, k2, k3 = jax.random.split(key, 3)
    C_d2, C_e2, C_e1 = 4, 4, 4
    # level-0 scene grid = 64^3 -> level-2 features 16^3, level-1 features 32^3
    x_d2 = jax.random.normal(k1, (2, C_d2, 16, 16, 16), jnp.float32)
    x_e2 = jax.random.normal(k2, (2, C_e2, 16, 16, 16), jnp.float32)
    x_e1 = jax.random.normal(k3, (2, C_e1, 32, 32, 32), jnp.float32)

    bbox_shape = np.array([8, 8, 8])
    bbbox_lvl0 = [
        np.array([[0, 0, 0, 32, 24, 16],
                  [8, 16, 4, 40, 48, 28]], dtype=np.int32),
        np.array([[4, 8, 12, 36, 40, 44]], dtype=np.int32),
    ]

    params = init_net_params(C_d2 + C_e2, C_e1, hidden=8, c_out=3)

    bx_d0_crops = bnocdec2_forward(params, x_d2, x_e2, x_e1, bbbox_lvl0, bbox_shape)
    ref_crops = _reference_forward(params, x_d2, x_e2, x_e1, bbbox_lvl0, bbox_shape)

    max_diff = 0.0
    for crops, refs, boxes in zip(bx_d0_crops, ref_crops, bbbox_lvl0):
        boxes2d = np.atleast_2d(np.asarray(boxes))
        for crop, ref, box in zip(crops, refs, boxes2d):
            crop = np.asarray(jax.block_until_ready(crop))
            expect = (1, 3) + tuple(int(v) for v in (box[3:6] - box[:3]))
            assert crop.shape == expect, (crop.shape, expect)
            assert np.all(np.isfinite(crop))
            max_diff = max(max_diff, float(np.max(np.abs(crop - ref))))
    # tolerance covers f32 interpolation-matrix composition + bf16 MXU inputs
    # (f32 accumulation); outputs are post-sigmoid so errors are compressed.
    assert max_diff < 5e-2, f"mismatch vs reference: {max_diff}"
    print("KERNEL_OK")
</pallas_src>

<mosaic_0001>
module attributes {stable_mosaic.version = 11 : i64} {
  func.func @_fused_crop_decoder_kernel(%arg0: i32, %arg1: memref<3xi32, #tpu.memory_space<smem>>, %arg2: memref<1x128x256xf32, #tpu.memory_space<vmem>>, %arg3: memref<1x128x1024xf32, #tpu.memory_space<vmem>>, %arg4: memref<1x256x256xbf16, #tpu.memory_space<vmem>>, %arg5: memref<1x1024x256xbf16, #tpu.memory_space<vmem>>, %arg6: memref<1x128x256xbf16, #tpu.memory_space<vmem>>, %arg7: memref<128x1xf32, #tpu.memory_space<vmem>>, %arg8: memref<48x128xbf16, #tpu.memory_space<vmem>>, %arg9: memref<48x1xf32, #tpu.memory_space<vmem>>, %arg10: memref<1x96x48xbf16, #tpu.memory_space<vmem>>, %arg11: memref<1x256x1024xbf16, #tpu.memory_space<vmem>>, %arg12: memref<1x96x1024xf32, #tpu.memory_space<vmem>>, %arg13: memref<256x256xbf16, #tpu.memory_space<vmem>>) attributes {dimension_semantics = [#tpu.dimension_semantics<parallel>], iteration_bounds = array<i64: 3>, scalar_prefetch = 1 : i64, scratch_operands = 1 : i64, tpu.core_type = #tpu.core_type<tc>, window_params = [{transform_indices = @transform_0, window_bounds = array<i64: 1, 128, 256>}, {transform_indices = @transform_1, window_bounds = array<i64: 1, 128, 1024>}, {transform_indices = @transform_2, window_bounds = array<i64: 1, 256, 256>}, {transform_indices = @transform_3, window_bounds = array<i64: 1, 1024, 256>}, {transform_indices = @transform_4, window_bounds = array<i64: 1, 128, 256>}, {pipeline_mode = #tpu.pipeline_mode<synchronous>, transform_indices = @transform_5, window_bounds = array<i64: 128, 1>}, {pipeline_mode = #tpu.pipeline_mode<synchronous>, transform_indices = @transform_6, window_bounds = array<i64: 48, 128>}, {pipeline_mode = #tpu.pipeline_mode<synchronous>, transform_indices = @transform_7, window_bounds = array<i64: 48, 1>}, {transform_indices = @transform_8, window_bounds = array<i64: 1, 96, 48>}, {transform_indices = @transform_9, window_bounds = array<i64: 1, 256, 1024>}, {transform_indices = @transform_10, window_bounds = array<i64: 1, 96, 1024>}]} {
    %c0 = arith.constant 0 : index
    %c0_0 = arith.constant 0 : index
    %c0_1 = arith.constant 0 : index
    %0 = vector.load %arg2[%c0, %c0_0, %c0_1] : memref<1x128x256xf32, #tpu.memory_space<vmem>>, vector<1x128x256xf32>
    %1 = vector.shape_cast %0 : vector<1x128x256xf32> to vector<128x256xf32>
    %2 = arith.truncf %1 : vector<128x256xf32> to vector<128x256xbf16>
    %c0_2 = arith.constant 0 : index
    %c0_3 = arith.constant 0 : index
    %c0_4 = arith.constant 0 : index
    %3 = vector.load %arg4[%c0_2, %c0_3, %c0_4] : memref<1x256x256xbf16, #tpu.memory_space<vmem>>, vector<1x256x256xbf16>
    %4 = vector.shape_cast %3 : vector<1x256x256xbf16> to vector<256x256xbf16>
    %cst = arith.constant dense<0.000000e+00> : vector<128x256xf32>
    %5 = tpu.matmul %2, %4, %cst {dimension_numbers = #tpu.dot_dimension_numbers<[1], [0], [0], [1], [0, 0, 1, 1], [], []>} : vector<128x256xbf16>, vector<256x256xbf16>, vector<128x256xf32> -> vector<128x256xf32>
    %6 = arith.truncf %5 : vector<128x256xf32> to vector<128x256xbf16>
    %c0_5 = arith.constant 0 : index
    %c0_6 = arith.constant 0 : index
    %7 = vector.load %arg13[%c0_5, %c0_6] : memref<256x256xbf16, #tpu.memory_space<vmem>>, vector<128x256xbf16>
    tpu.vector_store %arg13[%c0_5, %c0_6], %6 {strides = array<i32>} : memref<256x256xbf16, #tpu.memory_space<vmem>>, vector<128x256xbf16>,
    %c0_7 = arith.constant 0 : index
    %c0_8 = arith.constant 0 : index
    %c0_9 = arith.constant 0 : index
    %8 = vector.load %arg3[%c0_7, %c0_8, %c0_9] : memref<1x128x1024xf32, #tpu.memory_space<vmem>>, vector<1x128x1024xf32>
    %9 = vector.shape_cast %8 : vector<1x128x1024xf32> to vector<128x1024xf32>
    %10 = arith.truncf %9 : vector<128x1024xf32> to vector<128x1024xbf16>
    %c0_10 = arith.constant 0 : index
    %c0_11 = arith.constant 0 : index
    %c0_12 = arith.constant 0 : index
    %11 = vector.load %arg5[%c0_10, %c0_11, %c0_12] : memref<1x1024x256xbf16, #tpu.memory_space<vmem>>, vector<1x1024x256xbf16>
    %12 = vector.shape_cast %11 : vector<1x1024x256xbf16> to vector<1024x256xbf16>
    %cst_13 = arith.constant dense<0.000000e+00> : vector<128x256xf32>
    %13 = tpu.matmul %10, %12, %cst_13 {dimension_numbers = #tpu.dot_dimension_numbers<[1], [0], [0], [1], [0, 0, 1, 1], [], []>} : vector<128x1024xbf16>, vector<1024x256xbf16>, vector<128x256xf32> -> vector<128x256xf32>
    %14 = arith.truncf %13 : vector<128x256xf32> to vector<128x256xbf16>
    %c128 = arith.constant 128 : index
    %c0_14 = arith.constant 0 : index
    %15 = vector.load %arg13[%c128, %c0_14] : memref<256x256xbf16, #tpu.memory_space<vmem>>, vector<128x256xbf16>
    tpu.vector_store %arg13[%c128, %c0_14], %14 {strides = array<i32>} : memref<256x256xbf16, #tpu.memory_space<vmem>>, vector<128x256xbf16>,
    %c0_15 = arith.constant 0 : index
    %c0_16 = arith.constant 0 : index
    %c0_17 = arith.constant 0 : index
    %16 = vector.load %arg6[%c0_15, %c0_16, %c0_17] : memref<1x128x256xbf16, #tpu.memory_space<vmem>>, vector<1x128x256xbf16>
    %17 = vector.shape_cast %16 : vector<1x128x256xbf16> to vector<128x256xbf16>
    %c0_18 = arith.constant 0 : index
    %c0_19 = arith.constant 0 : index
    %18 = vector.load %arg13[%c0_18, %c0_19] : memref<256x256xbf16, #tpu.memory_space<vmem>>, vector<256x256xbf16>
    %cst_20 = arith.constant dense<0.000000e+00> : vector<128x256xf32>
    %19 = tpu.matmul %17, %18, %cst_20 {dimension_numbers = #tpu.dot_dimension_numbers<[1], [0], [0], [1], [0, 0, 1, 1], [], []>} : vector<128x256xbf16>, vector<256x256xbf16>, vector<128x256xf32> -> vector<128x256xf32>
    %c0_21 = arith.constant 0 : index
    %c0_22 = arith.constant 0 : index
    %20 = vector.load %arg7[%c0_21, %c0_22] : memref<128x1xf32, #tpu.memory_space<vmem>>, vector<128x1xf32>
    %21 = vector.broadcast %20 : vector<128x1xf32> to vector<128x256xf32>
    %22 = arith.addf %19, %21 : vector<128x256xf32>
    %cst_23 = arith.constant 0.000000e+00 : f32
    %23 = vector.broadcast %cst_23 : f32 to vector<128x256xf32>
    %24 = arith.maximumf %22, %23 : vector<128x256xf32>
    %c0_24 = arith.constant 0 : index
    %c0_25 = arith.constant 0 : index
    %25 = vector.load %arg8[%c0_24, %c0_25] : memref<48x128xbf16, #tpu.memory_space<vmem>>, vector<48x128xbf16>
    %26 = arith.truncf %24 : vector<128x256xf32> to vector<128x256xbf16>
    %cst_26 = arith.constant dense<0.000000e+00> : vector<48x256xf32>
    %27 = tpu.matmul %25, %26, %cst_26 {dimension_numbers = #tpu.dot_dimension_numbers<[1], [0], [0], [1], [0, 0, 1, 1], [], []>} : vector<48x128xbf16>, vector<128x256xbf16>, vector<48x256xf32> -> vector<48x256xf32>
    %c0_27 = arith.constant 0 : index
    %c0_28 = arith.constant 0 : index
    %28 = vector.load %arg9[%c0_27, %c0_28] : memref<48x1xf32, #tpu.memory_space<vmem>>, vector<48x1xf32>
    %29 = vector.broadcast %28 : vector<48x1xf32> to vector<48x256xf32>
    %30 = arith.addf %27, %29 : vector<48x256xf32>
    %31 = arith.negf %30 : vector<48x256xf32>
    %32 = math.exp %31 : vector<48x256xf32>
    %cst_29 = arith.constant 1.000000e+00 : f32
    %33 = vector.broadcast %cst_29 : f32 to vector<48x256xf32>
    %34 = arith.addf %33, %32 : vector<48x256xf32>
    %35 = arith.divf %33, %34 : vector<48x256xf32>
    %c0_30 = arith.constant 0 : index
    %c0_31 = arith.constant 0 : index
    %c0_32 = arith.constant 0 : index
    %36 = vector.load %arg10[%c0_30, %c0_31, %c0_32] : memref<1x96x48xbf16, #tpu.memory_space<vmem>>, vector<1x96x48xbf16>
    %37 = vector.shape_cast %36 : vector<1x96x48xbf16> to vector<96x48xbf16>
    %38 = arith.truncf %35 : vector<48x256xf32> to vector<48x256xbf16>
    %cst_33 = arith.constant dense<0.000000e+00> : vector<96x256xf32>
    %39 = tpu.matmul %37, %38, %cst_33 {dimension_numbers = #tpu.dot_dimension_numbers<[1], [0], [0], [1], [0, 0, 1, 1], [], []>} : vector<96x48xbf16>, vector<48x256xbf16>, vector<96x256xf32> -> vector<96x256xf32>
    %40 = arith.truncf %39 : vector<96x256xf32> to vector<96x256xbf16>
    %c0_34 = arith.constant 0 : index
    %c0_35 = arith.constant 0 : index
    %c0_36 = arith.constant 0 : index
    %41 = vector.load %arg11[%c0_34, %c0_35, %c0_36] : memref<1x256x1024xbf16, #tpu.memory_space<vmem>>, vector<1x256x1024xbf16>
    %42 = vector.shape_cast %41 : vector<1x256x1024xbf16> to vector<256x1024xbf16>
    %cst_37 = arith.constant dense<0.000000e+00> : vector<96x1024xf32>
    %43 = tpu.matmul %40, %42, %cst_37 {dimension_numbers = #tpu.dot_dimension_numbers<[1], [0], [0], [1], [0, 0, 1, 1], [], []>} : vector<96x256xbf16>, vector<256x1024xbf16>, vector<96x1024xf32> -> vector<96x1024xf32>
    %c0_38 = arith.constant 0 : index
    %c0_39 = arith.constant 0 : index
    %c0_40 = arith.constant 0 : index
    %44 = vector.load %arg12[%c0_38, %c0_39, %c0_40] : memref<1x96x1024xf32, #tpu.memory_space<vmem>>, vector<1x96x1024xf32>
    %45 = vector.shape_cast %44 : vector<1x96x1024xf32> to vector<96x1024xf32>
    %46 = vector.shape_cast %43 : vector<96x1024xf32> to vector<1x96x1024xf32>
    tpu.vector_store %arg12[%c0_38, %c0_39, %c0_40], %46 {strides = array<i32>} : memref<1x96x1024xf32, #tpu.memory_space<vmem>>, vector<1x96x1024xf32>,
    return
  }
  func.func @transform_0(%arg0: i32, %arg1: memref<3xi32, #tpu.memory_space<smem>>) -> (i32, i32, i32) {
    %0 = arith.index_cast %arg0 : i32 to index
    %1 = memref.load %arg1[%0] : memref<3xi32, #tpu.memory_space<smem>>
    %c0_i32 = arith.constant 0 : i32
    %c0_i32_0 = arith.constant 0 : i32
    %c0_i32_1 = arith.constant 0 : i32
    return %1, %c0_i32, %c0_i32_0 : i32, i32, i32
  }
  func.func @transform_1(%arg0: i32, %arg1: memref<3xi32, #tpu.memory_space<smem>>) -> (i32, i32, i32) {
    %0 = arith.index_cast %arg0 : i32 to index
    %1 = memref.load %arg1[%0] : memref<3xi32, #tpu.memory_space<smem>>
    %c0_i32 = arith.constant 0 : i32
    %c0_i32_0 = arith.constant 0 : i32
    %c0_i32_1 = arith.constant 0 : i32
    return %1, %c0_i32, %c0_i32_0 : i32, i32, i32
  }
  func.func @transform_2(%arg0: i32, %arg1: memref<3xi32, #tpu.memory_space<smem>>) -> (i32, i32, i32) {
    %c0_i32 = arith.constant 0 : i32
    %c0_i32_0 = arith.constant 0 : i32
    %c0_i32_1 = arith.constant 0 : i32
    return %arg0, %c0_i32, %c0_i32_0 : i32, i32, i32
  }
  func.func @transform_3(%arg0: i32, %arg1: memref<3xi32, #tpu.memory_space<smem>>) -> (i32, i32, i32) {
    %c0_i32 = arith.constant 0 : i32
    %c0_i32_0 = arith.constant 0 : i32
    %c0_i32_1 = arith.constant 0 : i32
    return %arg0, %c0_i32, %c0_i32_0 : i32, i32, i32
  }
  func.func @transform_4(%arg0: i32, %arg1: memref<3xi32, #tpu.memory_space<smem>>) -> (i32, i32, i32) {
    %c0_i32 = arith.constant 0 : i32
    %c0_i32_0 = arith.constant 0 : i32
    %c0_i32_1 = arith.constant 0 : i32
    return %arg0, %c0_i32, %c0_i32_0 : i32, i32, i32
  }
  func.func @transform_5(%arg0: i32, %arg1: memref<3xi32, #tpu.memory_space<smem>>) -> (i32, i32) {
    %c0_i32 = arith.constant 0 : i32
    %c0_i32_0 = arith.constant 0 : i32
    %c0_i32_1 = arith.constant 0 : i32
    return %c0_i32, %c0_i32_0 : i32, i32
  }
  func.func @transform_6(%arg0: i32, %arg1: memref<3xi32, #tpu.memory_space<smem>>) -> (i32, i32) {
    %c0_i32 = arith.constant 0 : i32
    %c0_i32_0 = arith.constant 0 : i32
    %c0_i32_1 = arith.constant 0 : i32
    return %c0_i32, %c0_i32_0 : i32, i32
  }
  func.func @transform_7(%arg0: i32, %arg1: memref<3xi32, #tpu.memory_space<smem>>) -> (i32, i32) {
    %c0_i32 = arith.constant 0 : i32
    %c0_i32_0 = arith.constant 0 : i32
    %c0_i32_1 = arith.constant 0 : i32
    return %c0_i32, %c0_i32_0 : i32, i32
  }
  func.func @transform_8(%arg0: i32, %arg1: memref<3xi32, #tpu.memory_space<smem>>) -> (i32, i32, i32) {
    %c0_i32 = arith.constant 0 : i32
    %c0_i32_0 = arith.constant 0 : i32
    %c0_i32_1 = arith.constant 0 : i32
    return %arg0, %c0_i32, %c0_i32_0 : i32, i32, i32
  }
  func.func @transform_9(%arg0: i32, %arg1: memref<3xi32, #tpu.memory_space<smem>>) -> (i32, i32, i32) {
    %c0_i32 = arith.constant 0 : i32
    %c0_i32_0 = arith.constant 0 : i32
    %c0_i32_1 = arith.constant 0 : i32
    return %arg0, %c0_i32, %c0_i32_0 : i32, i32, i32
  }
  func.func @transform_10(%arg0: i32, %arg1: memref<3xi32, #tpu.memory_space<smem>>) -> (i32, i32, i32) {
    %c0_i32 = arith.constant 0 : i32
    %c0_i32_0 = arith.constant 0 : i32
    %c0_i32_1 = arith.constant 0 : i32
    return %arg0, %c0_i32, %c0_i32_0 : i32, i32, i32
  }
}

</mosaic_0001>

<llo_original>
// kernel: tpu_custom_call.1
$region0: #{tpu_custom_call.1}
  #allocation0 [shape = 'u32[]', space=smem, size = 0x4, offset = 0x4, fixed_abs, tag = 'smem constant byte address 0x4 - core index']
  #allocation1 [shape = 'u32[144,128]{1,0:T(1,128)}', space=vmem, size = 0x12000, scoped, tag = 'internal scratch']
  #allocation2 [shape = 'bf16[256,256]{1,0:T(16,128)(2,1)}', space=vmem, size = 0x20000, scoped, tag = 'scratch operand']
  #allocation3 [shape = 's32[1]{0}', space=sflag, size = 0x4, scoped, tag = 'scoped memory for tpu_custom_call.1']
  #allocation4 [shape = 'u8[512]{0}', space=smem, size = 0x200, scoped, tag = 'prefetched SMEM operand 0']
  %s0 = inlined_call_operand.hbm [shape: s32[3], index: 0, kind: input, shape index: {}]
  %s1 = inlined_call_operand.hbm [shape: f32[2,128,256], index: 1, kind: input, shape index: {}]
  %s2 = inlined_call_operand.hbm [shape: f32[2,128,1024], index: 2, kind: input, shape index: {}]
  %s3 = inlined_call_operand.hbm [shape: bf16[3,256,256], index: 3, kind: input, shape index: {}]
  %s4 = inlined_call_operand.hbm [shape: bf16[3,1024,256], index: 4, kind: input, shape index: {}]
  %s5 = inlined_call_operand.hbm [shape: bf16[3,128,256], index: 5, kind: input, shape index: {}]
  %s6 = inlined_call_operand.vmem [shape: f32[128,1], index: 6, kind: input, shape index: {}]
  %s7 = inlined_call_operand.hbm [shape: bf16[48,128], index: 7, kind: input, shape index: {}]
  %s8 = inlined_call_operand.vmem [shape: f32[48,1], index: 8, kind: input, shape index: {}]
  %s9 = inlined_call_operand.vmem [shape: bf16[3,96,48], index: 9, kind: input, shape index: {}]
  %s10 = inlined_call_operand.hbm [shape: bf16[3,256,1024], index: 10, kind: input, shape index: {}]
  %s11 = inlined_call_operand.hbm [shape: f32[3,96,1024], index: 11, kind: output, shape index: {}]
  %s12 = sld [smem:[#allocation0]]
  $region101: #{tpu_custom_call.1} parent=0
    _
  %s14 = ssub.s32 1, %s12
  %s15 = scalar_select 0, %s14, %s12
  %17 = dma.hbm_to_smem %s0, 16, [#allocation4], [#allocation3]
  %18 = dma.done [#allocation3], 16
  %19 = sfence
  $region1: #{tpu_custom_call.1} parent=0
    #allocation5 [shape = 'u8[262144]{0}', space=vmem, size = 0x40000, scoped, tag = 'input window, operand 1']
    #allocation6 [shape = 's32[2]{0}', space=sflag, size = 0x8, scoped, tag = 'scoped memory for tpu_custom_call.1']
    #allocation7 [shape = 's32[2]{0}', space=sflag, size = 0x8, scoped, tag = 'scoped memory for tpu_custom_call.1']
    #allocation8 [shape = 'u8[1048576]{0}', space=vmem, size = 0x100000, scoped, tag = 'input window, operand 2']
    #allocation9 [shape = 's32[2]{0}', space=sflag, size = 0x8, scoped, tag = 'scoped memory for tpu_custom_call.1']
    #allocation10 [shape = 'u8[262144]{0}', space=vmem, size = 0x40000, scoped, tag = 'input window, operand 3']
    #allocation11 [shape = 'u8[1048576]{0}', space=vmem, size = 0x100000, scoped, tag = 'input window, operand 4']
    #allocation12 [shape = 's32[2]{0}', space=sflag, size = 0x8, scoped, tag = 'scoped memory for tpu_custom_call.1']
    #allocation13 [shape = 'u8[131072]{0}', space=vmem, size = 0x20000, scoped, tag = 'input window, operand 5']
    #allocation14 [shape = 'u8[12288]{0}', space=vmem, size = 0x3000, scoped, tag = 'input window, operand 7, single buffered']
    #allocation15 [shape = 's32[1]{0}', space=sflag, size = 0x4, scoped, tag = 'scoped memory for tpu_custom_call.1']
    #allocation16 [shape = 'u8[1048576]{0}', space=vmem, size = 0x100000, scoped, tag = 'input window, operand 10']
    #allocation17 [shape = 'u8[786432]{0}', space=vmem, size = 0xc0000, scoped, tag = 'output window, operand 0']
    %20 = vsyncpa [#allocation6], 0
    %s21 = scalar_lea.sflag [#allocation6], 1
    %22 = vsyncpa %s21, 0
    %23 = vsyncpa [#allocation9], 0
    %s24 = scalar_lea.sflag [#allocation9], 1
    %25 = vsyncpa %s24, 0
    %26 = vsyncpa [#allocation12], 0
    %s27 = scalar_lea.sflag [#allocation12], 1
    %28 = vsyncpa %s27, 0
    %29 = vsyncpa [#allocation15], 0
    %30 = vsyncpa [#allocation7], 0
    %s31 = scalar_lea.sflag [#allocation7], 1
    %32 = vsyncpa %s31, 0
    loop: start=0, step=1, limit=5
    $region2: #{tpu_custom_call.1} parent=1 // loop_pre_header
      _
    $region3: #{tpu_custom_call.1} parent=1 // loop_header
      %s34 = sphi 0, %s38
      %p35 = scmp.ge.s32.totalorder %s34, 5
      %s46 = sphi 0, %s48
      %s49 = sphi 0, %s46
      %s50 = sphi 0, %s49
      %s66 = sphi 0, %s50
      %s74 = sphi 0, %s76
      %s77 = sphi 0, %s74
      %s78 = sphi 0, %s77
      %s94 = sphi 0, %s78
      %s100 = sphi 0, %s102
      %s103 = sphi 0, %s100
      %s104 = sphi 0, %s103
      %s120 = sphi 0, %s104
      %s126 = sphi 0, %s128
      %s129 = sphi 0, %s126
      %s130 = sphi 0, %s129
      %s146 = sphi 0, %s130
      %s152 = sphi 0, %s154
      %s155 = sphi 0, %s152
      %s156 = sphi 0, %s155
      %s172 = sphi 0, %s156
      %s176 = sphi 0, %s176
      %s178 = sphi 0, %s176
      %s179 = sphi 0, %s178
      %s193 = sphi 0, %s179
      %s197 = sphi 0, %s197
      %s199 = sphi 0, %s197
      %s200 = sphi 0, %s199
      %s214 = sphi 0, %s200
      %s218 = sphi 0, %s218
      %s220 = sphi 0, %s218
      %s221 = sphi 0, %s220
      %s235 = sphi 0, %s221
      %s241 = sphi 0, %s243
      %s244 = sphi 0, %s241
      %s245 = sphi 0, %s244
      %s261 = sphi 0, %s245
      %s267 = sphi 0, %s269
      %s270 = sphi 0, %s267
      %s271 = sphi 0, %s270
      %s287 = sphi 0, %s271
      %s293 = sphi 0, %s295
      %s296 = sphi 0, %s293
      %s297 = sphi 0, %s296
      %s313 = sphi 0, %s297
    $region4: #{tpu_custom_call.1} parent=1 // loop_header_branch
      %37 = sbr.rel (%p35) target = $region8
    $region5: #{tpu_custom_call.1} parent=1 // loop_body
      %s39 = ssub.s32 %s34, 1
      %s40 = ssub.s32 %s34, 2
      %s41 = sadd.s32 %s34, 1
      %s42 = sld [smem:[#allocation4 + %s34]]
      %s43 = sld [smem:[#allocation4 + %s41]]
      %s44 = ssub.s32 %s42, %s43
      %p45 = scmp.eq.s32.totalorder %s44, 0
      %s47 = sadd.s32 %s46, 1
      %s48 = scalar_select %p45, %s46, %s47
      %p51 = pneg %p45
      %p52 = scmp.eq.s32.totalorder %s34, 2
      %p53 = por %p51, %p52
      %p54 = scmp.ne.s32.totalorder %s46, %s49
      %p55 = scmp.eq.s32.totalorder %s34, 0
      %p56 = por %p54, %p55
      %p57 = scmp.ne.s32.totalorder %s46, %s49
      %p58 = scmp.eq.s32.totalorder %s39, 2
      %p59 = por %p57, %p58
      %p60 = scmp.ne.s32.totalorder %s49, %s50
      %p61 = scmp.eq.s32.totalorder %s39, 0
      %p62 = por %p60, %p61
      %p63 = scmp.ne.s32.totalorder %s49, %s50
      %p64 = scmp.eq.s32.totalorder %s40, 2
      %p65 = por %p63, %p64
      %p67 = scmp.ne.s32.totalorder %s50, %s66
      %p68 = scmp.eq.s32.totalorder %s40, 0
      %p69 = por %p67, %p68
      %s70 = sld [smem:[#allocation4 + %s34]]
      %s71 = sld [smem:[#allocation4 + %s41]]
      %s72 = ssub.s32 %s70, %s71
      %p73 = scmp.eq.s32.totalorder %s72, 0
      %s75 = sadd.s32 %s74, 1
      %s76 = scalar_select %p73, %s74, %s75
      %p79 = pneg %p73
      %p80 = scmp.eq.s32.totalorder %s34, 2
      %p81 = por %p79, %p80
      %p82 = scmp.ne.s32.totalorder %s74, %s77
      %p83 = scmp.eq.s32.totalorder %s34, 0
      %p84 = por %p82, %p83
      %p85 = scmp.ne.s32.totalorder %s74, %s77
      %p86 = scmp.eq.s32.totalorder %s39, 2
      %p87 = por %p85, %p86
      %p88 = scmp.ne.s32.totalorder %s77, %s78
      %p89 = scmp.eq.s32.totalorder %s39, 0
      %p90 = por %p88, %p89
      %p91 = scmp.ne.s32.totalorder %s77, %s78
      %p92 = scmp.eq.s32.totalorder %s40, 2
      %p93 = por %p91, %p92
      %p95 = scmp.ne.s32.totalorder %s78, %s94
      %p96 = scmp.eq.s32.totalorder %s40, 0
      %p97 = por %p95, %p96
      %s98 = ssub.s32 %s34, %s41
      %p99 = scmp.eq.s32.totalorder %s98, 0
      %s101 = sadd.s32 %s100, 1
      %s102 = scalar_select %p99, %s100, %s101
      %p105 = pneg %p99
      %p106 = scmp.eq.s32.totalorder %s34, 2
      %p107 = por %p105, %p106
      %p108 = scmp.ne.s32.totalorder %s100, %s103
      %p109 = scmp.eq.s32.totalorder %s34, 0
      %p110 = por %p108, %p109
      %p111 = scmp.ne.s32.totalorder %s100, %s103
      %p112 = scmp.eq.s32.totalorder %s39, 2
      %p113 = por %p111, %p112
      %p114 = scmp.ne.s32.totalorder %s103, %s104
      %p115 = scmp.eq.s32.totalorder %s39, 0
      %p116 = por %p114, %p115
      %p117 = scmp.ne.s32.totalorder %s103, %s104
      %p118 = scmp.eq.s32.totalorder %s40, 2
      %p119 = por %p117, %p118
      %p121 = scmp.ne.s32.totalorder %s104, %s120
      %p122 = scmp.eq.s32.totalorder %s40, 0
      %p123 = por %p121, %p122
      %s124 = ssub.s32 %s34, %s41
      %p125 = scmp.eq.s32.totalorder %s124, 0
      %s127 = sadd.s32 %s126, 1
      %s128 = scalar_select %p125, %s126, %s127
      %p131 = pneg %p125
      %p132 = scmp.eq.s32.totalorder %s34, 2
      %p133 = por %p131, %p132
      %p134 = scmp.ne.s32.totalorder %s126, %s129
      %p135 = scmp.eq.s32.totalorder %s34, 0
      %p136 = por %p134, %p135
      %p137 = scmp.ne.s32.totalorder %s126, %s129
      %p138 = scmp.eq.s32.totalorder %s39, 2
      %p139 = por %p137, %p138
      %p140 = scmp.ne.s32.totalorder %s129, %s130
      %p141 = scmp.eq.s32.totalorder %s39, 0
      %p142 = por %p140, %p141
      %p143 = scmp.ne.s32.totalorder %s129, %s130
      %p144 = scmp.eq.s32.totalorder %s40, 2
      %p145 = por %p143, %p144
      %p147 = scmp.ne.s32.totalorder %s130, %s146
      %p148 = scmp.eq.s32.totalorder %s40, 0
      %p149 = por %p147, %p148
      %s150 = ssub.s32 %s34, %s41
      %p151 = scmp.eq.s32.totalorder %s150, 0
      %s153 = sadd.s32 %s152, 1
      %s154 = scalar_select %p151, %s152, %s153
      %p157 = pneg %p151
      %p158 = scmp.eq.s32.totalorder %s34, 2
      %p159 = por %p157, %p158
      %p160 = scmp.ne.s32.totalorder %s152, %s155
      %p161 = scmp.eq.s32.totalorder %s34, 0
      %p162 = por %p160, %p161
      %p163 = scmp.ne.s32.totalorder %s152, %s155
      %p164 = scmp.eq.s32.totalorder %s39, 2
      %p165 = por %p163, %p164
      %p166 = scmp.ne.s32.totalorder %s155, %s156
      %p167 = scmp.eq.s32.totalorder %s39, 0
      %p168 = por %p166, %p167
      %p169 = scmp.ne.s32.totalorder %s155, %s156
      %p170 = scmp.eq.s32.totalorder %s40, 2
      %p171 = por %p169, %p170
      %p173 = scmp.ne.s32.totalorder %s156, %s172
      %p174 = scmp.eq.s32.totalorder %s40, 0
      %p175 = por %p173, %p174
      %s177 = sadd.s32 %s176, 1
      %p180 = scmp.eq.s32.totalorder %s34, 2
      %p181 = scmp.ne.s32.totalorder %s176, %s178
      %p182 = scmp.eq.s32.totalorder %s34, 0
      %p183 = por %p181, %p182
      %p184 = scmp.ne.s32.totalorder %s176, %s178
      %p185 = scmp.eq.s32.totalorder %s39, 2
      %p186 = por %p184, %p185
      %p187 = scmp.ne.s32.totalorder %s178, %s179
      %p188 = scmp.eq.s32.totalorder %s39, 0
      %p189 = por %p187, %p188
      %p190 = scmp.ne.s32.totalorder %s178, %s179
      %p191 = scmp.eq.s32.totalorder %s40, 2
      %p192 = por %p190, %p191
      %p194 = scmp.ne.s32.totalorder %s179, %s193
      %p195 = scmp.eq.s32.totalorder %s40, 0
      %p196 = por %p194, %p195
      %s198 = sadd.s32 %s197, 1
      %p201 = scmp.eq.s32.totalorder %s34, 2
      %p202 = scmp.ne.s32.totalorder %s197, %s199
      %p203 = scmp.eq.s32.totalorder %s34, 0
      %p204 = por %p202, %p203
      %p205 = scmp.ne.s32.totalorder %s197, %s199
      %p206 = scmp.eq.s32.totalorder %s39, 2
      %p207 = por %p205, %p206
      %p208 = scmp.ne.s32.totalorder %s199, %s200
      %p209 = scmp.eq.s32.totalorder %s39, 0
      %p210 = por %p208, %p209
      %p211 = scmp.ne.s32.totalorder %s199, %s200
      %p212 = scmp.eq.s32.totalorder %s40, 2
      %p213 = por %p211, %p212
      %p215 = scmp.ne.s32.totalorder %s200, %s214
      %p216 = scmp.eq.s32.totalorder %s40, 0
      %p217 = por %p215, %p216
      %s219 = sadd.s32 %s218, 1
      %p222 = scmp.eq.s32.totalorder %s34, 2
      %p223 = scmp.ne.s32.totalorder %s218, %s220
      %p224 = scmp.eq.s32.totalorder %s34, 0
      %p225 = por %p223, %p224
      %p226 = scmp.ne.s32.totalorder %s218, %s220
      %p227 = scmp.eq.s32.totalorder %s39, 2
      %p228 = por %p226, %p227
      %p229 = scmp.ne.s32.totalorder %s220, %s221
      %p230 = scmp.eq.s32.totalorder %s39, 0
      %p231 = por %p229, %p230
      %p232 = scmp.ne.s32.totalorder %s220, %s221
      %p233 = scmp.eq.s32.totalorder %s40, 2
      %p234 = por %p232, %p233
      %p236 = scmp.ne.s32.totalorder %s221, %s235
      %p237 = scmp.eq.s32.totalorder %s40, 0
      %p238 = por %p236, %p237
      %s239 = ssub.s32 %s34, %s41
      %p240 = scmp.eq.s32.totalorder %s239, 0
      %s242 = sadd.s32 %s241, 1
      %s243 = scalar_select %p240, %s241, %s242
      %p246 = pneg %p240
      %p247 = scmp.eq.s32.totalorder %s34, 2
      %p248 = por %p246, %p247
      %p249 = scmp.ne.s32.totalorder %s241, %s244
      %p250 = scmp.eq.s32.totalorder %s34, 0
      %p251 = por %p249, %p250
      %p252 = scmp.ne.s32.totalorder %s241, %s244
      %p253 = scmp.eq.s32.totalorder %s39, 2
      %p254 = por %p252, %p253
      %p255 = scmp.ne.s32.totalorder %s244, %s245
      %p256 = scmp.eq.s32.totalorder %s39, 0
      %p257 = por %p255, %p256
      %p258 = scmp.ne.s32.totalorder %s244, %s245
      %p259 = scmp.eq.s32.totalorder %s40, 2
      %p260 = por %p258, %p259
      %p262 = scmp.ne.s32.totalorder %s245, %s261
      %p263 = scmp.eq.s32.totalorder %s40, 0
      %p264 = por %p262, %p263
      %s265 = ssub.s32 %s34, %s41
      %p266 = scmp.eq.s32.totalorder %s265, 0
      %s268 = sadd.s32 %s267, 1
      %s269 = scalar_select %p266, %s267, %s268
      %p272 = pneg %p266
      %p273 = scmp.eq.s32.totalorder %s34, 2
      %p274 = por %p272, %p273
      %p275 = scmp.ne.s32.totalorder %s267, %s270
      %p276 = scmp.eq.s32.totalorder %s34, 0
      %p277 = por %p275, %p276
      %p278 = scmp.ne.s32.totalorder %s267, %s270
      %p279 = scmp.eq.s32.totalorder %s39, 2
      %p280 = por %p278, %p279
      %p281 = scmp.ne.s32.totalorder %s270, %s271
      %p282 = scmp.eq.s32.totalorder %s39, 0
      %p283 = por %p281, %p282
      %p284 = scmp.ne.s32.totalorder %s270, %s271
      %p285 = scmp.eq.s32.totalorder %s40, 2
      %p286 = por %p284, %p285
      %p288 = scmp.ne.s32.totalorder %s271, %s287
      %p289 = scmp.eq.s32.totalorder %s40, 0
      %p290 = por %p288, %p289
      %s291 = ssub.s32 %s34, %s41
      %p292 = scmp.eq.s32.totalorder %s291, 0
      %s294 = sadd.s32 %s293, 1
      %s295 = scalar_select %p292, %s293, %s294
      %p298 = pneg %p292
      %p299 = scmp.eq.s32.totalorder %s34, 2
      %p300 = por %p298, %p299
      %p301 = scmp.ne.s32.totalorder %s293, %s296
      %p302 = scmp.eq.s32.totalorder %s34, 0
      %p303 = por %p301, %p302
      %p304 = scmp.ne.s32.totalorder %s293, %s296
      %p305 = scmp.eq.s32.totalorder %s39, 2
      %p306 = por %p304, %p305
      %p307 = scmp.ne.s32.totalorder %s296, %s297
      %p308 = scmp.eq.s32.totalorder %s39, 0
      %p309 = por %p307, %p308
      %p310 = scmp.ne.s32.totalorder %s296, %s297
      %p311 = scmp.eq.s32.totalorder %s40, 2
      %p312 = por %p310, %p311
      %p314 = scmp.ne.s32.totalorder %s297, %s313
      %p315 = scmp.eq.s32.totalorder %s40, 0
      %p316 = por %p314, %p315
      %p317 = scmp.le.s32.totalorder 1, %s34
      %p318 = scmp.lt.s32.totalorder %s34, 4
      %p319 = pnand %p317, %p318
      %p320 = pneg %p319
      // Predicated region
      $region9: #{tpu_custom_call.1} parent=5 // pred_check
        _
      $region10: #{tpu_custom_call.1} parent=5 // pred_check_branch
        %322 = sbr.rel (%p319) target = $region12
      $region11: #{tpu_custom_call.1} parent=5 // pred_region
        %s323 = ssub.s32 %s34, 1
        // Predicated region
        $region13: #{tpu_custom_call.1} parent=11 // pred_check
          %p324 = pneg %p189
        $region14: #{tpu_custom_call.1} parent=11 // pred_check_branch
          %326 = sbr.rel (%p324) target = $region16
        $region15: #{tpu_custom_call.1} parent=11 // pred_region
          _
        $region16: #{tpu_custom_call.1} parent=11 // pred_fallthru
          _
        // Predicated region
        $region17: #{tpu_custom_call.1} parent=11 // pred_check
          %p327 = pneg %p210
        $region18: #{tpu_custom_call.1} parent=11 // pred_check_branch
          %329 = sbr.rel (%p327) target = $region20
        $region19: #{tpu_custom_call.1} parent=11 // pred_region
          %s331 = ssub.s32 384, 384
          %332 = vsyncadd [#allocation15], %s331
          %s333 = sshll.u32 [#allocation14], 4
          %s334 = int_to_ptr.vmem [resolvable:$true] %s333
          %339 = dma.hbm_to_vmem [thread:$0]  %s7, 384, %s334, [#allocation15], 64, 64, 4
        $region20: #{tpu_custom_call.1} parent=11 // pred_fallthru
          _
        // Predicated region
        $region21: #{tpu_custom_call.1} parent=11 // pred_check
          %p340 = pneg %p231
        $region22: #{tpu_custom_call.1} parent=11 // pred_check_branch
          %342 = sbr.rel (%p340) target = $region24
        $region23: #{tpu_custom_call.1} parent=11 // pred_region
          _
        $region24: #{tpu_custom_call.1} parent=11 // pred_fallthru
          _
      $region12: #{tpu_custom_call.1} parent=5 // pred_fallthru
        _
      %p343 = scmp.lt.s32.totalorder %s34, 3
      // Predicated region
      $region25: #{tpu_custom_call.1} parent=5 // pred_check
        %p344 = pneg %p343
      $region26: #{tpu_custom_call.1} parent=5 // pred_check_branch
        %346 = sbr.rel (%p344) target = $region28
      $region27: #{tpu_custom_call.1} parent=5 // pred_region
        // Predicated region
        $region29: #{tpu_custom_call.1} parent=27 // pred_check
          %p347 = pneg %p56
        $region30: #{tpu_custom_call.1} parent=27 // pred_check_branch
          %349 = sbr.rel (%p347) target = $region32
        $region31: #{tpu_custom_call.1} parent=27 // pred_region
          %s350 = sand.u32 %s34, 1
          %s351 = scalar_lea.sflag [#allocation6], %s350
          %s352 = sand.u32 %s46, 1
          %s353 = smul.addr %s352, 256
          %s354 = scalar_lea.vmem [#allocation5], %s353
          %s355 = sld [smem:[#allocation4 + %s34]]
          %s357 = ssub.s32 4096, 4096
          %358 = vsyncadd %s351, %s357
          %s359 = smul.addr %s355, 32
          %s360 = smul.addr %s359, 128
          %s361 = scalar_lea.hbm %s1, %s360
          %s362 = sshll.u32 %s354, 4
          %s363 = int_to_ptr.vmem [resolvable:$true] %s362
          %368 = dma.hbm_to_vmem [thread:$0]  %s361, 4096, %s363, %s351, 256, 256, 16
        $region32: #{tpu_custom_call.1} parent=27 // pred_fallthru
          _
        // Predicated region
        $region33: #{tpu_custom_call.1} parent=27 // pred_check
          %p369 = pneg %p84
        $region34: #{tpu_custom_call.1} parent=27 // pred_check_branch
          %371 = sbr.rel (%p369) target = $region36
        $region35: #{tpu_custom_call.1} parent=27 // pred_region
          %s372 = sand.u32 %s34, 1
          %s373 = scalar_lea.sflag [#allocation9], %s372
          %s374 = sand.u32 %s74, 1
          %s375 = smul.addr %s374, 1024
          %s376 = scalar_lea.vmem [#allocation8], %s375
          %s377 = sld [smem:[#allocation4 + %s34]]
          %s379 = ssub.s32 16384, 16384
          %380 = vsyncadd %s373, %s379
          %s381 = smul.addr %s377, 128
          %s382 = smul.addr %s381, 128
          %s383 = scalar_lea.hbm %s2, %s382
          %s384 = sshll.u32 %s376, 4
          %s385 = int_to_ptr.vmem [resolvable:$true] %s384
          %390 = dma.hbm_to_vmem [thread:$0]  %s383, 16384, %s385, %s373, 1024, 1024, 64
        $region36: #{tpu_custom_call.1} parent=27 // pred_fallthru
          _
        // Predicated region
        $region37: #{tpu_custom_call.1} parent=27 // pred_check
          %p391 = pneg %p110
        $region38: #{tpu_custom_call.1} parent=27 // pred_check_branch
          %393 = sbr.rel (%p391) target = $region40
        $region39: #{tpu_custom_call.1} parent=27 // pred_region
          %s394 = sand.u32 %s34, 1
          %s395 = scalar_lea.sflag [#allocation9], %s394
          %s396 = sand.u32 %s100, 1
          %s397 = smul.addr %s396, 256
          %s398 = scalar_lea.vmem [#allocation10], %s397
          %s400 = ssub.s32 4096, 4096
          %401 = vsyncadd %s395, %s400
          %s402 = smul.addr %s34, 64
          %s403 = smul.addr %s402, 64
          %s404 = scalar_lea.hbm %s3, %s403
          %s405 = sshll.u32 %s398, 4
          %s406 = int_to_ptr.vmem [resolvable:$true] %s405
          %411 = dma.hbm_to_vmem [thread:$0]  %s404, 4096, %s406, %s395, 128, 128, 8
        $region40: #{tpu_custom_call.1} parent=27 // pred_fallthru
          _
        // Predicated region
        $region41: #{tpu_custom_call.1} parent=27 // pred_check
          %p412 = pneg %p136
        $region42: #{tpu_custom_call.1} parent=27 // pred_check_branch
          %414 = sbr.rel (%p412) target = $region44
        $region43: #{tpu_custom_call.1} parent=27 // pred_region
          %s415 = sand.u32 %s34, 1
          %s416 = scalar_lea.sflag [#allocation12], %s415
          %s417 = sand.u32 %s126, 1
          %s418 = smul.addr %s417, 1024
          %s419 = scalar_lea.vmem [#allocation11], %s418
          %s421 = ssub.s32 16384, 16384
          %422 = vsyncadd %s416, %s421
          %s423 = smul.addr %s34, 256
          %s424 = smul.addr %s423, 64
          %s425 = scalar_lea.hbm %s4, %s424
          %s426 = sshll.u32 %s419, 4
          %s427 = int_to_ptr.vmem [resolvable:$true] %s426
          %432 = dma.hbm_to_vmem [thread:$0]  %s425, 16384, %s427, %s416, 128, 128, 8
        $region44: #{tpu_custom_call.1} parent=27 // pred_fallthru
          _
        // Predicated region
        $region45: #{tpu_custom_call.1} parent=27 // pred_check
          %p433 = pneg %p162
        $region46: #{tpu_custom_call.1} parent=27 // pred_check_branch
          %435 = sbr.rel (%p433) target = $region48
        $region47: #{tpu_custom_call.1} parent=27 // pred_region
          %s436 = sand.u32 %s34, 1
          %s437 = scalar_lea.sflag [#allocation12], %s436
          %s438 = sand.u32 %s152, 1
          %s439 = smul.addr %s438, 128
          %s440 = scalar_lea.vmem [#allocation13], %s439
          %s442 = ssub.s32 2048, 2048
          %443 = vsyncadd %s437, %s442
          %s444 = smul.addr %s34, 32
          %s445 = smul.addr %s444, 64
          %s446 = scalar_lea.hbm %s5, %s445
          %s447 = sshll.u32 %s440, 4
          %s448 = int_to_ptr.vmem [resolvable:$true] %s447
          %453 = dma.hbm_to_vmem [thread:$0]  %s446, 2048, %s448, %s437, 128, 128, 8
        $region48: #{tpu_custom_call.1} parent=27 // pred_fallthru
          _
        // Predicated region
        $region49: #{tpu_custom_call.1} parent=27 // pred_check
          %p454 = pneg %p251
        $region50: #{tpu_custom_call.1} parent=27 // pred_check_branch
          %456 = sbr.rel (%p454) target = $region52
        $region51: #{tpu_custom_call.1} parent=27 // pred_region
          %p457 = scmp.lt.s32.totalorder %s34, 2
          %s458 = scalar_select %p457, %s34, 2
          %s459 = smul.addr %s458, 12
          %s460 = smul.addr %s459, 4
          %s461 = scalar_lea.vmem %s9, %s460
        $region52: #{tpu_custom_call.1} parent=27 // pred_fallthru
          _
        // Predicated region
        $region53: #{tpu_custom_call.1} parent=27 // pred_check
          %p462 = pneg %p277
        $region54: #{tpu_custom_call.1} parent=27 // pred_check_branch
          %464 = sbr.rel (%p462) target = $region56
        $region55: #{tpu_custom_call.1} parent=27 // pred_region
          %s465 = sand.u32 %s34, 1
          %s466 = scalar_lea.sflag [#allocation6], %s465
          %s467 = sand.u32 %s267, 1
          %s468 = smul.addr %s467, 1024
          %s469 = scalar_lea.vmem [#allocation16], %s468
          %s471 = ssub.s32 16384, 16384
          %472 = vsyncadd %s466, %s471
          %s473 = smul.addr %s34, 256
          %s474 = smul.addr %s473, 64
          %s475 = scalar_lea.hbm %s10, %s474
          %s476 = sshll.u32 %s469, 4
          %s477 = int_to_ptr.vmem [resolvable:$true] %s476
          %482 = dma.hbm_to_vmem [thread:$0]  %s475, 16384, %s477, %s466, 512, 512, 32
        $region56: #{tpu_custom_call.1} parent=27 // pred_fallthru
          _
      $region28: #{tpu_custom_call.1} parent=5 // pred_fallthru
        _
      %p483 = scmp.le.s32.totalorder 1, %s34
      %p484 = scmp.lt.s32.totalorder %s34, 4
      %p485 = pnand %p483, %p484
      %p486 = pneg %p485
      // Predicated region
      $region57: #{tpu_custom_call.1} parent=5 // pred_check
        _
      $region58: #{tpu_custom_call.1} parent=5 // pred_check_branch
        %488 = sbr.rel (%p485) target = $region60
      $region59: #{tpu_custom_call.1} parent=5 // pred_region
        %s489 = ssub.s32 %s34, 1
        %s490 = sand.u32 %s39, 1
        %s491 = scalar_lea.sflag [#allocation6], %s490
        %s492 = sand.u32 %s49, 1
        %s493 = smul.addr %s492, 256
        %s494 = scalar_lea.vmem [#allocation5], %s493
        // Predicated region
        $region61: #{tpu_custom_call.1} parent=59 // pred_check
          %p495 = pneg %p62
        $region62: #{tpu_custom_call.1} parent=59 // pred_check_branch
          %497 = sbr.rel (%p495) target = $region64
        $region63: #{tpu_custom_call.1} parent=59 // pred_region
          %498 = dma.done %s491, 4096
        $region64: #{tpu_custom_call.1} parent=59 // pred_fallthru
          _
        %s499 = sand.u32 %s39, 1
        %s500 = scalar_lea.sflag [#allocation9], %s499
        %s501 = sand.u32 %s77, 1
        %s502 = smul.addr %s501, 1024
        %s503 = scalar_lea.vmem [#allocation8], %s502
        // Predicated region
        $region65: #{tpu_custom_call.1} parent=59 // pred_check
          %p504 = pneg %p90
        $region66: #{tpu_custom_call.1} parent=59 // pred_check_branch
          %506 = sbr.rel (%p504) target = $region68
        $region67: #{tpu_custom_call.1} parent=59 // pred_region
          %507 = dma.done %s500, 16384
        $region68: #{tpu_custom_call.1} parent=59 // pred_fallthru
          _
        %s508 = sand.u32 %s39, 1
        %s509 = scalar_lea.sflag [#allocation9], %s508
        %s510 = sand.u32 %s103, 1
        %s511 = smul.addr %s510, 256
        %s512 = scalar_lea.vmem [#allocation10], %s511
        // Predicated region
        $region69: #{tpu_custom_call.1} parent=59 // pred_check
          %p513 = pneg %p116
        $region70: #{tpu_custom_call.1} parent=59 // pred_check_branch
          %515 = sbr.rel (%p513) target = $region72
        $region71: #{tpu_custom_call.1} parent=59 // pred_region
          %516 = dma.done %s509, 4096
        $region72: #{tpu_custom_call.1} parent=59 // pred_fallthru
          _
        %s517 = sand.u32 %s39, 1
        %s518 = scalar_lea.sflag [#allocation12], %s517
        %s519 = sand.u32 %s129, 1
        %s520 = smul.addr %s519, 1024
        %s521 = scalar_lea.vmem [#allocation11], %s520
        // Predicated region
        $region73: #{tpu_custom_call.1} parent=59 // pred_check
          %p522 = pneg %p142
        $region74: #{tpu_custom_call.1} parent=59 // pred_check_branch
          %524 = sbr.rel (%p522) target = $region76
        $region75: #{tpu_custom_call.1} parent=59 // pred_region
          %525 = dma.done %s518, 16384
        $region76: #{tpu_custom_call.1} parent=59 // pred_fallthru
          _
        %s526 = sand.u32 %s39, 1
        %s527 = scalar_lea.sflag [#allocation12], %s526
        %s528 = sand.u32 %s155, 1
        %s529 = smul.addr %s528, 128
        %s530 = scalar_lea.vmem [#allocation13], %s529
        // Predicated region
        $region77: #{tpu_custom_call.1} parent=59 // pred_check
          %p531 = pneg %p168
        $region78: #{tpu_custom_call.1} parent=59 // pred_check_branch
          %533 = sbr.rel (%p531) target = $region80
        $region79: #{tpu_custom_call.1} parent=59 // pred_region
          %534 = dma.done %s527, 2048
        $region80: #{tpu_custom_call.1} parent=59 // pred_fallthru
          _
        // Predicated region
        $region81: #{tpu_custom_call.1} parent=59 // pred_check
          %p535 = pneg %p210
        $region82: #{tpu_custom_call.1} parent=59 // pred_check_branch
          %537 = sbr.rel (%p535) target = $region84
        $region83: #{tpu_custom_call.1} parent=59 // pred_region
          %538 = dma.done [#allocation15], 384
        $region84: #{tpu_custom_call.1} parent=59 // pred_fallthru
          _
        %s539 = sand.u32 %s39, 1
        %s540 = scalar_lea.sflag [#allocation6], %s539
        %s541 = sand.u32 %s270, 1
        %s542 = smul.addr %s541, 1024
        %s543 = scalar_lea.vmem [#allocation16], %s542
        // Predicated region
        $region85: #{tpu_custom_call.1} parent=59 // pred_check
          %p544 = pneg %p283
        $region86: #{tpu_custom_call.1} parent=59 // pred_check_branch
          %546 = sbr.rel (%p544) target = $region88
        $region87: #{tpu_custom_call.1} parent=59 // pred_region
          %547 = dma.done %s540, 16384
        $region88: #{tpu_custom_call.1} parent=59 // pred_fallthru
          _
        %s548 = sand.u32 %s39, 1
        %s549 = scalar_lea.sflag [#allocation6], %s548
        %s550 = sand.u32 %s49, 1
        %s551 = smul.addr %s550, 256
        %s552 = scalar_lea.vmem [#allocation5], %s551
        %p553 = pneg %p62
        %p554 = pneg %p59
        %s555 = sand.u32 %s39, 1
        %s556 = scalar_lea.sflag [#allocation9], %s555
        %s557 = sand.u32 %s77, 1
        %s558 = smul.addr %s557, 1024
        %s559 = scalar_lea.vmem [#allocation8], %s558
        %p560 = pneg %p90
        %p561 = pneg %p87
        %s562 = sand.u32 %s39, 1
        %s563 = scalar_lea.sflag [#allocation9], %s562
        %s564 = sand.u32 %s103, 1
        %s565 = smul.addr %s564, 256
        %s566 = scalar_lea.vmem [#allocation10], %s565
        %p567 = pneg %p116
        %p568 = pneg %p113
        %s569 = sand.u32 %s39, 1
        %s570 = scalar_lea.sflag [#allocation12], %s569
        %s571 = sand.u32 %s129, 1
        %s572 = smul.addr %s571, 1024
        %s573 = scalar_lea.vmem [#allocation11], %s572
        %p574 = pneg %p142
        %p575 = pneg %p139
        %s576 = sand.u32 %s39, 1
        %s577 = scalar_lea.sflag [#allocation12], %s576
        %s578 = sand.u32 %s155, 1
        %s579 = smul.addr %s578, 128
        %s580 = scalar_lea.vmem [#allocation13], %s579
        %p581 = pneg %p168
        %p582 = pneg %p165
        %p583 = pneg %p189
        %p584 = pneg %p186
        %p585 = pneg %p210
        %p586 = pneg %p207
        %p587 = pneg %p231
        %p588 = pneg %p228
        %p589 = scmp.lt.s32.totalorder %s39, 2
        %s590 = scalar_select %p589, %s39, 2
        %s591 = smul.addr %s590, 12
        %s592 = smul.addr %s591, 4
        %s593 = scalar_lea.vmem %s9, %s592
        %p594 = pneg %p257
        %p595 = pneg %p254
        %s596 = sand.u32 %s39, 1
        %s597 = scalar_lea.sflag [#allocation6], %s596
        %s598 = sand.u32 %s270, 1
        %s599 = smul.addr %s598, 1024
        %s600 = scalar_lea.vmem [#allocation16], %s599
        %p601 = pneg %p283
        %p602 = pneg %p280
        %p603 = pneg %p309
        %p604 = pneg %p306
        %s605 = sand.u32 %s296, 1
        %s606 = scalar_lea.sflag [#allocation7], %s605
        %s607 = sand.u32 %s296, 1
        %s608 = smul.addr %s607, 768
        %s609 = scalar_lea.vmem [#allocation17], %s608
        %s610 = sld [smem:[#allocation4 + %s39]]
        %s611 = sld [smem:[#allocation4 + %s39]]
        %p612 = scmp.lt.s32.totalorder %s39, 2
        %s613 = scalar_select %p612, %s39, 2
        %s614 = smul.addr %s613, 12
        %s615 = smul.addr %s614, 4
        %s616 = scalar_lea.vmem %s9, %s615
        %v618 = vld [vmem:[%s494] sm:$0xff]
        %v619 = vld [vmem:[%s494 + $0x8] sm:$0xff]
        %v620 = vld [vmem:[%s494 + $0x10] sm:$0xff]
        %v621 = vld [vmem:[%s494 + $0x18] sm:$0xff]
        %v622 = vld [vmem:[%s494 + $0x20] sm:$0xff]
        %v623 = vld [vmem:[%s494 + $0x28] sm:$0xff]
        %v624 = vld [vmem:[%s494 + $0x30] sm:$0xff]
        %v625 = vld [vmem:[%s494 + $0x38] sm:$0xff]
        %v626 = vld [vmem:[%s494 + $0x40] sm:$0xff]
        %v627 = vld [vmem:[%s494 + $0x48] sm:$0xff]
        %v628 = vld [vmem:[%s494 + $0x50] sm:$0xff]
        %v629 = vld [vmem:[%s494 + $0x58] sm:$0xff]
        %v630 = vld [vmem:[%s494 + $0x60] sm:$0xff]
        %v631 = vld [vmem:[%s494 + $0x68] sm:$0xff]
        %v632 = vld [vmem:[%s494 + $0x70] sm:$0xff]
        %v633 = vld [vmem:[%s494 + $0x78] sm:$0xff]
        %v634 = vld [vmem:[%s494 + $0x80] sm:$0xff]
        %v635 = vld [vmem:[%s494 + $0x88] sm:$0xff]
        %v636 = vld [vmem:[%s494 + $0x90] sm:$0xff]
        %v637 = vld [vmem:[%s494 + $0x98] sm:$0xff]
        %v638 = vld [vmem:[%s494 + $0xa0] sm:$0xff]
        %v639 = vld [vmem:[%s494 + $0xa8] sm:$0xff]
        %v640 = vld [vmem:[%s494 + $0xb0] sm:$0xff]
        %v641 = vld [vmem:[%s494 + $0xb8] sm:$0xff]
        %v642 = vld [vmem:[%s494 + $0xc0] sm:$0xff]
        %v643 = vld [vmem:[%s494 + $0xc8] sm:$0xff]
        %v644 = vld [vmem:[%s494 + $0xd0] sm:$0xff]
        %v645 = vld [vmem:[%s494 + $0xd8] sm:$0xff]
        %v646 = vld [vmem:[%s494 + $0xe0] sm:$0xff]
        %v647 = vld [vmem:[%s494 + $0xe8] sm:$0xff]
        %v648 = vld [vmem:[%s494 + $0xf0] sm:$0xff]
        %v649 = vld [vmem:[%s494 + $0xf8] sm:$0xff]
        %v650 = vpack.c.bf16 %v620, %v618
        %v651 = vpack.c.bf16 %v621, %v619
        %v652 = vpack.c.bf16 %v624, %v622
        %v653 = vpack.c.bf16 %v625, %v623
        %v654 = vpack.c.bf16 %v628, %v626
        %v655 = vpack.c.bf16 %v629, %v627
        %v656 = vpack.c.bf16 %v632, %v630
        %v657 = vpack.c.bf16 %v633, %v631
        %v658 = vpack.c.bf16 %v636, %v634
        %v659 = vpack.c.bf16 %v637, %v635
        %v660 = vpack.c.bf16 %v640, %v638
        %v661 = vpack.c.bf16 %v641, %v639
        %v662 = vpack.c.bf16 %v644, %v642
        %v663 = vpack.c.bf16 %v645, %v643
        %v664 = vpack.c.bf16 %v648, %v646
        %v665 = vpack.c.bf16 %v649, %v647
        %v666 = vld [vmem:[%s512] sm:$0xff]
        %v667 = vld [vmem:[%s512 + $0x8] sm:$0xff]
        %v668 = vld [vmem:[%s512 + $0x10] sm:$0xff]
        %v669 = vld [vmem:[%s512 + $0x18] sm:$0xff]
        %v670 = vld [vmem:[%s512 + $0x20] sm:$0xff]
        %v671 = vld [vmem:[%s512 + $0x28] sm:$0xff]
        %v672 = vld [vmem:[%s512 + $0x30] sm:$0xff]
        %v673 = vld [vmem:[%s512 + $0x38] sm:$0xff]
        %v674 = vld [vmem:[%s512 + $0x40] sm:$0xff]
        %v675 = vld [vmem:[%s512 + $0x48] sm:$0xff]
        %v676 = vld [vmem:[%s512 + $0x50] sm:$0xff]
        %v677 = vld [vmem:[%s512 + $0x58] sm:$0xff]
        %v678 = vld [vmem:[%s512 + $0x60] sm:$0xff]
        %v679 = vld [vmem:[%s512 + $0x68] sm:$0xff]
        %v680 = vld [vmem:[%s512 + $0x70] sm:$0xff]
        %v681 = vld [vmem:[%s512 + $0x78] sm:$0xff]
        %v682 = vld [vmem:[%s512 + $0x80] sm:$0xff]
        %v683 = vld [vmem:[%s512 + $0x88] sm:$0xff]
        %v684 = vld [vmem:[%s512 + $0x90] sm:$0xff]
        %v685 = vld [vmem:[%s512 + $0x98] sm:$0xff]
        %v686 = vld [vmem:[%s512 + $0xa0] sm:$0xff]
        %v687 = vld [vmem:[%s512 + $0xa8] sm:$0xff]
        %v688 = vld [vmem:[%s512 + $0xb0] sm:$0xff]
        %v689 = vld [vmem:[%s512 + $0xb8] sm:$0xff]
        %v690 = vld [vmem:[%s512 + $0xc0] sm:$0xff]
        %v691 = vld [vmem:[%s512 + $0xc8] sm:$0xff]
        %v692 = vld [vmem:[%s512 + $0xd0] sm:$0xff]
        %v693 = vld [vmem:[%s512 + $0xd8] sm:$0xff]
        %v694 = vld [vmem:[%s512 + $0xe0] sm:$0xff]
        %v695 = vld [vmem:[%s512 + $0xe8] sm:$0xff]
        %v696 = vld [vmem:[%s512 + $0xf0] sm:$0xff]
        %v697 = vld [vmem:[%s512 + $0xf8] sm:$0xff]
        %v730 = vunpack.c.l.b16 %v666
        %v731 = vunpack.c.h.b16 %v666
        %v732 = vunpack.c.l.b16 %v667
        %v733 = vunpack.c.h.b16 %v667
        %v734 = vunpack.c.l.b16 %v668
        %v735 = vunpack.c.h.b16 %v668
        %v736 = vunpack.c.l.b16 %v669
        %v737 = vunpack.c.h.b16 %v669
        %v738 = vunpack.c.l.b16 %v670
        %v739 = vunpack.c.h.b16 %v670
        %v740 = vunpack.c.l.b16 %v671
        %v741 = vunpack.c.h.b16 %v671
        %v742 = vunpack.c.l.b16 %v672
        %v743 = vunpack.c.h.b16 %v672
        %v744 = vunpack.c.l.b16 %v673
        %v745 = vunpack.c.h.b16 %v673
        %v746 = vunpack.c.l.b16 %v674
        %v747 = vunpack.c.h.b16 %v674
        %v748 = vunpack.c.l.b16 %v675
        %v749 = vunpack.c.h.b16 %v675
        %v750 = vunpack.c.l.b16 %v676
        %v751 = vunpack.c.h.b16 %v676
        %v752 = vunpack.c.l.b16 %v677
        %v753 = vunpack.c.h.b16 %v677
        %v754 = vunpack.c.l.b16 %v678
        %v755 = vunpack.c.h.b16 %v678
        %v756 = vunpack.c.l.b16 %v679
        %v757 = vunpack.c.h.b16 %v679
        %v758 = vunpack.c.l.b16 %v680
        %v759 = vunpack.c.h.b16 %v680
        %v760 = vunpack.c.l.b16 %v681
        %v761 = vunpack.c.h.b16 %v681
        %v762 = vunpack.c.l.b16 %v682
        %v763 = vunpack.c.h.b16 %v682
        %v764 = vunpack.c.l.b16 %v683
        %v765 = vunpack.c.h.b16 %v683
        %v766 = vunpack.c.l.b16 %v684
        %v767 = vunpack.c.h.b16 %v684
        %v768 = vunpack.c.l.b16 %v685
        %v769 = vunpack.c.h.b16 %v685
        %v770 = vunpack.c.l.b16 %v686
        %v771 = vunpack.c.h.b16 %v686
        %v772 = vunpack.c.l.b16 %v687
        %v773 = vunpack.c.h.b16 %v687
        %v774 = vunpack.c.l.b16 %v688
        %v775 = vunpack.c.h.b16 %v688
        %v776 = vunpack.c.l.b16 %v689
        %v777 = vunpack.c.h.b16 %v689
        %v778 = vunpack.c.l.b16 %v690
        %v779 = vunpack.c.h.b16 %v690
        %v780 = vunpack.c.l.b16 %v691
        %v781 = vunpack.c.h.b16 %v691
        %v782 = vunpack.c.l.b16 %v692
        %v783 = vunpack.c.h.b16 %v692
        %v784 = vunpack.c.l.b16 %v693
        %v785 = vunpack.c.h.b16 %v693
        %v786 = vunpack.c.l.b16 %v694
        %v787 = vunpack.c.h.b16 %v694
        %v788 = vunpack.c.l.b16 %v695
        %v789 = vunpack.c.h.b16 %v695
        %v790 = vunpack.c.l.b16 %v696
        %v791 = vunpack.c.h.b16 %v696
        %v792 = vunpack.c.l.b16 %v697
        %v793 = vunpack.c.h.b16 %v697
        %v794 = vpack.c.b16 %v732, %v730
        %v795 = vpack.c.b16 %v733, %v731
        %v796 = vpack.c.b16 %v736, %v734
        %v797 = vpack.c.b16 %v737, %v735
        %v798 = vpack.c.b16 %v740, %v738
        %v799 = vpack.c.b16 %v741, %v739
        %v800 = vpack.c.b16 %v744, %v742
        %v801 = vpack.c.b16 %v745, %v743
        %v802 = vpack.c.b16 %v748, %v746
        %v803 = vpack.c.b16 %v749, %v747
        %v804 = vpack.c.b16 %v752, %v750
        %v805 = vpack.c.b16 %v753, %v751
        %v806 = vpack.c.b16 %v756, %v754
        %v807 = vpack.c.b16 %v757, %v755
        %v808 = vpack.c.b16 %v760, %v758
        %v809 = vpack.c.b16 %v761, %v759
        %v810 = vpack.c.b16 %v764, %v762
        %v811 = vpack.c.b16 %v765, %v763
        %v812 = vpack.c.b16 %v768, %v766
        %v813 = vpack.c.b16 %v769, %v767
        %v814 = vpack.c.b16 %v772, %v770
        %v815 = vpack.c.b16 %v773, %v771
        %v816 = vpack.c.b16 %v776, %v774
        %v817 = vpack.c.b16 %v777, %v775
        %v818 = vpack.c.b16 %v780, %v778
        %v819 = vpack.c.b16 %v781, %v779
        %v820 = vpack.c.b16 %v784, %v782
        %v821 = vpack.c.b16 %v785, %v783
        %v822 = vpack.c.b16 %v788, %v786
        %v823 = vpack.c.b16 %v789, %v787
        %v824 = vpack.c.b16 %v792, %v790
        %v825 = vpack.c.b16 %v793, %v791
        %858 = vmatprep.subr.bf16.mxu0 %v795
        %859 = vmatpush1.bf16.msra.mxu0 %v794
        %860 = vmatprep.subr.bf16.mxu0 %v797
        %861 = vmatpush1.bf16.msra.mxu0 %v796
        %862 = vmatprep.subr.bf16.mxu0 %v799
        %863 = vmatpush1.bf16.msra.mxu0 %v798
        %864 = vmatprep.subr.bf16.mxu0 %v801
        %865 = vmatpush1.bf16.msra.mxu0 %v800
        %866 = vmatprep.subr.bf16.mxu0 %v803
        %867 = vmatpush1.bf16.msra.mxu0 %v802
        %868 = vmatprep.subr.bf16.mxu0 %v805
        %869 = vmatpush1.bf16.msra.mxu0 %v804
        %870 = vmatprep.subr.bf16.mxu0 %v807
        %871 = vmatpush1.bf16.msra.mxu0 %v806
        %872 = vmatprep.subr.bf16.mxu0 %v809
        %873 = vmatpush1.bf16.msra.mxu0 %v808
        %874 = vmatprep.subr.bf16.mxu0 %v811
        %875 = vmatpush1.bf16.msra.mxu0 %v810
        %876 = vmatprep.subr.bf16.mxu0 %v813
        %877 = vmatpush1.bf16.msra.mxu0 %v812
        %878 = vmatprep.subr.bf16.mxu0 %v815
        %879 = vmatpush1.bf16.msra.mxu0 %v814
        %880 = vmatprep.subr.bf16.mxu0 %v817
        %881 = vmatpush1.bf16.msra.mxu0 %v816
        %882 = vmatprep.subr.bf16.mxu0 %v819
        %883 = vmatpush1.bf16.msra.mxu0 %v818
        %884 = vmatprep.subr.bf16.mxu0 %v821
        %885 = vmatpush1.bf16.msra.mxu0 %v820
        %886 = vmatprep.subr.bf16.mxu0 %v823
        %887 = vmatpush1.bf16.msra.mxu0 %v822
        %888 = vmatprep.subr.bf16.mxu0 %v825
        %889 = vmatpush1.bf16.msra.mxu0 %v824
        %890 = vmatprep.mubr.bf16.mxu0 %v651
        %891 = vmatmul.mubr.bf16.gmra.mrb[0].mxu0 %v650
        %v892 = vpop.f32.mrb[0].mxu0
        %v893 = vadd.f32 0.0, %v892
        %v894 = vpop.f32.mrb[0].mxu0
        %v895 = vadd.f32 0.0, %v894
        %v896 = vpop.f32.mrb[0].mxu0
        %v897 = vadd.f32 0.0, %v896
        %v898 = vpop.f32.mrb[0].mxu0
        %v899 = vadd.f32 0.0, %v898
        %900 = vmatprep.mubr.bf16.mxu0 %v653
        %901 = vmatmul.mubr.bf16.gmra.mrb[0].mxu0 %v652
        %v902 = vpop.f32.mrb[0].mxu0
        %v903 = vadd.f32 0.0, %v902
        %v904 = vpop.f32.mrb[0].mxu0
        %v905 = vadd.f32 0.0, %v904
        %v906 = vpop.f32.mrb[0].mxu0
        %v907 = vadd.f32 0.0, %v906
        %v908 = vpop.f32.mrb[0].mxu0
        %v909 = vadd.f32 0.0, %v908
        %910 = vmatprep.mubr.bf16.mxu0 %v655
        %911 = vmatmul.mubr.bf16.gmra.mrb[0].mxu0 %v654
        %v912 = vpop.f32.mrb[0].mxu0
        %v913 = vadd.f32 0.0, %v912
        %v914 = vpop.f32.mrb[0].mxu0
        %v915 = vadd.f32 0.0, %v914
        %v916 = vpop.f32.mrb[0].mxu0
        %v917 = vadd.f32 0.0, %v916
        %v918 = vpop.f32.mrb[0].mxu0
        %v919 = vadd.f32 0.0, %v918
        %920 = vmatprep.mubr.bf16.mxu0 %v657
        %921 = vmatmul.mubr.bf16.gmra.mrb[0].mxu0 %v656
        %v922 = vpop.f32.mrb[0].mxu0
        %v923 = vadd.f32 0.0, %v922
        %v924 = vpop.f32.mrb[0].mxu0
        %v925 = vadd.f32 0.0, %v924
        %v926 = vpop.f32.mrb[0].mxu0
        %v927 = vadd.f32 0.0, %v926
        %v928 = vpop.f32.mrb[0].mxu0
        %v929 = vadd.f32 0.0, %v928
        %930 = vmatprep.mubr.bf16.mxu0 %v659
        %931 = vmatmul.mubr.bf16.gmra.mrb[0].mxu0 %v658
        %v932 = vpop.f32.mrb[0].mxu0
        %v933 = vadd.f32 0.0, %v932
        %v934 = vpop.f32.mrb[0].mxu0
        %v935 = vadd.f32 0.0, %v934
        %v936 = vpop.f32.mrb[0].mxu0
        %v937 = vadd.f32 0.0, %v936
        %v938 = vpop.f32.mrb[0].mxu0
        %v939 = vadd.f32 0.0, %v938
        %940 = vmatprep.mubr.bf16.mxu0 %v661
        %941 = vmatmul.mubr.bf16.gmra.mrb[0].mxu0 %v660
        %v942 = vpop.f32.mrb[0].mxu0
        %v943 = vadd.f32 0.0, %v942
        %v944 = vpop.f32.mrb[0].mxu0
        %v945 = vadd.f32 0.0, %v944
        %v946 = vpop.f32.mrb[0].mxu0
        %v947 = vadd.f32 0.0, %v946
        %v948 = vpop.f32.mrb[0].mxu0
        %v949 = vadd.f32 0.0, %v948
        %950 = vmatprep.mubr.bf16.mxu0 %v663
        %951 = vmatmul.mubr.bf16.gmra.mrb[0].mxu0 %v662
        %v952 = vpop.f32.mrb[0].mxu0
        %v953 = vadd.f32 0.0, %v952
        %v954 = vpop.f32.mrb[0].mxu0
        %v955 = vadd.f32 0.0, %v954
        %v956 = vpop.f32.mrb[0].mxu0
        %v957 = vadd.f32 0.0, %v956
        %v958 = vpop.f32.mrb[0].mxu0
        %v959 = vadd.f32 0.0, %v958
        %960 = vmatprep.mubr.bf16.mxu0 %v665
        %961 = vmatmul.mubr.bf16.gmra.mrb[0].mxu0 %v664
        %v962 = vpop.f32.mrb[0].mxu0
        %v963 = vadd.f32 0.0, %v962
        %v964 = vpop.f32.mrb[0].mxu0
        %v965 = vadd.f32 0.0, %v964
        %v966 = vpop.f32.mrb[0].mxu0
        %v967 = vadd.f32 0.0, %v966
        %v968 = vpop.f32.mrb[0].mxu0
        %v969 = vadd.f32 0.0, %v968
        %970 = vdwg.mxu0
        %v971 = vpack.c.bf16 %v897, %v893
        %v972 = vpack.c.bf16 %v899, %v895
        %v973 = vpack.c.bf16 %v907, %v903
        %v974 = vpack.c.bf16 %v909, %v905
        %v975 = vpack.c.bf16 %v917, %v913
        %v976 = vpack.c.bf16 %v919, %v915
        %v977 = vpack.c.bf16 %v927, %v923
        %v978 = vpack.c.bf16 %v929, %v925
        %v979 = vpack.c.bf16 %v937, %v933
        %v980 = vpack.c.bf16 %v939, %v935
        %v981 = vpack.c.bf16 %v947, %v943
        %v982 = vpack.c.bf16 %v949, %v945
        %v983 = vpack.c.bf16 %v957, %v953
        %v984 = vpack.c.bf16 %v959, %v955
        %v985 = vpack.c.bf16 %v967, %v963
        %v986 = vpack.c.bf16 %v969, %v965
        %987 = vst [vmem:[#allocation2] sm:$0xff] %v971
        %988 = vst [vmem:[#allocation2 + $0x8] sm:$0xff] %v972
        %989 = vst [vmem:[#allocation2 + $0x10] sm:$0xff] %v973
        %990 = vst [vmem:[#allocation2 + $0x18] sm:$0xff] %v974
        %991 = vst [vmem:[#allocation2 + $0x20] sm:$0xff] %v975
        %992 = vst [vmem:[#allocation2 + $0x28] sm:$0xff] %v976
        %993 = vst [vmem:[#allocation2 + $0x30] sm:$0xff] %v977
        %994 = vst [vmem:[#allocation2 + $0x38] sm:$0xff] %v978
        %995 = vst [vmem:[#allocation2 + $0x40] sm:$0xff] %v979
        %996 = vst [vmem:[#allocation2 + $0x48] sm:$0xff] %v980
        %997 = vst [vmem:[#allocation2 + $0x50] sm:$0xff] %v981
        %998 = vst [vmem:[#allocation2 + $0x58] sm:$0xff] %v982
        %999 = vst [vmem:[#allocation2 + $0x60] sm:$0xff] %v983
        %1000 = vst [vmem:[#allocation2 + $0x68] sm:$0xff] %v984
        %1001 = vst [vmem:[#allocation2 + $0x70] sm:$0xff] %v985
        %1002 = vst [vmem:[#allocation2 + $0x78] sm:$0xff] %v986
        %v1003 = vld [vmem:[%s503] sm:$0xff]
        %v1004 = vld [vmem:[%s503 + $0x8] sm:$0xff]
        %v1005 = vld [vmem:[%s503 + $0x10] sm:$0xff]
        %v1006 = vld [vmem:[%s503 + $0x18] sm:$0xff]
        %v1007 = vld [vmem:[%s503 + $0x20] sm:$0xff]
        %v1008 = vld [vmem:[%s503 + $0x28] sm:$0xff]
        %v1009 = vld [vmem:[%s503 + $0x30] sm:$0xff]
        %v1010 = vld [vmem:[%s503 + $0x38] sm:$0xff]
        %v1011 = vld [vmem:[%s503 + $0x40] sm:$0xff]
        %v1012 = vld [vmem:[%s503 + $0x48] sm:$0xff]
        %v1013 = vld [vmem:[%s503 + $0x50] sm:$0xff]
        %v1014 = vld [vmem:[%s503 + $0x58] sm:$0xff]
        %v1015 = vld [vmem:[%s503 + $0x60] sm:$0xff]
        %v1016 = vld [vmem:[%s503 + $0x68] sm:$0xff]
        %v1017 = vld [vmem:[%s503 + $0x70] sm:$0xff]
        %v1018 = vld [vmem:[%s503 + $0x78] sm:$0xff]
        %v1019 = vld [vmem:[%s503 + $0x80] sm:$0xff]
        %v1020 = vld [vmem:[%s503 + $0x88] sm:$0xff]
        %v1021 = vld [vmem:[%s503 + $0x90] sm:$0xff]
        %v1022 = vld [vmem:[%s503 + $0x98] sm:$0xff]
        %v1023 = vld [vmem:[%s503 + $0xa0] sm:$0xff]
        %v1024 = vld [vmem:[%s503 + $0xa8] sm:$0xff]
        %v1025 = vld [vmem:[%s503 + $0xb0] sm:$0xff]
        %v1026 = vld [vmem:[%s503 + $0xb8] sm:$0xff]
        %v1027 = vld [vmem:[%s503 + $0xc0] sm:$0xff]
        %v1028 = vld [vmem:[%s503 + $0xc8] sm:$0xff]
        %v1029 = vld [vmem:[%s503 + $0xd0] sm:$0xff]
        %v1030 = vld [vmem:[%s503 + $0xd8] sm:$0xff]
        %v1031 = vld [vmem:[%s503 + $0xe0] sm:$0xff]
        %v1032 = vld [vmem:[%s503 + $0xe8] sm:$0xff]
        %v1033 = vld [vmem:[%s503 + $0xf0] sm:$0xff]
        %v1034 = vld [vmem:[%s503 + $0xf8] sm:$0xff]
        %v1035 = vld [vmem:[%s503 + $0x100] sm:$0xff]
        %v1036 = vld [vmem:[%s503 + $0x108] sm:$0xff]
        %v1037 = vld [vmem:[%s503 + $0x110] sm:$0xff]
        %v1038 = vld [vmem:[%s503 + $0x118] sm:$0xff]
        %v1039 = vld [vmem:[%s503 + $0x120] sm:$0xff]
        %v1040 = vld [vmem:[%s503 + $0x128] sm:$0xff]
        %v1041 = vld [vmem:[%s503 + $0x130] sm:$0xff]
        %v1042 = vld [vmem:[%s503 + $0x138] sm:$0xff]
        %v1043 = vld [vmem:[%s503 + $0x140] sm:$0xff]
        %v1044 = vld [vmem:[%s503 + $0x148] sm:$0xff]
        %v1045 = vld [vmem:[%s503 + $0x150] sm:$0xff]
        %v1046 = vld [vmem:[%s503 + $0x158] sm:$0xff]
        %v1047 = vld [vmem:[%s503 + $0x160] sm:$0xff]
        %v1048 = vld [vmem:[%s503 + $0x168] sm:$0xff]
        %v1049 = vld [vmem:[%s503 + $0x170] sm:$0xff]
        %v1050 = vld [vmem:[%s503 + $0x178] sm:$0xff]
        %v1051 = vld [vmem:[%s503 + $0x180] sm:$0xff]
        %v1052 = vld [vmem:[%s503 + $0x188] sm:$0xff]
        %v1053 = vld [vmem:[%s503 + $0x190] sm:$0xff]
        %v1054 = vld [vmem:[%s503 + $0x198] sm:$0xff]
        %v1055 = vld [vmem:[%s503 + $0x1a0] sm:$0xff]
        %v1056 = vld [vmem:[%s503 + $0x1a8] sm:$0xff]
        %v1057 = vld [vmem:[%s503 + $0x1b0] sm:$0xff]
        %v1058 = vld [vmem:[%s503 + $0x1b8] sm:$0xff]
        %v1059 = vld [vmem:[%s503 + $0x1c0] sm:$0xff]
        %v1060 = vld [vmem:[%s503 + $0x1c8] sm:$0xff]
        %v1061 = vld [vmem:[%s503 + $0x1d0] sm:$0xff]
        %v1062 = vld [vmem:[%s503 + $0x1d8] sm:$0xff]
        %v1063 = vld [vmem:[%s503 + $0x1e0] sm:$0xff]
        %v1064 = vld [vmem:[%s503 + $0x1e8] sm:$0xff]
        %v1065 = vld [vmem:[%s503 + $0x1f0] sm:$0xff]
        %v1066 = vld [vmem:[%s503 + $0x1f8] sm:$0xff]
        %v1067 = vld [vmem:[%s503 + $0x200] sm:$0xff]
        %v1068 = vld [vmem:[%s503 + $0x208] sm:$0xff]
        %v1069 = vld [vmem:[%s503 + $0x210] sm:$0xff]
        %v1070 = vld [vmem:[%s503 + $0x218] sm:$0xff]
        %v1071 = vld [vmem:[%s503 + $0x220] sm:$0xff]
        %v1072 = vld [vmem:[%s503 + $0x228] sm:$0xff]
        %v1073 = vld [vmem:[%s503 + $0x230] sm:$0xff]
        %v1074 = vld [vmem:[%s503 + $0x238] sm:$0xff]
        %v1075 = vld [vmem:[%s503 + $0x240] sm:$0xff]
        %v1076 = vld [vmem:[%s503 + $0x248] sm:$0xff]
        %v1077 = vld [vmem:[%s503 + $0x250] sm:$0xff]
        %v1078 = vld [vmem:[%s503 + $0x258] sm:$0xff]
        %v1079 = vld [vmem:[%s503 + $0x260] sm:$0xff]
        %v1080 = vld [vmem:[%s503 + $0x268] sm:$0xff]
        %v1081 = vld [vmem:[%s503 + $0x270] sm:$0xff]
        %v1082 = vld [vmem:[%s503 + $0x278] sm:$0xff]
        %v1083 = vld [vmem:[%s503 + $0x280] sm:$0xff]
        %v1084 = vld [vmem:[%s503 + $0x288] sm:$0xff]
        %v1085 = vld [vmem:[%s503 + $0x290] sm:$0xff]
        %v1086 = vld [vmem:[%s503 + $0x298] sm:$0xff]
        %v1087 = vld [vmem:[%s503 + $0x2a0] sm:$0xff]
        %v1088 = vld [vmem:[%s503 + $0x2a8] sm:$0xff]
        %v1089 = vld [vmem:[%s503 + $0x2b0] sm:$0xff]
        %v1090 = vld [vmem:[%s503 + $0x2b8] sm:$0xff]
        %v1091 = vld [vmem:[%s503 + $0x2c0] sm:$0xff]
        %v1092 = vld [vmem:[%s503 + $0x2c8] sm:$0xff]
        %v1093 = vld [vmem:[%s503 + $0x2d0] sm:$0xff]
        %v1094 = vld [vmem:[%s503 + $0x2d8] sm:$0xff]
        %v1095 = vld [vmem:[%s503 + $0x2e0] sm:$0xff]
        %v1096 = vld [vmem:[%s503 + $0x2e8] sm:$0xff]
        %v1097 = vld [vmem:[%s503 + $0x2f0] sm:$0xff]
        %v1098 = vld [vmem:[%s503 + $0x2f8] sm:$0xff]
        %v1099 = vld [vmem:[%s503 + $0x300] sm:$0xff]
        %v1100 = vld [vmem:[%s503 + $0x308] sm:$0xff]
        %v1101 = vld [vmem:[%s503 + $0x310] sm:$0xff]
        %v1102 = vld [vmem:[%s503 + $0x318] sm:$0xff]
        %v1103 = vld [vmem:[%s503 + $0x320] sm:$0xff]
        %v1104 = vld [vmem:[%s503 + $0x328] sm:$0xff]
        %v1105 = vld [vmem:[%s503 + $0x330] sm:$0xff]
        %v1106 = vld [vmem:[%s503 + $0x338] sm:$0xff]
        %v1107 = vld [vmem:[%s503 + $0x340] sm:$0xff]
        %v1108 = vld [vmem:[%s503 + $0x348] sm:$0xff]
        %v1109 = vld [vmem:[%s503 + $0x350] sm:$0xff]
        %v1110 = vld [vmem:[%s503 + $0x358] sm:$0xff]
        %v1111 = vld [vmem:[%s503 + $0x360] sm:$0xff]
        %v1112 = vld [vmem:[%s503 + $0x368] sm:$0xff]
        %v1113 = vld [vmem:[%s503 + $0x370] sm:$0xff]
        %v1114 = vld [vmem:[%s503 + $0x378] sm:$0xff]
        %v1115 = vld [vmem:[%s503 + $0x380] sm:$0xff]
        %v1116 = vld [vmem:[%s503 + $0x388] sm:$0xff]
        %v1117 = vld [vmem:[%s503 + $0x390] sm:$0xff]
        %v1118 = vld [vmem:[%s503 + $0x398] sm:$0xff]
        %v1119 = vld [vmem:[%s503 + $0x3a0] sm:$0xff]
        %v1120 = vld [vmem:[%s503 + $0x3a8] sm:$0xff]
        %v1121 = vld [vmem:[%s503 + $0x3b0] sm:$0xff]
        %v1122 = vld [vmem:[%s503 + $0x3b8] sm:$0xff]
        %v1123 = vld [vmem:[%s503 + $0x3c0] sm:$0xff]
        %v1124 = vld [vmem:[%s503 + $0x3c8] sm:$0xff]
        %v1125 = vld [vmem:[%s503 + $0x3d0] sm:$0xff]
        %v1126 = vld [vmem:[%s503 + $0x3d8] sm:$0xff]
        %v1127 = vld [vmem:[%s503 + $0x3e0] sm:$0xff]
        %v1128 = vld [vmem:[%s503 + $0x3e8] sm:$0xff]
        %v1129 = vld [vmem:[%s503 + $0x3f0] sm:$0xff]
        %v1130 = vld [vmem:[%s503 + $0x3f8] sm:$0xff]
        %v1131 = vpack.c.bf16 %v1011, %v1003
        %v1132 = vpack.c.bf16 %v1012, %v1004
        %v1133 = vpack.c.bf16 %v1013, %v1005
        %v1134 = vpack.c.bf16 %v1014, %v1006
        %v1135 = vpack.c.bf16 %v1015, %v1007
        %v1136 = vpack.c.bf16 %v1016, %v1008
        %v1137 = vpack.c.bf16 %v1017, %v1009
        %v1138 = vpack.c.bf16 %v1018, %v1010
        %v1139 = vpack.c.bf16 %v1027, %v1019
        %v1140 = vpack.c.bf16 %v1028, %v1020
        %v1141 = vpack.c.bf16 %v1029, %v1021
        %v1142 = vpack.c.bf16 %v1030, %v1022
        %v1143 = vpack.c.bf16 %v1031, %v1023
        %v1144 = vpack.c.bf16 %v1032, %v1024
        %v1145 = vpack.c.bf16 %v1033, %v1025
        %v1146 = vpack.c.bf16 %v1034, %v1026
        %v1147 = vpack.c.bf16 %v1043, %v1035
        %v1148 = vpack.c.bf16 %v1044, %v1036
        %v1149 = vpack.c.bf16 %v1045, %v1037
        %v1150 = vpack.c.bf16 %v1046, %v1038
        %v1151 = vpack.c.bf16 %v1047, %v1039
        %v1152 = vpack.c.bf16 %v1048, %v1040
        %v1153 = vpack.c.bf16 %v1049, %v1041
        %v1154 = vpack.c.bf16 %v1050, %v1042
        %v1155 = vpack.c.bf16 %v1059, %v1051
        %v1156 = vpack.c.bf16 %v1060, %v1052
        %v1157 = vpack.c.bf16 %v1061, %v1053
        %v1158 = vpack.c.bf16 %v1062, %v1054
        %v1159 = vpack.c.bf16 %v1063, %v1055
        %v1160 = vpack.c.bf16 %v1064, %v1056
        %v1161 = vpack.c.bf16 %v1065, %v1057
        %v1162 = vpack.c.bf16 %v1066, %v1058
        %v1163 = vpack.c.bf16 %v1075, %v1067
        %v1164 = vpack.c.bf16 %v1076, %v1068
        %v1165 = vpack.c.bf16 %v1077, %v1069
        %v1166 = vpack.c.bf16 %v1078, %v1070
        %v1167 = vpack.c.bf16 %v1079, %v1071
        %v1168 = vpack.c.bf16 %v1080, %v1072
        %v1169 = vpack.c.bf16 %v1081, %v1073
        %v1170 = vpack.c.bf16 %v1082, %v1074
        %v1171 = vpack.c.bf16 %v1091, %v1083
        %v1172 = vpack.c.bf16 %v1092, %v1084
        %v1173 = vpack.c.bf16 %v1093, %v1085
        %v1174 = vpack.c.bf16 %v1094, %v1086
        %v1175 = vpack.c.bf16 %v1095, %v1087
        %v1176 = vpack.c.bf16 %v1096, %v1088
        %v1177 = vpack.c.bf16 %v1097, %v1089
        %v1178 = vpack.c.bf16 %v1098, %v1090
        %v1179 = vpack.c.bf16 %v1107, %v1099
        %v1180 = vpack.c.bf16 %v1108, %v1100
        %v1181 = vpack.c.bf16 %v1109, %v1101
        %v1182 = vpack.c.bf16 %v1110, %v1102
        %v1183 = vpack.c.bf16 %v1111, %v1103
        %v1184 = vpack.c.bf16 %v1112, %v1104
        %v1185 = vpack.c.bf16 %v1113, %v1105
        %v1186 = vpack.c.bf16 %v1114, %v1106
        %v1187 = vpack.c.bf16 %v1123, %v1115
        %v1188 = vpack.c.bf16 %v1124, %v1116
        %v1189 = vpack.c.bf16 %v1125, %v1117
        %v1190 = vpack.c.bf16 %v1126, %v1118
        %v1191 = vpack.c.bf16 %v1127, %v1119
        %v1192 = vpack.c.bf16 %v1128, %v1120
        %v1193 = vpack.c.bf16 %v1129, %v1121
        %v1194 = vpack.c.bf16 %v1130, %v1122
        %v1195 = vld [vmem:[%s521] sm:$0xff]
        %v1196 = vld [vmem:[%s521 + $0x8] sm:$0xff]
        %v1197 = vld [vmem:[%s521 + $0x10] sm:$0xff]
        %v1198 = vld [vmem:[%s521 + $0x18] sm:$0xff]
        %v1199 = vld [vmem:[%s521 + $0x20] sm:$0xff]
        %v1200 = vld [vmem:[%s521 + $0x28] sm:$0xff]
        %v1201 = vld [vmem:[%s521 + $0x30] sm:$0xff]
        %v1202 = vld [vmem:[%s521 + $0x38] sm:$0xff]
        %v1203 = vld [vmem:[%s521 + $0x40] sm:$0xff]
        %v1204 = vld [vmem:[%s521 + $0x48] sm:$0xff]
        %v1205 = vld [vmem:[%s521 + $0x50] sm:$0xff]
        %v1206 = vld [vmem:[%s521 + $0x58] sm:$0xff]
        %v1207 = vld [vmem:[%s521 + $0x60] sm:$0xff]
        %v1208 = vld [vmem:[%s521 + $0x68] sm:$0xff]
        %v1209 = vld [vmem:[%s521 + $0x70] sm:$0xff]
        %v1210 = vld [vmem:[%s521 + $0x78] sm:$0xff]
        %v1211 = vld [vmem:[%s521 + $0x80] sm:$0xff]
        %v1212 = vld [vmem:[%s521 + $0x88] sm:$0xff]
        %v1213 = vld [vmem:[%s521 + $0x90] sm:$0xff]
        %v1214 = vld [vmem:[%s521 + $0x98] sm:$0xff]
        %v1215 = vld [vmem:[%s521 + $0xa0] sm:$0xff]
        %v1216 = vld [vmem:[%s521 + $0xa8] sm:$0xff]
        %v1217 = vld [vmem:[%s521 + $0xb0] sm:$0xff]
        %v1218 = vld [vmem:[%s521 + $0xb8] sm:$0xff]
        %v1219 = vld [vmem:[%s521 + $0xc0] sm:$0xff]
        %v1220 = vld [vmem:[%s521 + $0xc8] sm:$0xff]
        %v1221 = vld [vmem:[%s521 + $0xd0] sm:$0xff]
        %v1222 = vld [vmem:[%s521 + $0xd8] sm:$0xff]
        %v1223 = vld [vmem:[%s521 + $0xe0] sm:$0xff]
        %v1224 = vld [vmem:[%s521 + $0xe8] sm:$0xff]
        %v1225 = vld [vmem:[%s521 + $0xf0] sm:$0xff]
        %v1226 = vld [vmem:[%s521 + $0xf8] sm:$0xff]
        %v1227 = vld [vmem:[%s521 + $0x100] sm:$0xff]
        %v1228 = vld [vmem:[%s521 + $0x108] sm:$0xff]
        %v1229 = vld [vmem:[%s521 + $0x110] sm:$0xff]
        %v1230 = vld [vmem:[%s521 + $0x118] sm:$0xff]
        %v1231 = vld [vmem:[%s521 + $0x120] sm:$0xff]
        %v1232 = vld [vmem:[%s521 + $0x128] sm:$0xff]
        %v1233 = vld [vmem:[%s521 + $0x130] sm:$0xff]
        %v1234 = vld [vmem:[%s521 + $0x138] sm:$0xff]
        %v1235 = vld [vmem:[%s521 + $0x140] sm:$0xff]
        %v1236 = vld [vmem:[%s521 + $0x148] sm:$0xff]
        %v1237 = vld [vmem:[%s521 + $0x150] sm:$0xff]
        %v1238 = vld [vmem:[%s521 + $0x158] sm:$0xff]
        %v1239 = vld [vmem:[%s521 + $0x160] sm:$0xff]
        %v1240 = vld [vmem:[%s521 + $0x168] sm:$0xff]
        %v1241 = vld [vmem:[%s521 + $0x170] sm:$0xff]
        %v1242 = vld [vmem:[%s521 + $0x178] sm:$0xff]
        %v1243 = vld [vmem:[%s521 + $0x180] sm:$0xff]
        %v1244 = vld [vmem:[%s521 + $0x188] sm:$0xff]
        %v1245 = vld [vmem:[%s521 + $0x190] sm:$0xff]
        %v1246 = vld [vmem:[%s521 + $0x198] sm:$0xff]
        %v1247 = vld [vmem:[%s521 + $0x1a0] sm:$0xff]
        %v1248 = vld [vmem:[%s521 + $0x1a8] sm:$0xff]
        %v1249 = vld [vmem:[%s521 + $0x1b0] sm:$0xff]
        %v1250 = vld [vmem:[%s521 + $0x1b8] sm:$0xff]
        %v1251 = vld [vmem:[%s521 + $0x1c0] sm:$0xff]
        %v1252 = vld [vmem:[%s521 + $0x1c8] sm:$0xff]
        %v1253 = vld [vmem:[%s521 + $0x1d0] sm:$0xff]
        %v1254 = vld [vmem:[%s521 + $0x1d8] sm:$0xff]
        %v1255 = vld [vmem:[%s521 + $0x1e0] sm:$0xff]
        %v1256 = vld [vmem:[%s521 + $0x1e8] sm:$0xff]
        %v1257 = vld [vmem:[%s521 + $0x1f0] sm:$0xff]
        %v1258 = vld [vmem:[%s521 + $0x1f8] sm:$0xff]
        %v1259 = vld [vmem:[%s521 + $0x200] sm:$0xff]
        %v1260 = vld [vmem:[%s521 + $0x208] sm:$0xff]
        %v1261 = vld [vmem:[%s521 + $0x210] sm:$0xff]
        %v1262 = vld [vmem:[%s521 + $0x218] sm:$0xff]
        %v1263 = vld [vmem:[%s521 + $0x220] sm:$0xff]
        %v1264 = vld [vmem:[%s521 + $0x228] sm:$0xff]
        %v1265 = vld [vmem:[%s521 + $0x230] sm:$0xff]
        %v1266 = vld [vmem:[%s521 + $0x238] sm:$0xff]
        %v1267 = vld [vmem:[%s521 + $0x240] sm:$0xff]
        %v1268 = vld [vmem:[%s521 + $0x248] sm:$0xff]
        %v1269 = vld [vmem:[%s521 + $0x250] sm:$0xff]
        %v1270 = vld [vmem:[%s521 + $0x258] sm:$0xff]
        %v1271 = vld [vmem:[%s521 + $0x260] sm:$0xff]
        %v1272 = vld [vmem:[%s521 + $0x268] sm:$0xff]
        %v1273 = vld [vmem:[%s521 + $0x270] sm:$0xff]
        %v1274 = vld [vmem:[%s521 + $0x278] sm:$0xff]
        %v1275 = vld [vmem:[%s521 + $0x280] sm:$0xff]
        %v1276 = vld [vmem:[%s521 + $0x288] sm:$0xff]
        %v1277 = vld [vmem:[%s521 + $0x290] sm:$0xff]
        %v1278 = vld [vmem:[%s521 + $0x298] sm:$0xff]
        %v1279 = vld [vmem:[%s521 + $0x2a0] sm:$0xff]
        %v1280 = vld [vmem:[%s521 + $0x2a8] sm:$0xff]
        %v1281 = vld [vmem:[%s521 + $0x2b0] sm:$0xff]
        %v1282 = vld [vmem:[%s521 + $0x2b8] sm:$0xff]
        %v1283 = vld [vmem:[%s521 + $0x2c0] sm:$0xff]
        %v1284 = vld [vmem:[%s521 + $0x2c8] sm:$0xff]
        %v1285 = vld [vmem:[%s521 + $0x2d0] sm:$0xff]
        %v1286 = vld [vmem:[%s521 + $0x2d8] sm:$0xff]
        %v1287 = vld [vmem:[%s521 + $0x2e0] sm:$0xff]
        %v1288 = vld [vmem:[%s521 + $0x2e8] sm:$0xff]
        %v1289 = vld [vmem:[%s521 + $0x2f0] sm:$0xff]
        %v1290 = vld [vmem:[%s521 + $0x2f8] sm:$0xff]
        %v1291 = vld [vmem:[%s521 + $0x300] sm:$0xff]
        %v1292 = vld [vmem:[%s521 + $0x308] sm:$0xff]
        %v1293 = vld [vmem:[%s521 + $0x310] sm:$0xff]
        %v1294 = vld [vmem:[%s521 + $0x318] sm:$0xff]
        %v1295 = vld [vmem:[%s521 + $0x320] sm:$0xff]
        %v1296 = vld [vmem:[%s521 + $0x328] sm:$0xff]
        %v1297 = vld [vmem:[%s521 + $0x330] sm:$0xff]
        %v1298 = vld [vmem:[%s521 + $0x338] sm:$0xff]
        %v1299 = vld [vmem:[%s521 + $0x340] sm:$0xff]
        %v1300 = vld [vmem:[%s521 + $0x348] sm:$0xff]
        %v1301 = vld [vmem:[%s521 + $0x350] sm:$0xff]
        %v1302 = vld [vmem:[%s521 + $0x358] sm:$0xff]
        %v1303 = vld [vmem:[%s521 + $0x360] sm:$0xff]
        %v1304 = vld [vmem:[%s521 + $0x368] sm:$0xff]
        %v1305 = vld [vmem:[%s521 + $0x370] sm:$0xff]
        %v1306 = vld [vmem:[%s521 + $0x378] sm:$0xff]
        %v1307 = vld [vmem:[%s521 + $0x380] sm:$0xff]
        %v1308 = vld [vmem:[%s521 + $0x388] sm:$0xff]
        %v1309 = vld [vmem:[%s521 + $0x390] sm:$0xff]
        %v1310 = vld [vmem:[%s521 + $0x398] sm:$0xff]
        %v1311 = vld [vmem:[%s521 + $0x3a0] sm:$0xff]
        %v1312 = vld [vmem:[%s521 + $0x3a8] sm:$0xff]
        %v1313 = vld [vmem:[%s521 + $0x3b0] sm:$0xff]
        %v1314 = vld [vmem:[%s521 + $0x3b8] sm:$0xff]
        %v1315 = vld [vmem:[%s521 + $0x3c0] sm:$0xff]
        %v1316 = vld [vmem:[%s521 + $0x3c8] sm:$0xff]
        %v1317 = vld [vmem:[%s521 + $0x3d0] sm:$0xff]
        %v1318 = vld [vmem:[%s521 + $0x3d8] sm:$0xff]
        %v1319 = vld [vmem:[%s521 + $0x3e0] sm:$0xff]
        %v1320 = vld [vmem:[%s521 + $0x3e8] sm:$0xff]
        %v1321 = vld [vmem:[%s521 + $0x3f0] sm:$0xff]
        %v1322 = vld [vmem:[%s521 + $0x3f8] sm:$0xff]
        %v1451 = vunpack.c.l.b16 %v1195
        %v1452 = vunpack.c.h.b16 %v1195
        %v1453 = vunpack.c.l.b16 %v1196
        %v1454 = vunpack.c.h.b16 %v1196
        %v1455 = vunpack.c.l.b16 %v1197
        %v1456 = vunpack.c.h.b16 %v1197
        %v1457 = vunpack.c.l.b16 %v1198
        %v1458 = vunpack.c.h.b16 %v1198
        %v1459 = vunpack.c.l.b16 %v1199
        %v1460 = vunpack.c.h.b16 %v1199
        %v1461 = vunpack.c.l.b16 %v1200
        %v1462 = vunpack.c.h.b16 %v1200
        %v1463 = vunpack.c.l.b16 %v1201
        %v1464 = vunpack.c.h.b16 %v1201
        %v1465 = vunpack.c.l.b16 %v1202
        %v1466 = vunpack.c.h.b16 %v1202
        %v1467 = vunpack.c.l.b16 %v1203
        %v1468 = vunpack.c.h.b16 %v1203
        %v1469 = vunpack.c.l.b16 %v1204
        %v1470 = vunpack.c.h.b16 %v1204
        %v1471 = vunpack.c.l.b16 %v1205
        %v1472 = vunpack.c.h.b16 %v1205
        %v1473 = vunpack.c.l.b16 %v1206
        %v1474 = vunpack.c.h.b16 %v1206
        %v1475 = vunpack.c.l.b16 %v1207
        %v1476 = vunpack.c.h.b16 %v1207
        %v1477 = vunpack.c.l.b16 %v1208
        %v1478 = vunpack.c.h.b16 %v1208
        %v1479 = vunpack.c.l.b16 %v1209
        %v1480 = vunpack.c.h.b16 %v1209
        %v1481 = vunpack.c.l.b16 %v1210
        %v1482 = vunpack.c.h.b16 %v1210
        %v1483 = vunpack.c.l.b16 %v1211
        %v1484 = vunpack.c.h.b16 %v1211
        %v1485 = vunpack.c.l.b16 %v1212
        %v1486 = vunpack.c.h.b16 %v1212
        %v1487 = vunpack.c.l.b16 %v1213
        %v1488 = vunpack.c.h.b16 %v1213
        %v1489 = vunpack.c.l.b16 %v1214
        %v1490 = vunpack.c.h.b16 %v1214
        %v1491 = vunpack.c.l.b16 %v1215
        %v1492 = vunpack.c.h.b16 %v1215
        %v1493 = vunpack.c.l.b16 %v1216
        %v1494 = vunpack.c.h.b16 %v1216
        %v1495 = vunpack.c.l.b16 %v1217
        %v1496 = vunpack.c.h.b16 %v1217
        %v1497 = vunpack.c.l.b16 %v1218
        %v1498 = vunpack.c.h.b16 %v1218
        %v1499 = vunpack.c.l.b16 %v1219
        %v1500 = vunpack.c.h.b16 %v1219
        %v1501 = vunpack.c.l.b16 %v1220
        %v1502 = vunpack.c.h.b16 %v1220
        %v1503 = vunpack.c.l.b16 %v1221
        %v1504 = vunpack.c.h.b16 %v1221
        %v1505 = vunpack.c.l.b16 %v1222
        %v1506 = vunpack.c.h.b16 %v1222
        %v1507 = vunpack.c.l.b16 %v1223
        %v1508 = vunpack.c.h.b16 %v1223
        %v1509 = vunpack.c.l.b16 %v1224
        %v1510 = vunpack.c.h.b16 %v1224
        %v1511 = vunpack.c.l.b16 %v1225
        %v1512 = vunpack.c.h.b16 %v1225
        %v1513 = vunpack.c.l.b16 %v1226
        %v1514 = vunpack.c.h.b16 %v1226
        %v1515 = vunpack.c.l.b16 %v1227
        %v1516 = vunpack.c.h.b16 %v1227
        %v1517 = vunpack.c.l.b16 %v1228
        %v1518 = vunpack.c.h.b16 %v1228
        %v1519 = vunpack.c.l.b16 %v1229
        %v1520 = vunpack.c.h.b16 %v1229
        %v1521 = vunpack.c.l.b16 %v1230
        %v1522 = vunpack.c.h.b16 %v1230
        %v1523 = vunpack.c.l.b16 %v1231
        %v1524 = vunpack.c.h.b16 %v1231
        %v1525 = vunpack.c.l.b16 %v1232
        %v1526 = vunpack.c.h.b16 %v1232
        %v1527 = vunpack.c.l.b16 %v1233
        %v1528 = vunpack.c.h.b16 %v1233
        %v1529 = vunpack.c.l.b16 %v1234
        %v1530 = vunpack.c.h.b16 %v1234
        %v1531 = vunpack.c.l.b16 %v1235
        %v1532 = vunpack.c.h.b16 %v1235
        %v1533 = vunpack.c.l.b16 %v1236
        %v1534 = vunpack.c.h.b16 %v1236
        %v1535 = vunpack.c.l.b16 %v1237
        %v1536 = vunpack.c.h.b16 %v1237
        %v1537 = vunpack.c.l.b16 %v1238
        %v1538 = vunpack.c.h.b16 %v1238
        %v1539 = vunpack.c.l.b16 %v1239
        %v1540 = vunpack.c.h.b16 %v1239
        %v1541 = vunpack.c.l.b16 %v1240
        %v1542 = vunpack.c.h.b16 %v1240
        %v1543 = vunpack.c.l.b16 %v1241
        %v1544 = vunpack.c.h.b16 %v1241
        %v1545 = vunpack.c.l.b16 %v1242
        %v1546 = vunpack.c.h.b16 %v1242
        %v1547 = vunpack.c.l.b16 %v1243
        %v1548 = vunpack.c.h.b16 %v1243
        %v1549 = vunpack.c.l.b16 %v1244
        %v1550 = vunpack.c.h.b16 %v1244
        %v1551 = vunpack.c.l.b16 %v1245
        %v1552 = vunpack.c.h.b16 %v1245
        %v1553 = vunpack.c.l.b16 %v1246
        %v1554 = vunpack.c.h.b16 %v1246
        %v1555 = vunpack.c.l.b16 %v1247
        %v1556 = vunpack.c.h.b16 %v1247
        %v1557 = vunpack.c.l.b16 %v1248
        %v1558 = vunpack.c.h.b16 %v1248
        %v1559 = vunpack.c.l.b16 %v1249
        %v1560 = vunpack.c.h.b16 %v1249
        %v1561 = vunpack.c.l.b16 %v1250
        %v1562 = vunpack.c.h.b16 %v1250
        %v1563 = vunpack.c.l.b16 %v1251
        %v1564 = vunpack.c.h.b16 %v1251
        %v1565 = vunpack.c.l.b16 %v1252
        %v1566 = vunpack.c.h.b16 %v1252
        %v1567 = vunpack.c.l.b16 %v1253
        %v1568 = vunpack.c.h.b16 %v1253
        %v1569 = vunpack.c.l.b16 %v1254
        %v1570 = vunpack.c.h.b16 %v1254
        %v1571 = vunpack.c.l.b16 %v1255
        %v1572 = vunpack.c.h.b16 %v1255
        %v1573 = vunpack.c.l.b16 %v1256
        %v1574 = vunpack.c.h.b16 %v1256
        %v1575 = vunpack.c.l.b16 %v1257
        %v1576 = vunpack.c.h.b16 %v1257
        %v1577 = vunpack.c.l.b16 %v1258
        %v1578 = vunpack.c.h.b16 %v1258
        %v1579 = vunpack.c.l.b16 %v1259
        %v1580 = vunpack.c.h.b16 %v1259
        %v1581 = vunpack.c.l.b16 %v1260
        %v1582 = vunpack.c.h.b16 %v1260
        %v1583 = vunpack.c.l.b16 %v1261
        %v1584 = vunpack.c.h.b16 %v1261
        %v1585 = vunpack.c.l.b16 %v1262
        %v1586 = vunpack.c.h.b16 %v1262
        %v1587 = vunpack.c.l.b16 %v1263
        %v1588 = vunpack.c.h.b16 %v1263
        %v1589 = vunpack.c.l.b16 %v1264
        %v1590 = vunpack.c.h.b16 %v1264
        %v1591 = vunpack.c.l.b16 %v1265
        %v1592 = vunpack.c.h.b16 %v1265
        %v1593 = vunpack.c.l.b16 %v1266
        %v1594 = vunpack.c.h.b16 %v1266
        %v1595 = vunpack.c.l.b16 %v1267
        %v1596 = vunpack.c.h.b16 %v1267
        %v1597 = vunpack.c.l.b16 %v1268
        %v1598 = vunpack.c.h.b16 %v1268
        %v1599 = vunpack.c.l.b16 %v1269
        %v1600 = vunpack.c.h.b16 %v1269
        %v1601 = vunpack.c.l.b16 %v1270
        %v1602 = vunpack.c.h.b16 %v1270
        %v1603 = vunpack.c.l.b16 %v1271
        %v1604 = vunpack.c.h.b16 %v1271
        %v1605 = vunpack.c.l.b16 %v1272
        %v1606 = vunpack.c.h.b16 %v1272
        %v1607 = vunpack.c.l.b16 %v1273
        %v1608 = vunpack.c.h.b16 %v1273
        %v1609 = vunpack.c.l.b16 %v1274
        %v1610 = vunpack.c.h.b16 %v1274
        %v1611 = vunpack.c.l.b16 %v1275
        %v1612 = vunpack.c.h.b16 %v1275
        %v1613 = vunpack.c.l.b16 %v1276
        %v1614 = vunpack.c.h.b16 %v1276
        %v1615 = vunpack.c.l.b16 %v1277
        %v1616 = vunpack.c.h.b16 %v1277
        %v1617 = vunpack.c.l.b16 %v1278
        %v1618 = vunpack.c.h.b16 %v1278
        %v1619 = vunpack.c.l.b16 %v1279
        %v1620 = vunpack.c.h.b16 %v1279
        %v1621 = vunpack.c.l.b16 %v1280
        %v1622 = vunpack.c.h.b16 %v1280
        %v1623 = vunpack.c.l.b16 %v1281
        %v1624 = vunpack.c.h.b16 %v1281
        %v1625 = vunpack.c.l.b16 %v1282
        %v1626 = vunpack.c.h.b16 %v1282
        %v1627 = vunpack.c.l.b16 %v1283
        %v1628 = vunpack.c.h.b16 %v1283
        %v1629 = vunpack.c.l.b16 %v1284
        %v1630 = vunpack.c.h.b16 %v1284
        %v1631 = vunpack.c.l.b16 %v1285
        %v1632 = vunpack.c.h.b16 %v1285
        %v1633 = vunpack.c.l.b16 %v1286
        %v1634 = vunpack.c.h.b16 %v1286
        %v1635 = vunpack.c.l.b16 %v1287
        %v1636 = vunpack.c.h.b16 %v1287
        %v1637 = vunpack.c.l.b16 %v1288
        %v1638 = vunpack.c.h.b16 %v1288
        %v1639 = vunpack.c.l.b16 %v1289
        %v1640 = vunpack.c.h.b16 %v1289
        %v1641 = vunpack.c.l.b16 %v1290
        %v1642 = vunpack.c.h.b16 %v1290
        %v1643 = vunpack.c.l.b16 %v1291
        %v1644 = vunpack.c.h.b16 %v1291
        %v1645 = vunpack.c.l.b16 %v1292
        %v1646 = vunpack.c.h.b16 %v1292
        %v1647 = vunpack.c.l.b16 %v1293
        %v1648 = vunpack.c.h.b16 %v1293
        %v1649 = vunpack.c.l.b16 %v1294
        %v1650 = vunpack.c.h.b16 %v1294
        %v1651 = vunpack.c.l.b16 %v1295
        %v1652 = vunpack.c.h.b16 %v1295
        %v1653 = vunpack.c.l.b16 %v1296
        %v1654 = vunpack.c.h.b16 %v1296
        %v1655 = vunpack.c.l.b16 %v1297
        %v1656 = vunpack.c.h.b16 %v1297
        %v1657 = vunpack.c.l.b16 %v1298
        %v1658 = vunpack.c.h.b16 %v1298
        %v1659 = vunpack.c.l.b16 %v1299
        %v1660 = vunpack.c.h.b16 %v1299
        %v1661 = vunpack.c.l.b16 %v1300
        %v1662 = vunpack.c.h.b16 %v1300
        %v1663 = vunpack.c.l.b16 %v1301
        %v1664 = vunpack.c.h.b16 %v1301
        %v1665 = vunpack.c.l.b16 %v1302
        %v1666 = vunpack.c.h.b16 %v1302
        %v1667 = vunpack.c.l.b16 %v1303
        %v1668 = vunpack.c.h.b16 %v1303
        %v1669 = vunpack.c.l.b16 %v1304
        %v1670 = vunpack.c.h.b16 %v1304
        %v1671 = vunpack.c.l.b16 %v1305
        %v1672 = vunpack.c.h.b16 %v1305
        %v1673 = vunpack.c.l.b16 %v1306
        %v1674 = vunpack.c.h.b16 %v1306
        %v1675 = vunpack.c.l.b16 %v1307
        %v1676 = vunpack.c.h.b16 %v1307
        %v1677 = vunpack.c.l.b16 %v1308
        %v1678 = vunpack.c.h.b16 %v1308
        %v1679 = vunpack.c.l.b16 %v1309
        %v1680 = vunpack.c.h.b16 %v1309
        %v1681 = vunpack.c.l.b16 %v1310
        %v1682 = vunpack.c.h.b16 %v1310
        %v1683 = vunpack.c.l.b16 %v1311
        %v1684 = vunpack.c.h.b16 %v1311
        %v1685 = vunpack.c.l.b16 %v1312
        %v1686 = vunpack.c.h.b16 %v1312
        %v1687 = vunpack.c.l.b16 %v1313
        %v1688 = vunpack.c.h.b16 %v1313
        %v1689 = vunpack.c.l.b16 %v1314
        %v1690 = vunpack.c.h.b16 %v1314
        %v1691 = vunpack.c.l.b16 %v1315
        %v1692 = vunpack.c.h.b16 %v1315
        %v1693 = vunpack.c.l.b16 %v1316
        %v1694 = vunpack.c.h.b16 %v1316
        %v1695 = vunpack.c.l.b16 %v1317
        %v1696 = vunpack.c.h.b16 %v1317
        %v1697 = vunpack.c.l.b16 %v1318
        %v1698 = vunpack.c.h.b16 %v1318
        %v1699 = vunpack.c.l.b16 %v1319
        %v1700 = vunpack.c.h.b16 %v1319
        %v1701 = vunpack.c.l.b16 %v1320
        %v1702 = vunpack.c.h.b16 %v1320
        %v1703 = vunpack.c.l.b16 %v1321
        %v1704 = vunpack.c.h.b16 %v1321
        %v1705 = vunpack.c.l.b16 %v1322
        %v1706 = vunpack.c.h.b16 %v1322
        %v1707 = vpack.c.b16 %v1453, %v1451
        %v1708 = vpack.c.b16 %v1454, %v1452
        %v1709 = vpack.c.b16 %v1457, %v1455
        %v1710 = vpack.c.b16 %v1458, %v1456
        %v1711 = vpack.c.b16 %v1461, %v1459
        %v1712 = vpack.c.b16 %v1462, %v1460
        %v1713 = vpack.c.b16 %v1465, %v1463
        %v1714 = vpack.c.b16 %v1466, %v1464
        %v1715 = vpack.c.b16 %v1469, %v1467
        %v1716 = vpack.c.b16 %v1470, %v1468
        %v1717 = vpack.c.b16 %v1473, %v1471
        %v1718 = vpack.c.b16 %v1474, %v1472
        %v1719 = vpack.c.b16 %v1477, %v1475
        %v1720 = vpack.c.b16 %v1478, %v1476
        %v1721 = vpack.c.b16 %v1481, %v1479
        %v1722 = vpack.c.b16 %v1482, %v1480
        %v1723 = vpack.c.b16 %v1485, %v1483
        %v1724 = vpack.c.b16 %v1486, %v1484
        %v1725 = vpack.c.b16 %v1489, %v1487
        %v1726 = vpack.c.b16 %v1490, %v1488
        %v1727 = vpack.c.b16 %v1493, %v1491
        %v1728 = vpack.c.b16 %v1494, %v1492
        %v1729 = vpack.c.b16 %v1497, %v1495
        %v1730 = vpack.c.b16 %v1498, %v1496
        %v1731 = vpack.c.b16 %v1501, %v1499
        %v1732 = vpack.c.b16 %v1502, %v1500
        %v1733 = vpack.c.b16 %v1505, %v1503
        %v1734 = vpack.c.b16 %v1506, %v1504
        %v1735 = vpack.c.b16 %v1509, %v1507
        %v1736 = vpack.c.b16 %v1510, %v1508
        %v1737 = vpack.c.b16 %v1513, %v1511
        %v1738 = vpack.c.b16 %v1514, %v1512
        %v1739 = vpack.c.b16 %v1517, %v1515
        %v1740 = vpack.c.b16 %v1518, %v1516
        %v1741 = vpack.c.b16 %v1521, %v1519
        %v1742 = vpack.c.b16 %v1522, %v1520
        %v1743 = vpack.c.b16 %v1525, %v1523
        %v1744 = vpack.c.b16 %v1526, %v1524
        %v1745 = vpack.c.b16 %v1529, %v1527
        %v1746 = vpack.c.b16 %v1530, %v1528
        %v1747 = vpack.c.b16 %v1533, %v1531
        %v1748 = vpack.c.b16 %v1534, %v1532
        %v1749 = vpack.c.b16 %v1537, %v1535
        %v1750 = vpack.c.b16 %v1538, %v1536
        %v1751 = vpack.c.b16 %v1541, %v1539
        %v1752 = vpack.c.b16 %v1542, %v1540
        %v1753 = vpack.c.b16 %v1545, %v1543
        %v1754 = vpack.c.b16 %v1546, %v1544
        %v1755 = vpack.c.b16 %v1549, %v1547
        %v1756 = vpack.c.b16 %v1550, %v1548
        %v1757 = vpack.c.b16 %v1553, %v1551
        %v1758 = vpack.c.b16 %v1554, %v1552
        %v1759 = vpack.c.b16 %v1557, %v1555
        %v1760 = vpack.c.b16 %v1558, %v1556
        %v1761 = vpack.c.b16 %v1561, %v1559
        %v1762 = vpack.c.b16 %v1562, %v1560
        %v1763 = vpack.c.b16 %v1565, %v1563
        %v1764 = vpack.c.b16 %v1566, %v1564
        %v1765 = vpack.c.b16 %v1569, %v1567
        %v1766 = vpack.c.b16 %v1570, %v1568
        %v1767 = vpack.c.b16 %v1573, %v1571
        %v1768 = vpack.c.b16 %v1574, %v1572
        %v1769 = vpack.c.b16 %v1577, %v1575
        %v1770 = vpack.c.b16 %v1578, %v1576
        %v1771 = vpack.c.b16 %v1581, %v1579
        %v1772 = vpack.c.b16 %v1582, %v1580
        %v1773 = vpack.c.b16 %v1585, %v1583
        %v1774 = vpack.c.b16 %v1586, %v1584
        %v1775 = vpack.c.b16 %v1589, %v1587
        %v1776 = vpack.c.b16 %v1590, %v1588
        %v1777 = vpack.c.b16 %v1593, %v1591
        %v1778 = vpack.c.b16 %v1594, %v1592
        %v1779 = vpack.c.b16 %v1597, %v1595
        %v1780 = vpack.c.b16 %v1598, %v1596
        %v1781 = vpack.c.b16 %v1601, %v1599
        %v1782 = vpack.c.b16 %v1602, %v1600
        %v1783 = vpack.c.b16 %v1605, %v1603
        %v1784 = vpack.c.b16 %v1606, %v1604
        %v1785 = vpack.c.b16 %v1609, %v1607
        %v1786 = vpack.c.b16 %v1610, %v1608
        %v1787 = vpack.c.b16 %v1613, %v1611
        %v1788 = vpack.c.b16 %v1614, %v1612
        %v1789 = vpack.c.b16 %v1617, %v1615
        %v1790 = vpack.c.b16 %v1618, %v1616
        %v1791 = vpack.c.b16 %v1621, %v1619
        %v1792 = vpack.c.b16 %v1622, %v1620
        %v1793 = vpack.c.b16 %v1625, %v1623
        %v1794 = vpack.c.b16 %v1626, %v1624
        %v1795 = vpack.c.b16 %v1629, %v1627
        %v1796 = vpack.c.b16 %v1630, %v1628
        %v1797 = vpack.c.b16 %v1633, %v1631
        %v1798 = vpack.c.b16 %v1634, %v1632
        %v1799 = vpack.c.b16 %v1637, %v1635
        %v1800 = vpack.c.b16 %v1638, %v1636
        %v1801 = vpack.c.b16 %v1641, %v1639
        %v1802 = vpack.c.b16 %v1642, %v1640
        %v1803 = vpack.c.b16 %v1645, %v1643
        %v1804 = vpack.c.b16 %v1646, %v1644
        %v1805 = vpack.c.b16 %v1649, %v1647
        %v1806 = vpack.c.b16 %v1650, %v1648
        %v1807 = vpack.c.b16 %v1653, %v1651
        %v1808 = vpack.c.b16 %v1654, %v1652
        %v1809 = vpack.c.b16 %v1657, %v1655
        %v1810 = vpack.c.b16 %v1658, %v1656
        %v1811 = vpack.c.b16 %v1661, %v1659
        %v1812 = vpack.c.b16 %v1662, %v1660
        %v1813 = vpack.c.b16 %v1665, %v1663
        %v1814 = vpack.c.b16 %v1666, %v1664
        %v1815 = vpack.c.b16 %v1669, %v1667
        %v1816 = vpack.c.b16 %v1670, %v1668
        %v1817 = vpack.c.b16 %v1673, %v1671
        %v1818 = vpack.c.b16 %v1674, %v1672
        %v1819 = vpack.c.b16 %v1677, %v1675
        %v1820 = vpack.c.b16 %v1678, %v1676
        %v1821 = vpack.c.b16 %v1681, %v1679
        %v1822 = vpack.c.b16 %v1682, %v1680
        %v1823 = vpack.c.b16 %v1685, %v1683
        %v1824 = vpack.c.b16 %v1686, %v1684
        %v1825 = vpack.c.b16 %v1689, %v1687
        %v1826 = vpack.c.b16 %v1690, %v1688
        %v1827 = vpack.c.b16 %v1693, %v1691
        %v1828 = vpack.c.b16 %v1694, %v1692
        %v1829 = vpack.c.b16 %v1697, %v1695
        %v1830 = vpack.c.b16 %v1698, %v1696
        %v1831 = vpack.c.b16 %v1701, %v1699
        %v1832 = vpack.c.b16 %v1702, %v1700
        %v1833 = vpack.c.b16 %v1705, %v1703
        %v1834 = vpack.c.b16 %v1706, %v1704
        %1963 = vmatprep.subr.bf16.mxu0 %v1708
        %1964 = vmatpush1.bf16.msra.mxu0 %v1707
        %1965 = vmatprep.subr.bf16.mxu0 %v1710
        %1966 = vmatpush1.bf16.msra.mxu0 %v1709
        %1967 = vmatprep.subr.bf16.mxu0 %v1712
        %1968 = vmatpush1.bf16.msra.mxu0 %v1711
        %1969 = vmatprep.subr.bf16.mxu0 %v1714
        %1970 = vmatpush1.bf16.msra.mxu0 %v1713
        %1971 = vmatprep.subr.bf16.mxu0 %v1716
        %1972 = vmatpush1.bf16.msra.mxu0 %v1715
        %1973 = vmatprep.subr.bf16.mxu0 %v1718
        %1974 = vmatpush1.bf16.msra.mxu0 %v1717
        %1975 = vmatprep.subr.bf16.mxu0 %v1720
        %1976 = vmatpush1.bf16.msra.mxu0 %v1719
        %1977 = vmatprep.subr.bf16.mxu0 %v1722
        %1978 = vmatpush1.bf16.msra.mxu0 %v1721
        %1979 = vmatprep.subr.bf16.mxu0 %v1724
        %1980 = vmatpush1.bf16.msra.mxu0 %v1723
        %1981 = vmatprep.subr.bf16.mxu0 %v1726
        %1982 = vmatpush1.bf16.msra.mxu0 %v1725
        %1983 = vmatprep.subr.bf16.mxu0 %v1728
        %1984 = vmatpush1.bf16.msra.mxu0 %v1727
        %1985 = vmatprep.subr.bf16.mxu0 %v1730
        %1986 = vmatpush1.bf16.msra.mxu0 %v1729
        %1987 = vmatprep.subr.bf16.mxu0 %v1732
        %1988 = vmatpush1.bf16.msra.mxu0 %v1731
        %1989 = vmatprep.subr.bf16.mxu0 %v1734
        %1990 = vmatpush1.bf16.msra.mxu0 %v1733
        %1991 = vmatprep.subr.bf16.mxu0 %v1736
        %1992 = vmatpush1.bf16.msra.mxu0 %v1735
        %1993 = vmatprep.subr.bf16.mxu0 %v1738
        %1994 = vmatpush1.bf16.msra.mxu0 %v1737
        %1995 = vmatprep.mubr.bf16.mxu0 %v1132
        %1996 = vmatmul.mubr.bf16.gmra.mrb[0].mxu0 %v1131
        %v1997 = vpop.f32.mrb[0].mxu0
        %v1998 = vadd.f32 0.0, %v1997
        %v1999 = vpop.f32.mrb[0].mxu0
        %v2000 = vadd.f32 0.0, %v1999
        %v2001 = vpop.f32.mrb[0].mxu0
        %v2002 = vadd.f32 0.0, %v2001
        %v2003 = vpop.f32.mrb[0].mxu0
        %v2004 = vadd.f32 0.0, %v2003
        %2005 = vmatprep.mubr.bf16.mxu0 %v1140
        %2006 = vmatmul.mubr.bf16.gmra.mrb[0].mxu0 %v1139
        %v2007 = vpop.f32.mrb[0].mxu0
        %v2008 = vadd.f32 0.0, %v2007
        %v2009 = vpop.f32.mrb[0].mxu0
        %v2010 = vadd.f32 0.0, %v2009
        %v2011 = vpop.f32.mrb[0].mxu0
        %v2012 = vadd.f32 0.0, %v2011
        %v2013 = vpop.f32.mrb[0].mxu0
        %v2014 = vadd.f32 0.0, %v2013
        %2015 = vmatprep.mubr.bf16.mxu0 %v1148
        %2016 = vmatmul.mubr.bf16.gmra.mrb[0].mxu0 %v1147
        %v2017 = vpop.f32.mrb[0].mxu0
        %v2018 = vadd.f32 0.0, %v2017
        %v2019 = vpop.f32.mrb[0].mxu0
        %v2020 = vadd.f32 0.0, %v2019
        %v2021 = vpop.f32.mrb[0].mxu0
        %v2022 = vadd.f32 0.0, %v2021
        %v2023 = vpop.f32.mrb[0].mxu0
        %v2024 = vadd.f32 0.0, %v2023
        %2025 = vmatprep.mubr.bf16.mxu0 %v1156
        %2026 = vmatmul.mubr.bf16.gmra.mrb[0].mxu0 %v1155
        %v2027 = vpop.f32.mrb[0].mxu0
        %v2028 = vadd.f32 0.0, %v2027
        %v2029 = vpop.f32.mrb[0].mxu0
        %v2030 = vadd.f32 0.0, %v2029
        %v2031 = vpop.f32.mrb[0].mxu0
        %v2032 = vadd.f32 0.0, %v2031
        %v2033 = vpop.f32.mrb[0].mxu0
        %v2034 = vadd.f32 0.0, %v2033
        %2035 = vmatprep.mubr.bf16.mxu0 %v1164
        %2036 = vmatmul.mubr.bf16.gmra.mrb[0].mxu0 %v1163
        %v2037 = vpop.f32.mrb[0].mxu0
        %v2038 = vadd.f32 0.0, %v2037
        %v2039 = vpop.f32.mrb[0].mxu0
        %v2040 = vadd.f32 0.0, %v2039
        %v2041 = vpop.f32.mrb[0].mxu0
        %v2042 = vadd.f32 0.0, %v2041
        %v2043 = vpop.f32.mrb[0].mxu0
        %v2044 = vadd.f32 0.0, %v2043
        %2045 = vmatprep.mubr.bf16.mxu0 %v1172
        %2046 = vmatmul.mubr.bf16.gmra.mrb[0].mxu0 %v1171
        %v2047 = vpop.f32.mrb[0].mxu0
        %v2048 = vadd.f32 0.0, %v2047
        %v2049 = vpop.f32.mrb[0].mxu0
        %v2050 = vadd.f32 0.0, %v2049
        %v2051 = vpop.f32.mrb[0].mxu0
        %v2052 = vadd.f32 0.0, %v2051
        %v2053 = vpop.f32.mrb[0].mxu0
        %v2054 = vadd.f32 0.0, %v2053
        %2055 = vmatprep.mubr.bf16.mxu0 %v1180
        %2056 = vmatmul.mubr.bf16.gmra.mrb[0].mxu0 %v1179
        %v2057 = vpop.f32.mrb[0].mxu0
        %v2058 = vadd.f32 0.0, %v2057
        %v2059 = vpop.f32.mrb[0].mxu0
        %v2060 = vadd.f32 0.0, %v2059
        %v2061 = vpop.f32.mrb[0].mxu0
        %v2062 = vadd.f32 0.0, %v2061
        %v2063 = vpop.f32.mrb[0].mxu0
        %v2064 = vadd.f32 0.0, %v2063
        %2065 = vmatprep.mubr.bf16.mxu0 %v1188
        %2066 = vmatmul.mubr.bf16.gmra.mrb[0].mxu0 %v1187
        %v2067 = vpop.f32.mrb[0].mxu0
        %v2068 = vadd.f32 0.0, %v2067
        %v2069 = vpop.f32.mrb[0].mxu0
        %v2070 = vadd.f32 0.0, %v2069
        %v2071 = vpop.f32.mrb[0].mxu0
        %v2072 = vadd.f32 0.0, %v2071
        %v2073 = vpop.f32.mrb[0].mxu0
        %v2074 = vadd.f32 0.0, %v2073
        %2075 = vdwg.mxu0
        %2076 = vmatprep.subr.bf16.mxu0 %v1740
        %2077 = vmatpush1.bf16.msra.mxu0 %v1739
        %2078 = vmatprep.subr.bf16.mxu0 %v1742
        %2079 = vmatpush1.bf16.msra.mxu0 %v1741
        %2080 = vmatprep.subr.bf16.mxu0 %v1744
        %2081 = vmatpush1.bf16.msra.mxu0 %v1743
        %2082 = vmatprep.subr.bf16.mxu0 %v1746
        %2083 = vmatpush1.bf16.msra.mxu0 %v1745
        %2084 = vmatprep.subr.bf16.mxu0 %v1748
        %2085 = vmatpush1.bf16.msra.mxu0 %v1747
        %2086 = vmatprep.subr.bf16.mxu0 %v1750
        %2087 = vmatpush1.bf16.msra.mxu0 %v1749
        %2088 = vmatprep.subr.bf16.mxu0 %v1752
        %2089 = vmatpush1.bf16.msra.mxu0 %v1751
        %2090 = vmatprep.subr.bf16.mxu0 %v1754
        %2091 = vmatpush1.bf16.msra.mxu0 %v1753
        %2092 = vmatprep.subr.bf16.mxu0 %v1756
        %2093 = vmatpush1.bf16.msra.mxu0 %v1755
        %2094 = vmatprep.subr.bf16.mxu0 %v1758
        %2095 = vmatpush1.bf16.msra.mxu0 %v1757
        %2096 = vmatprep.subr.bf16.mxu0 %v1760
        %2097 = vmatpush1.bf16.msra.mxu0 %v1759
        %2098 = vmatprep.subr.bf16.mxu0 %v1762
        %2099 = vmatpush1.bf16.msra.mxu0 %v1761
        %2100 = vmatprep.subr.bf16.mxu0 %v1764
        %2101 = vmatpush1.bf16.msra.mxu0 %v1763
        %2102 = vmatprep.subr.bf16.mxu0 %v1766
        %2103 = vmatpush1.bf16.msra.mxu0 %v1765
        %2104 = vmatprep.subr.bf16.mxu0 %v1768
        %2105 = vmatpush1.bf16.msra.mxu0 %v1767
        %2106 = vmatprep.subr.bf16.mxu0 %v1770
        %2107 = vmatpush1.bf16.msra.mxu0 %v1769
        %2108 = vmatprep.mubr.bf16.mxu0 %v1134
        %2109 = vmatmul.mubr.bf16.gmra.mrb[0].mxu0 %v1133
        %v2110 = vpop.f32.mrb[0].mxu0
        %v2111 = vadd.f32 %v1998, %v2110
        %v2112 = vpop.f32.mrb[0].mxu0
        %v2113 = vadd.f32 %v2000, %v2112
        %v2114 = vpop.f32.mrb[0].mxu0
        %v2115 = vadd.f32 %v2002, %v2114
        %v2116 = vpop.f32.mrb[0].mxu0
        %v2117 = vadd.f32 %v2004, %v2116
        %2118 = vmatprep.mubr.bf16.mxu0 %v1142
        %2119 = vmatmul.mubr.bf16.gmra.mrb[0].mxu0 %v1141
        %v2120 = vpop.f32.mrb[0].mxu0
        %v2121 = vadd.f32 %v2008, %v2120
        %v2122 = vpop.f32.mrb[0].mxu0
        %v2123 = vadd.f32 %v2010, %v2122
        %v2124 = vpop.f32.mrb[0].mxu0
        %v2125 = vadd.f32 %v2012, %v2124
        %v2126 = vpop.f32.mrb[0].mxu0
        %v2127 = vadd.f32 %v2014, %v2126
        %2128 = vmatprep.mubr.bf16.mxu0 %v1150
        %2129 = vmatmul.mubr.bf16.gmra.mrb[0].mxu0 %v1149
        %v2130 = vpop.f32.mrb[0].mxu0
        %v2131 = vadd.f32 %v2018, %v2130
        %v2132 = vpop.f32.mrb[0].mxu0
        %v2133 = vadd.f32 %v2020, %v2132
        %v2134 = vpop.f32.mrb[0].mxu0
        %v2135 = vadd.f32 %v2022, %v2134
        %v2136 = vpop.f32.mrb[0].mxu0
        %v2137 = vadd.f32 %v2024, %v2136
        %2138 = vmatprep.mubr.bf16.mxu0 %v1158
        %2139 = vmatmul.mubr.bf16.gmra.mrb[0].mxu0 %v1157
        %v2140 = vpop.f32.mrb[0].mxu0
        %v2141 = vadd.f32 %v2028, %v2140
        %v2142 = vpop.f32.mrb[0].mxu0
        %v2143 = vadd.f32 %v2030, %v2142
        %v2144 = vpop.f32.mrb[0].mxu0
        %v2145 = vadd.f32 %v2032, %v2144
        %v2146 = vpop.f32.mrb[0].mxu0
        %v2147 = vadd.f32 %v2034, %v2146
        %2148 = vmatprep.mubr.bf16.mxu0 %v1166
        %2149 = vmatmul.mubr.bf16.gmra.mrb[0].mxu0 %v1165
        %v2150 = vpop.f32.mrb[0].mxu0
        %v2151 = vadd.f32 %v2038, %v2150
        %v2152 = vpop.f32.mrb[0].mxu0
        %v2153 = vadd.f32 %v2040, %v2152
        %v2154 = vpop.f32.mrb[0].mxu0
        %v2155 = vadd.f32 %v2042, %v2154
        %v2156 = vpop.f32.mrb[0].mxu0
        %v2157 = vadd.f32 %v2044, %v2156
        %2158 = vmatprep.mubr.bf16.mxu0 %v1174
        %2159 = vmatmul.mubr.bf16.gmra.mrb[0].mxu0 %v1173
        %v2160 = vpop.f32.mrb[0].mxu0
        %v2161 = vadd.f32 %v2048, %v2160
        %v2162 = vpop.f32.mrb[0].mxu0
        %v2163 = vadd.f32 %v2050, %v2162
        %v2164 = vpop.f32.mrb[0].mxu0
        %v2165 = vadd.f32 %v2052, %v2164
        %v2166 = vpop.f32.mrb[0].mxu0
        %v2167 = vadd.f32 %v2054, %v2166
        %2168 = vmatprep.mubr.bf16.mxu0 %v1182
        %2169 = vmatmul.mubr.bf16.gmra.mrb[0].mxu0 %v1181
        %v2170 = vpop.f32.mrb[0].mxu0
        %v2171 = vadd.f32 %v2058, %v2170
        %v2172 = vpop.f32.mrb[0].mxu0
        %v2173 = vadd.f32 %v2060, %v2172
        %v2174 = vpop.f32.mrb[0].mxu0
        %v2175 = vadd.f32 %v2062, %v2174
        %v2176 = vpop.f32.mrb[0].mxu0
        %v2177 = vadd.f32 %v2064, %v2176
        %2178 = vmatprep.mubr.bf16.mxu0 %v1190
        %2179 = vmatmul.mubr.bf16.gmra.mrb[0].mxu0 %v1189
        %v2180 = vpop.f32.mrb[0].mxu0
        %v2181 = vadd.f32 %v2068, %v2180
        %v2182 = vpop.f32.mrb[0].mxu0
        %v2183 = vadd.f32 %v2070, %v2182
        %v2184 = vpop.f32.mrb[0].mxu0
        %v2185 = vadd.f32 %v2072, %v2184
        %v2186 = vpop.f32.mrb[0].mxu0
        %v2187 = vadd.f32 %v2074, %v2186
        %2188 = vdwg.mxu0
        %2189 = vmatprep.subr.bf16.mxu0 %v1772
        %2190 = vmatpush1.bf16.msra.mxu0 %v1771
        %2191 = vmatprep.subr.bf16.mxu0 %v1774
        %2192 = vmatpush1.bf16.msra.mxu0 %v1773
        %2193 = vmatprep.subr.bf16.mxu0 %v1776
        %2194 = vmatpush1.bf16.msra.mxu0 %v1775
        %2195 = vmatprep.subr.bf16.mxu0 %v1778
        %2196 = vmatpush1.bf16.msra.mxu0 %v1777
        %2197 = vmatprep.subr.bf16.mxu0 %v1780
        %2198 = vmatpush1.bf16.msra.mxu0 %v1779
        %2199 = vmatprep.subr.bf16.mxu0 %v1782
        %2200 = vmatpush1.bf16.msra.mxu0 %v1781
        %2201 = vmatprep.subr.bf16.mxu0 %v1784
        %2202 = vmatpush1.bf16.msra.mxu0 %v1783
        %2203 = vmatprep.subr.bf16.mxu0 %v1786
        %2204 = vmatpush1.bf16.msra.mxu0 %v1785
        %2205 = vmatprep.subr.bf16.mxu0 %v1788
        %2206 = vmatpush1.bf16.msra.mxu0 %v1787
        %2207 = vmatprep.subr.bf16.mxu0 %v1790
        %2208 = vmatpush1.bf16.msra.mxu0 %v1789
        %2209 = vmatprep.subr.bf16.mxu0 %v1792
        %2210 = vmatpush1.bf16.msra.mxu0 %v1791
        %2211 = vmatprep.subr.bf16.mxu0 %v1794
        %2212 = vmatpush1.bf16.msra.mxu0 %v1793
        %2213 = vmatprep.subr.bf16.mxu0 %v1796
        %2214 = vmatpush1.bf16.msra.mxu0 %v1795
        %2215 = vmatprep.subr.bf16.mxu0 %v1798
        %2216 = vmatpush1.bf16.msra.mxu0 %v1797
        %2217 = vmatprep.subr.bf16.mxu0 %v1800
        %2218 = vmatpush1.bf16.msra.mxu0 %v1799
        %2219 = vmatprep.subr.bf16.mxu0 %v1802
        %2220 = vmatpush1.bf16.msra.mxu0 %v1801
        %2221 = vmatprep.mubr.bf16.mxu0 %v1136
        %2222 = vmatmul.mubr.bf16.gmra.mrb[0].mxu0 %v1135
        %v2223 = vpop.f32.mrb[0].mxu0
        %v2224 = vadd.f32 %v2111, %v2223
        %v2225 = vpop.f32.mrb[0].mxu0
        %v2226 = vadd.f32 %v2113, %v2225
        %v2227 = vpop.f32.mrb[0].mxu0
        %v2228 = vadd.f32 %v2115, %v2227
        %v2229 = vpop.f32.mrb[0].mxu0
        %v2230 = vadd.f32 %v2117, %v2229
        %2231 = vmatprep.mubr.bf16.mxu0 %v1144
        %2232 = vmatmul.mubr.bf16.gmra.mrb[0].mxu0 %v1143
        %v2233 = vpop.f32.mrb[0].mxu0
        %v2234 = vadd.f32 %v2121, %v2233
        %v2235 = vpop.f32.mrb[0].mxu0
        %v2236 = vadd.f32 %v2123, %v2235
        %v2237 = vpop.f32.mrb[0].mxu0
        %v2238 = vadd.f32 %v2125, %v2237
        %v2239 = vpop.f32.mrb[0].mxu0
        %v2240 = vadd.f32 %v2127, %v2239
        %2241 = vmatprep.mubr.bf16.mxu0 %v1152
        %2242 = vmatmul.mubr.bf16.gmra.mrb[0].mxu0 %v1151
        %v2243 = vpop.f32.mrb[0].mxu0
        %v2244 = vadd.f32 %v2131, %v2243
        %v2245 = vpop.f32.mrb[0].mxu0
        %v2246 = vadd.f32 %v2133, %v2245
        %v2247 = vpop.f32.mrb[0].mxu0
        %v2248 = vadd.f32 %v2135, %v2247
        %v2249 = vpop.f32.mrb[0].mxu0
        %v2250 = vadd.f32 %v2137, %v2249
        %2251 = vmatprep.mubr.bf16.mxu0 %v1160
        %2252 = vmatmul.mubr.bf16.gmra.mrb[0].mxu0 %v1159
        %v2253 = vpop.f32.mrb[0].mxu0
        %v2254 = vadd.f32 %v2141, %v2253
        %v2255 = vpop.f32.mrb[0].mxu0
        %v2256 = vadd.f32 %v2143, %v2255
        %v2257 = vpop.f32.mrb[0].mxu0
        %v2258 = vadd.f32 %v2145, %v2257
        %v2259 = vpop.f32.mrb[0].mxu0
        %v2260 = vadd.f32 %v2147, %v2259
        %2261 = vmatprep.mubr.bf16.mxu0 %v1168
        %2262 = vmatmul.mubr.bf16.gmra.mrb[0].mxu0 %v1167
        %v2263 = vpop.f32.mrb[0].mxu0
        %v2264 = vadd.f32 %v2151, %v2263
        %v2265 = vpop.f32.mrb[0].mxu0
        %v2266 = vadd.f32 %v2153, %v2265
        %v2267 = vpop.f32.mrb[0].mxu0
        %v2268 = vadd.f32 %v2155, %v2267
        %v2269 = vpop.f32.mrb[0].mxu0
        %v2270 = vadd.f32 %v2157, %v2269
        %2271 = vmatprep.mubr.bf16.mxu0 %v1176
        %2272 = vmatmul.mubr.bf16.gmra.mrb[0].mxu0 %v1175
        %v2273 = vpop.f32.mrb[0].mxu0
        %v2274 = vadd.f32 %v2161, %v2273
        %v2275 = vpop.f32.mrb[0].mxu0
        %v2276 = vadd.f32 %v2163, %v2275
        %v2277 = vpop.f32.mrb[0].mxu0
        %v2278 = vadd.f32 %v2165, %v2277
        %v2279 = vpop.f32.mrb[0].mxu0
        %v2280 = vadd.f32 %v2167, %v2279
        %2281 = vmatprep.mubr.bf16.mxu0 %v1184
        %2282 = vmatmul.mubr.bf16.gmra.mrb[0].mxu0 %v1183
        %v2283 = vpop.f32.mrb[0].mxu0
        %v2284 = vadd.f32 %v2171, %v2283
        %v2285 = vpop.f32.mrb[0].mxu0
        %v2286 = vadd.f32 %v2173, %v2285
        %v2287 = vpop.f32.mrb[0].mxu0
        %v2288 = vadd.f32 %v2175, %v2287
        %v2289 = vpop.f32.mrb[0].mxu0
        %v2290 = vadd.f32 %v2177, %v2289
        %2291 = vmatprep.mubr.bf16.mxu0 %v1192
        %2292 = vmatmul.mubr.bf16.gmra.mrb[0].mxu0 %v1191
        %v2293 = vpop.f32.mrb[0].mxu0
        %v2294 = vadd.f32 %v2181, %v2293
        %v2295 = vpop.f32.mrb[0].mxu0
        %v2296 = vadd.f32 %v2183, %v2295
        %v2297 = vpop.f32.mrb[0].mxu0
        %v2298 = vadd.f32 %v2185, %v2297
        %v2299 = vpop.f32.mrb[0].mxu0
        %v2300 = vadd.f32 %v2187, %v2299
        %2301 = vdwg.mxu0
        %2302 = vmatprep.subr.bf16.mxu0 %v1804
        %2303 = vmatpush1.bf16.msra.mxu0 %v1803
        %2304 = vmatprep.subr.bf16.mxu0 %v1806
        %2305 = vmatpush1.bf16.msra.mxu0 %v1805
        %2306 = vmatprep.subr.bf16.mxu0 %v1808
        %2307 = vmatpush1.bf16.msra.mxu0 %v1807
        %2308 = vmatprep.subr.bf16.mxu0 %v1810
        %2309 = vmatpush1.bf16.msra.mxu0 %v1809
        %2310 = vmatprep.subr.bf16.mxu0 %v1812
        %2311 = vmatpush1.bf16.msra.mxu0 %v1811
        %2312 = vmatprep.subr.bf16.mxu0 %v1814
        %2313 = vmatpush1.bf16.msra.mxu0 %v1813
        %2314 = vmatprep.subr.bf16.mxu0 %v1816
        %2315 = vmatpush1.bf16.msra.mxu0 %v1815
        %2316 = vmatprep.subr.bf16.mxu0 %v1818
        %2317 = vmatpush1.bf16.msra.mxu0 %v1817
        %2318 = vmatprep.subr.bf16.mxu0 %v1820
        %2319 = vmatpush1.bf16.msra.mxu0 %v1819
        %2320 = vmatprep.subr.bf16.mxu0 %v1822
        %2321 = vmatpush1.bf16.msra.mxu0 %v1821
        %2322 = vmatprep.subr.bf16.mxu0 %v1824
        %2323 = vmatpush1.bf16.msra.mxu0 %v1823
        %2324 = vmatprep.subr.bf16.mxu0 %v1826
        %2325 = vmatpush1.bf16.msra.mxu0 %v1825
        %2326 = vmatprep.subr.bf16.mxu0 %v1828
        %2327 = vmatpush1.bf16.msra.mxu0 %v1827
        %2328 = vmatprep.subr.bf16.mxu0 %v1830
        %2329 = vmatpush1.bf16.msra.mxu0 %v1829
        %2330 = vmatprep.subr.bf16.mxu0 %v1832
        %2331 = vmatpush1.bf16.msra.mxu0 %v1831
        %2332 = vmatprep.subr.bf16.mxu0 %v1834
        %2333 = vmatpush1.bf16.msra.mxu0 %v1833
        %2334 = vmatprep.mubr.bf16.mxu0 %v1138
        %2335 = vmatmul.mubr.bf16.gmra.mrb[0].mxu0 %v1137
        %v2336 = vpop.f32.mrb[0].mxu0
        %v2337 = vadd.f32 %v2224, %v2336
        %v2338 = vpop.f32.mrb[0].mxu0
        %v2339 = vadd.f32 %v2226, %v2338
        %v2340 = vpop.f32.mrb[0].mxu0
        %v2341 = vadd.f32 %v2228, %v2340
        %v2342 = vpop.f32.mrb[0].mxu0
        %v2343 = vadd.f32 %v2230, %v2342
        %2344 = vmatprep.mubr.bf16.mxu0 %v1146
        %2345 = vmatmul.mubr.bf16.gmra.mrb[0].mxu0 %v1145
        %v2346 = vpop.f32.mrb[0].mxu0
        %v2347 = vadd.f32 %v2234, %v2346
        %v2348 = vpop.f32.mrb[0].mxu0
        %v2349 = vadd.f32 %v2236, %v2348
        %v2350 = vpop.f32.mrb[0].mxu0
        %v2351 = vadd.f32 %v2238, %v2350
        %v2352 = vpop.f32.mrb[0].mxu0
        %v2353 = vadd.f32 %v2240, %v2352
        %2354 = vmatprep.mubr.bf16.mxu0 %v1154
        %2355 = vmatmul.mubr.bf16.gmra.mrb[0].mxu0 %v1153
        %v2356 = vpop.f32.mrb[0].mxu0
        %v2357 = vadd.f32 %v2244, %v2356
        %v2358 = vpop.f32.mrb[0].mxu0
        %v2359 = vadd.f32 %v2246, %v2358
        %v2360 = vpop.f32.mrb[0].mxu0
        %v2361 = vadd.f32 %v2248, %v2360
        %v2362 = vpop.f32.mrb[0].mxu0
        %v2363 = vadd.f32 %v2250, %v2362
        %2364 = vmatprep.mubr.bf16.mxu0 %v1162
        %2365 = vmatmul.mubr.bf16.gmra.mrb[0].mxu0 %v1161
        %v2366 = vpop.f32.mrb[0].mxu0
        %v2367 = vadd.f32 %v2254, %v2366
        %v2368 = vpop.f32.mrb[0].mxu0
        %v2369 = vadd.f32 %v2256, %v2368
        %v2370 = vpop.f32.mrb[0].mxu0
        %v2371 = vadd.f32 %v2258, %v2370
        %v2372 = vpop.f32.mrb[0].mxu0
        %v2373 = vadd.f32 %v2260, %v2372
        %2374 = vmatprep.mubr.bf16.mxu0 %v1170
        %2375 = vmatmul.mubr.bf16.gmra.mrb[0].mxu0 %v1169
        %v2376 = vpop.f32.mrb[0].mxu0
        %v2377 = vadd.f32 %v2264, %v2376
        %v2378 = vpop.f32.mrb[0].mxu0
        %v2379 = vadd.f32 %v2266, %v2378
        %v2380 = vpop.f32.mrb[0].mxu0
        %v2381 = vadd.f32 %v2268, %v2380
        %v2382 = vpop.f32.mrb[0].mxu0
        %v2383 = vadd.f32 %v2270, %v2382
        %2384 = vmatprep.mubr.bf16.mxu0 %v1178
        %2385 = vmatmul.mubr.bf16.gmra.mrb[0].mxu0 %v1177
        %v2386 = vpop.f32.mrb[0].mxu0
        %v2387 = vadd.f32 %v2274, %v2386
        %v2388 = vpop.f32.mrb[0].mxu0
        %v2389 = vadd.f32 %v2276, %v2388
        %v2390 = vpop.f32.mrb[0].mxu0
        %v2391 = vadd.f32 %v2278, %v2390
        %v2392 = vpop.f32.mrb[0].mxu0
        %v2393 = vadd.f32 %v2280, %v2392
        %2394 = vmatprep.mubr.bf16.mxu0 %v1186
        %2395 = vmatmul.mubr.bf16.gmra.mrb[0].mxu0 %v1185
        %v2396 = vpop.f32.mrb[0].mxu0
        %v2397 = vadd.f32 %v2284, %v2396
        %v2398 = vpop.f32.mrb[0].mxu0
        %v2399 = vadd.f32 %v2286, %v2398
        %v2400 = vpop.f32.mrb[0].mxu0
        %v2401 = vadd.f32 %v2288, %v2400
        %v2402 = vpop.f32.mrb[0].mxu0
        %v2403 = vadd.f32 %v2290, %v2402
        %2404 = vmatprep.mubr.bf16.mxu0 %v1194
        %2405 = vmatmul.mubr.bf16.gmra.mrb[0].mxu0 %v1193
        %v2406 = vpop.f32.mrb[0].mxu0
        %v2407 = vadd.f32 %v2294, %v2406
        %v2408 = vpop.f32.mrb[0].mxu0
        %v2409 = vadd.f32 %v2296, %v2408
        %v2410 = vpop.f32.mrb[0].mxu0
        %v2411 = vadd.f32 %v2298, %v2410
        %v2412 = vpop.f32.mrb[0].mxu0
        %v2413 = vadd.f32 %v2300, %v2412
        %2414 = vdwg.mxu0
        %v2415 = vpack.c.bf16 %v2341, %v2337
        %v2416 = vpack.c.bf16 %v2343, %v2339
        %v2417 = vpack.c.bf16 %v2351, %v2347
        %v2418 = vpack.c.bf16 %v2353, %v2349
        %v2419 = vpack.c.bf16 %v2361, %v2357
        %v2420 = vpack.c.bf16 %v2363, %v2359
        %v2421 = vpack.c.bf16 %v2371, %v2367
        %v2422 = vpack.c.bf16 %v2373, %v2369
        %v2423 = vpack.c.bf16 %v2381, %v2377
        %v2424 = vpack.c.bf16 %v2383, %v2379
        %v2425 = vpack.c.bf16 %v2391, %v2387
        %v2426 = vpack.c.bf16 %v2393, %v2389
        %v2427 = vpack.c.bf16 %v2401, %v2397
        %v2428 = vpack.c.bf16 %v2403, %v2399
        %v2429 = vpack.c.bf16 %v2411, %v2407
        %v2430 = vpack.c.bf16 %v2413, %v2409
        %2431 = vst [vmem:[#allocation2 + $0x80] sm:$0xff] %v2415
        %2432 = vst [vmem:[#allocation2 + $0x88] sm:$0xff] %v2416
        %2433 = vst [vmem:[#allocation2 + $0x90] sm:$0xff] %v2417
        %2434 = vst [vmem:[#allocation2 + $0x98] sm:$0xff] %v2418
        %2435 = vst [vmem:[#allocation2 + $0xa0] sm:$0xff] %v2419
        %2436 = vst [vmem:[#allocation2 + $0xa8] sm:$0xff] %v2420
        %2437 = vst [vmem:[#allocation2 + $0xb0] sm:$0xff] %v2421
        %2438 = vst [vmem:[#allocation2 + $0xb8] sm:$0xff] %v2422
        %2439 = vst [vmem:[#allocation2 + $0xc0] sm:$0xff] %v2423
        %2440 = vst [vmem:[#allocation2 + $0xc8] sm:$0xff] %v2424
        %2441 = vst [vmem:[#allocation2 + $0xd0] sm:$0xff] %v2425
        %2442 = vst [vmem:[#allocation2 + $0xd8] sm:$0xff] %v2426
        %2443 = vst [vmem:[#allocation2 + $0xe0] sm:$0xff] %v2427
        %2444 = vst [vmem:[#allocation2 + $0xe8] sm:$0xff] %v2428
        %2445 = vst [vmem:[#allocation2 + $0xf0] sm:$0xff] %v2429
        %2446 = vst [vmem:[#allocation2 + $0xf8] sm:$0xff] %v2430
        %v2447 = vld [vmem:[%s530] sm:$0xff]
        %v2448 = vld [vmem:[%s530 + $0x8] sm:$0xff]
        %v2449 = vld [vmem:[%s530 + $0x10] sm:$0xff]
        %v2450 = vld [vmem:[%s530 + $0x18] sm:$0xff]
        %v2451 = vld [vmem:[%s530 + $0x20] sm:$0xff]
        %v2452 = vld [vmem:[%s530 + $0x28] sm:$0xff]
        %v2453 = vld [vmem:[%s530 + $0x30] sm:$0xff]
        %v2454 = vld [vmem:[%s530 + $0x38] sm:$0xff]
        %v2455 = vld [vmem:[%s530 + $0x40] sm:$0xff]
        %v2456 = vld [vmem:[%s530 + $0x48] sm:$0xff]
        %v2457 = vld [vmem:[%s530 + $0x50] sm:$0xff]
        %v2458 = vld [vmem:[%s530 + $0x58] sm:$0xff]
        %v2459 = vld [vmem:[%s530 + $0x60] sm:$0xff]
        %v2460 = vld [vmem:[%s530 + $0x68] sm:$0xff]
        %v2461 = vld [vmem:[%s530 + $0x70] sm:$0xff]
        %v2462 = vld [vmem:[%s530 + $0x78] sm:$0xff]
        %v2463 = vld [vmem:[#allocation2] sm:$0xff]
        %v2464 = vld [vmem:[#allocation2 + $0x8] sm:$0xff]
        %v2465 = vld [vmem:[#allocation2 + $0x10] sm:$0xff]
        %v2466 = vld [vmem:[#allocation2 + $0x18] sm:$0xff]
        %v2467 = vld [vmem:[#allocation2 + $0x20] sm:$0xff]
        %v2468 = vld [vmem:[#allocation2 + $0x28] sm:$0xff]
        %v2469 = vld [vmem:[#allocation2 + $0x30] sm:$0xff]
        %v2470 = vld [vmem:[#allocation2 + $0x38] sm:$0xff]
        %v2471 = vld [vmem:[#allocation2 + $0x40] sm:$0xff]
        %v2472 = vld [vmem:[#allocation2 + $0x48] sm:$0xff]
        %v2473 = vld [vmem:[#allocation2 + $0x50] sm:$0xff]
        %v2474 = vld [vmem:[#allocation2 + $0x58] sm:$0xff]
        %v2475 = vld [vmem:[#allocation2 + $0x60] sm:$0xff]
        %v2476 = vld [vmem:[#allocation2 + $0x68] sm:$0xff]
        %v2477 = vld [vmem:[#allocation2 + $0x70] sm:$0xff]
        %v2478 = vld [vmem:[#allocation2 + $0x78] sm:$0xff]
        %v2479 = vld [vmem:[#allocation2 + $0x80] sm:$0xff]
        %v2480 = vld [vmem:[#allocation2 + $0x88] sm:$0xff]
        %v2481 = vld [vmem:[#allocation2 + $0x90] sm:$0xff]
        %v2482 = vld [vmem:[#allocation2 + $0x98] sm:$0xff]
        %v2483 = vld [vmem:[#allocation2 + $0xa0] sm:$0xff]
        %v2484 = vld [vmem:[#allocation2 + $0xa8] sm:$0xff]
        %v2485 = vld [vmem:[#allocation2 + $0xb0] sm:$0xff]
        %v2486 = vld [vmem:[#allocation2 + $0xb8] sm:$0xff]
        %v2487 = vld [vmem:[#allocation2 + $0xc0] sm:$0xff]
        %v2488 = vld [vmem:[#allocation2 + $0xc8] sm:$0xff]
        %v2489 = vld [vmem:[#allocation2 + $0xd0] sm:$0xff]
        %v2490 = vld [vmem:[#allocation2 + $0xd8] sm:$0xff]
        %v2491 = vld [vmem:[#allocation2 + $0xe0] sm:$0xff]
        %v2492 = vld [vmem:[#allocation2 + $0xe8] sm:$0xff]
        %v2493 = vld [vmem:[#allocation2 + $0xf0] sm:$0xff]
        %v2494 = vld [vmem:[#allocation2 + $0xf8] sm:$0xff]
        %v2495 = vld [vmem:[%s6] sm:$0xff]
        %v2496 = vld [vmem:[%s6 + $0x8] sm:$0xff]
        %v2497 = vld [vmem:[%s6 + $0x10] sm:$0xff]
        %v2498 = vld [vmem:[%s6 + $0x18] sm:$0xff]
        %v2499 = vld [vmem:[%s6 + $0x20] sm:$0xff]
        %v2500 = vld [vmem:[%s6 + $0x28] sm:$0xff]
        %v2501 = vld [vmem:[%s6 + $0x30] sm:$0xff]
        %v2502 = vld [vmem:[%s6 + $0x38] sm:$0xff]
        %v2503 = vld [vmem:[%s6 + $0x40] sm:$0xff]
        %v2504 = vld [vmem:[%s6 + $0x48] sm:$0xff]
        %v2505 = vld [vmem:[%s6 + $0x50] sm:$0xff]
        %v2506 = vld [vmem:[%s6 + $0x58] sm:$0xff]
        %v2507 = vld [vmem:[%s6 + $0x60] sm:$0xff]
        %v2508 = vld [vmem:[%s6 + $0x68] sm:$0xff]
        %v2509 = vld [vmem:[%s6 + $0x70] sm:$0xff]
        %v2510 = vld [vmem:[%s6 + $0x78] sm:$0xff]
        %2512 = vset.pattern.permute.xlu0 0
        %2513 = vperm.xlu0 %2512, %v2495
        %v2514 = vpop.permute.xlu0 %2513
        %2517 = vset.pattern.permute.xlu0 0
        %2518 = vperm.xlu0 %2517, %v2496
        %v2519 = vpop.permute.xlu0 %2518
        %2522 = vset.pattern.permute.xlu0 0
        %2523 = vperm.xlu0 %2522, %v2497
        %v2524 = vpop.permute.xlu0 %2523
        %2527 = vset.pattern.permute.xlu0 0
        %2528 = vperm.xlu0 %2527, %v2498
        %v2529 = vpop.permute.xlu0 %2528
        %2532 = vset.pattern.permute.xlu0 0
        %2533 = vperm.xlu0 %2532, %v2499
        %v2534 = vpop.permute.xlu0 %2533
        %2537 = vset.pattern.permute.xlu0 0
        %2538 = vperm.xlu0 %2537, %v2500
        %v2539 = vpop.permute.xlu0 %2538
        %2542 = vset.pattern.permute.xlu0 0
        %2543 = vperm.xlu0 %2542, %v2501
        %v2544 = vpop.permute.xlu0 %2543
        %2547 = vset.pattern.permute.xlu0 0
        %2548 = vperm.xlu0 %2547, %v2502
        %v2549 = vpop.permute.xlu0 %2548
        %2552 = vset.pattern.permute.xlu0 0
        %2553 = vperm.xlu0 %2552, %v2503
        %v2554 = vpop.permute.xlu0 %2553
        %2557 = vset.pattern.permute.xlu0 0
        %2558 = vperm.xlu0 %2557, %v2504
        %v2559 = vpop.permute.xlu0 %2558
        %2562 = vset.pattern.permute.xlu0 0
        %2563 = vperm.xlu0 %2562, %v2505
        %v2564 = vpop.permute.xlu0 %2563
        %2567 = vset.pattern.permute.xlu0 0
        %2568 = vperm.xlu0 %2567, %v2506
        %v2569 = vpop.permute.xlu0 %2568
        %2572 = vset.pattern.permute.xlu0 0
        %2573 = vperm.xlu0 %2572, %v2507
        %v2574 = vpop.permute.xlu0 %2573
        %2577 = vset.pattern.permute.xlu0 0
        %2578 = vperm.xlu0 %2577, %v2508
        %v2579 = vpop.permute.xlu0 %2578
        %2582 = vset.pattern.permute.xlu0 0
        %2583 = vperm.xlu0 %2582, %v2509
        %v2584 = vpop.permute.xlu0 %2583
        %2587 = vset.pattern.permute.xlu0 0
        %2588 = vperm.xlu0 %2587, %v2510
        %v2589 = vpop.permute.xlu0 %2588
        %v2607 = vunpack.c.l.b16 %v2447
        %v2608 = vunpack.c.h.b16 %v2447
        %v2609 = vunpack.c.l.b16 %v2448
        %v2610 = vunpack.c.h.b16 %v2448
        %v2611 = vunpack.c.l.b16 %v2449
        %v2612 = vunpack.c.h.b16 %v2449
        %v2613 = vunpack.c.l.b16 %v2450
        %v2614 = vunpack.c.h.b16 %v2450
        %v2615 = vunpack.c.l.b16 %v2451
        %v2616 = vunpack.c.h.b16 %v2451
        %v2617 = vunpack.c.l.b16 %v2452
        %v2618 = vunpack.c.h.b16 %v2452
        %v2619 = vunpack.c.l.b16 %v2453
        %v2620 = vunpack.c.h.b16 %v2453
        %v2621 = vunpack.c.l.b16 %v2454
        %v2622 = vunpack.c.h.b16 %v2454
        %v2623 = vunpack.c.l.b16 %v2455
        %v2624 = vunpack.c.h.b16 %v2455
        %v2625 = vunpack.c.l.b16 %v2456
        %v2626 = vunpack.c.h.b16 %v2456
        %v2627 = vunpack.c.l.b16 %v2457
        %v2628 = vunpack.c.h.b16 %v2457
        %v2629 = vunpack.c.l.b16 %v2458
        %v2630 = vunpack.c.h.b16 %v2458
        %v2631 = vunpack.c.l.b16 %v2459
        %v2632 = vunpack.c.h.b16 %v2459
        %v2633 = vunpack.c.l.b16 %v2460
        %v2634 = vunpack.c.h.b16 %v2460
        %v2635 = vunpack.c.l.b16 %v2461
        %v2636 = vunpack.c.h.b16 %v2461
        %v2637 = vunpack.c.l.b16 %v2462
        %v2638 = vunpack.c.h.b16 %v2462
        %v2639 = vpack.c.b16 %v2609, %v2607
        %v2640 = vpack.c.b16 %v2610, %v2608
        %v2641 = vpack.c.b16 %v2613, %v2611
        %v2642 = vpack.c.b16 %v2614, %v2612
        %v2643 = vpack.c.b16 %v2617, %v2615
        %v2644 = vpack.c.b16 %v2618, %v2616
        %v2645 = vpack.c.b16 %v2621, %v2619
        %v2646 = vpack.c.b16 %v2622, %v2620
        %v2647 = vpack.c.b16 %v2625, %v2623
        %v2648 = vpack.c.b16 %v2626, %v2624
        %v2649 = vpack.c.b16 %v2629, %v2627
        %v2650 = vpack.c.b16 %v2630, %v2628
        %v2651 = vpack.c.b16 %v2633, %v2631
        %v2652 = vpack.c.b16 %v2634, %v2632
        %v2653 = vpack.c.b16 %v2637, %v2635
        %v2654 = vpack.c.b16 %v2638, %v2636
        %2671 = vmatprep.subr.bf16.mxu0 %v2464
        %2672 = vmatpush1.bf16.msra.mxu0 %v2463
        %2673 = vmatprep.subr.bf16.mxu0 %v2466
        %2674 = vmatpush1.bf16.msra.mxu0 %v2465
        %2675 = vmatprep.subr.bf16.mxu0 %v2468
        %2676 = vmatpush1.bf16.msra.mxu0 %v2467
        %2677 = vmatprep.subr.bf16.mxu0 %v2470
        %2678 = vmatpush1.bf16.msra.mxu0 %v2469
        %2679 = vmatprep.subr.bf16.mxu0 %v2472
        %2680 = vmatpush1.bf16.msra.mxu0 %v2471
        %2681 = vmatprep.subr.bf16.mxu0 %v2474
        %2682 = vmatpush1.bf16.msra.mxu0 %v2473
        %2683 = vmatprep.subr.bf16.mxu0 %v2476
        %2684 = vmatpush1.bf16.msra.mxu0 %v2475
        %2685 = vmatprep.subr.bf16.mxu0 %v2478
        %2686 = vmatpush1.bf16.msra.mxu0 %v2477
        %2687 = vmatprep.subr.bf16.mxu0 %v2480
        %2688 = vmatpush1.bf16.msra.mxu0 %v2479
        %2689 = vmatprep.subr.bf16.mxu0 %v2482
        %2690 = vmatpush1.bf16.msra.mxu0 %v2481
        %2691 = vmatprep.subr.bf16.mxu0 %v2484
        %2692 = vmatpush1.bf16.msra.mxu0 %v2483
        %2693 = vmatprep.subr.bf16.mxu0 %v2486
        %2694 = vmatpush1.bf16.msra.mxu0 %v2485
        %2695 = vmatprep.subr.bf16.mxu0 %v2488
        %2696 = vmatpush1.bf16.msra.mxu0 %v2487
        %2697 = vmatprep.subr.bf16.mxu0 %v2490
        %2698 = vmatpush1.bf16.msra.mxu0 %v2489
        %2699 = vmatprep.subr.bf16.mxu0 %v2492
        %2700 = vmatpush1.bf16.msra.mxu0 %v2491
        %2701 = vmatprep.subr.bf16.mxu0 %v2494
        %2702 = vmatpush1.bf16.msra.mxu0 %v2493
        %2703 = vmatprep.mubr.bf16.mxu0 %v2640
        %2704 = vmatmul.mubr.bf16.gmra.mrb[0].mxu0 %v2639
        %v2705 = vpop.f32.mrb[0].mxu0
        %v2706 = vadd.f32 %v2514, %v2705
        %v2707 = vpop.f32.mrb[0].mxu0
        %v2708 = vadd.f32 %v2514, %v2707
        %v2709 = vpop.f32.mrb[0].mxu0
        %v2710 = vadd.f32 %v2519, %v2709
        %v2711 = vpop.f32.mrb[0].mxu0
        %v2712 = vadd.f32 %v2519, %v2711
        %2713 = vmatprep.mubr.bf16.mxu0 %v2642
        %2714 = vmatmul.mubr.bf16.gmra.mrb[0].mxu0 %v2641
        %v2715 = vpop.f32.mrb[0].mxu0
        %v2716 = vadd.f32 %v2524, %v2715
        %v2717 = vpop.f32.mrb[0].mxu0
        %v2718 = vadd.f32 %v2524, %v2717
        %v2719 = vpop.f32.mrb[0].mxu0
        %v2720 = vadd.f32 %v2529, %v2719
        %v2721 = vpop.f32.mrb[0].mxu0
        %v2722 = vadd.f32 %v2529, %v2721
        %2723 = vmatprep.mubr.bf16.mxu0 %v2644
        %2724 = vmatmul.mubr.bf16.gmra.mrb[0].mxu0 %v2643
        %v2725 = vpop.f32.mrb[0].mxu0
        %v2726 = vadd.f32 %v2534, %v2725
        %v2727 = vpop.f32.mrb[0].mxu0
        %v2728 = vadd.f32 %v2534, %v2727
        %v2729 = vpop.f32.mrb[0].mxu0
        %v2730 = vadd.f32 %v2539, %v2729
        %v2731 = vpop.f32.mrb[0].mxu0
        %v2732 = vadd.f32 %v2539, %v2731
        %2733 = vmatprep.mubr.bf16.mxu0 %v2646
        %2734 = vmatmul.mubr.bf16.gmra.mrb[0].mxu0 %v2645
        %v2735 = vpop.f32.mrb[0].mxu0
        %v2736 = vadd.f32 %v2544, %v2735
        %v2737 = vpop.f32.mrb[0].mxu0
        %v2738 = vadd.f32 %v2544, %v2737
        %v2739 = vpop.f32.mrb[0].mxu0
        %v2740 = vadd.f32 %v2549, %v2739
        %v2741 = vpop.f32.mrb[0].mxu0
        %v2742 = vadd.f32 %v2549, %v2741
        %2743 = vmatprep.mubr.bf16.mxu0 %v2648
        %2744 = vmatmul.mubr.bf16.gmra.mrb[0].mxu0 %v2647
        %v2745 = vpop.f32.mrb[0].mxu0
        %v2746 = vadd.f32 %v2554, %v2745
        %v2747 = vpop.f32.mrb[0].mxu0
        %v2748 = vadd.f32 %v2554, %v2747
        %v2749 = vpop.f32.mrb[0].mxu0
        %v2750 = vadd.f32 %v2559, %v2749
        %v2751 = vpop.f32.mrb[0].mxu0
        %v2752 = vadd.f32 %v2559, %v2751
        %2753 = vmatprep.mubr.bf16.mxu0 %v2650
        %2754 = vmatmul.mubr.bf16.gmra.mrb[0].mxu0 %v2649
        %v2755 = vpop.f32.mrb[0].mxu0
        %v2756 = vadd.f32 %v2564, %v2755
        %v2757 = vpop.f32.mrb[0].mxu0
        %v2758 = vadd.f32 %v2564, %v2757
        %v2759 = vpop.f32.mrb[0].mxu0
        %v2760 = vadd.f32 %v2569, %v2759
        %v2761 = vpop.f32.mrb[0].mxu0
        %v2762 = vadd.f32 %v2569, %v2761
        %2763 = vmatprep.mubr.bf16.mxu0 %v2652
        %2764 = vmatmul.mubr.bf16.gmra.mrb[0].mxu0 %v2651
        %v2765 = vpop.f32.mrb[0].mxu0
        %v2766 = vadd.f32 %v2574, %v2765
        %v2767 = vpop.f32.mrb[0].mxu0
        %v2768 = vadd.f32 %v2574, %v2767
        %v2769 = vpop.f32.mrb[0].mxu0
        %v2770 = vadd.f32 %v2579, %v2769
        %v2771 = vpop.f32.mrb[0].mxu0
        %v2772 = vadd.f32 %v2579, %v2771
        %2773 = vmatprep.mubr.bf16.mxu0 %v2654
        %2774 = vmatmul.mubr.bf16.gmra.mrb[0].mxu0 %v2653
        %v2775 = vpop.f32.mrb[0].mxu0
        %v2776 = vadd.f32 %v2584, %v2775
        %v2777 = vpop.f32.mrb[0].mxu0
        %v2778 = vadd.f32 %v2584, %v2777
        %v2779 = vpop.f32.mrb[0].mxu0
        %v2780 = vadd.f32 %v2589, %v2779
        %v2781 = vpop.f32.mrb[0].mxu0
        %v2782 = vadd.f32 %v2589, %v2781
        %2783 = vdwg.mxu0
        %v2784 = vmax.f32 %v2706, 0.0
        %v2785 = vmax.f32 %v2708, 0.0
        %v2786 = vmax.f32 %v2710, 0.0
        %v2787 = vmax.f32 %v2712, 0.0
        %v2788 = vmax.f32 %v2716, 0.0
        %v2789 = vmax.f32 %v2718, 0.0
        %v2790 = vmax.f32 %v2720, 0.0
        %v2791 = vmax.f32 %v2722, 0.0
        %v2792 = vmax.f32 %v2726, 0.0
        %v2793 = vmax.f32 %v2728, 0.0
        %v2794 = vmax.f32 %v2730, 0.0
        %v2795 = vmax.f32 %v2732, 0.0
        %v2796 = vmax.f32 %v2736, 0.0
        %v2797 = vmax.f32 %v2738, 0.0
        %v2798 = vmax.f32 %v2740, 0.0
        %v2799 = vmax.f32 %v2742, 0.0
        %v2800 = vmax.f32 %v2746, 0.0
        %v2801 = vmax.f32 %v2748, 0.0
        %v2802 = vmax.f32 %v2750, 0.0
        %v2803 = vmax.f32 %v2752, 0.0
        %v2804 = vmax.f32 %v2756, 0.0
        %v2805 = vmax.f32 %v2758, 0.0
        %v2806 = vmax.f32 %v2760, 0.0
        %v2807 = vmax.f32 %v2762, 0.0
        %v2808 = vmax.f32 %v2766, 0.0
        %v2809 = vmax.f32 %v2768, 0.0
        %v2810 = vmax.f32 %v2770, 0.0
        %v2811 = vmax.f32 %v2772, 0.0
        %v2812 = vmax.f32 %v2776, 0.0
        %v2813 = vmax.f32 %v2778, 0.0
        %v2814 = vmax.f32 %v2780, 0.0
        %v2815 = vmax.f32 %v2782, 0.0
        %v2816 = vld [vmem:[#allocation14] sm:$0xf]
        %v2817 = vld [vmem:[#allocation14 + $0x4] sm:$0xf]
        %v2818 = vld [vmem:[#allocation14 + $0x8] sm:$0xf]
        %v2819 = vld [vmem:[#allocation14 + $0xc] sm:$0xf]
        %v2820 = vld [vmem:[#allocation14 + $0x10] sm:$0xf]
        %v2821 = vld [vmem:[#allocation14 + $0x14] sm:$0xf]
        %v2822 = vpack.c.bf16 %v2786, %v2784
        %v2823 = vpack.c.bf16 %v2787, %v2785
        %v2824 = vpack.c.bf16 %v2790, %v2788
        %v2825 = vpack.c.bf16 %v2791, %v2789
        %v2826 = vpack.c.bf16 %v2794, %v2792
        %v2827 = vpack.c.bf16 %v2795, %v2793
        %v2828 = vpack.c.bf16 %v2798, %v2796
        %v2829 = vpack.c.bf16 %v2799, %v2797
        %v2830 = vpack.c.bf16 %v2802, %v2800
        %v2831 = vpack.c.bf16 %v2803, %v2801
        %v2832 = vpack.c.bf16 %v2806, %v2804
        %v2833 = vpack.c.bf16 %v2807, %v2805
        %v2834 = vpack.c.bf16 %v2810, %v2808
        %v2835 = vpack.c.bf16 %v2811, %v2809
        %v2836 = vpack.c.bf16 %v2814, %v2812
        %v2837 = vpack.c.bf16 %v2815, %v2813
        %v2838 = vld [vmem:[%s8] sm:$0xff]
        %v2839 = vld [vmem:[%s8 + $0x8] sm:$0xff]
        %v2840 = vld [vmem:[%s8 + $0x10] sm:$0xff]
        %v2841 = vld [vmem:[%s8 + $0x18] sm:$0xff]
        %v2842 = vld [vmem:[%s8 + $0x20] sm:$0xff]
        %v2843 = vld [vmem:[%s8 + $0x28] sm:$0xff]
        %2845 = vset.pattern.permute.xlu0 0
        %2846 = vperm.xlu0 %2845, %v2838
        %v2847 = vpop.permute.xlu0 %2846
        %2850 = vset.pattern.permute.xlu0 0
        %2851 = vperm.xlu0 %2850, %v2839
        %v2852 = vpop.permute.xlu0 %2851
        %2855 = vset.pattern.permute.xlu0 0
        %2856 = vperm.xlu0 %2855, %v2840
        %v2857 = vpop.permute.xlu0 %2856
        %2860 = vset.pattern.permute.xlu0 0
        %2861 = vperm.xlu0 %2860, %v2841
        %v2862 = vpop.permute.xlu0 %2861
        %2865 = vset.pattern.permute.xlu0 0
        %2866 = vperm.xlu0 %2865, %v2842
        %v2867 = vpop.permute.xlu0 %2866
        %2870 = vset.pattern.permute.xlu0 0
        %2871 = vperm.xlu0 %2870, %v2843
        %v2872 = vpop.permute.xlu0 %2871
        %v2880 = vunpack.c.l.b16 %v2816
        %v2881 = vunpack.c.l.b16 %v2817
        %v2882 = vunpack.c.l.b16 %v2818
        %v2883 = vunpack.c.l.b16 %v2819
        %v2884 = vunpack.c.l.b16 %v2820
        %v2885 = vunpack.c.l.b16 %v2821
        %v2886 = vpack.c.b16 %v2881, %v2880
        %v2887 = vpack.c.b16 %v2883, %v2882
        %v2888 = vpack.c.b16 %v2885, %v2884
        %2892 = vmatprep.subr.bf16.mxu0 %v2823
        %2893 = vmatpush1.bf16.msra.mxu0 %v2822
        %2894 = vmatprep.subr.bf16.mxu0 %v2825
        %2895 = vmatpush1.bf16.msra.mxu0 %v2824
        %2896 = vmatprep.subr.bf16.mxu0 %v2827
        %2897 = vmatpush1.bf16.msra.mxu0 %v2826
        %2898 = vmatprep.subr.bf16.mxu0 %v2829
        %2899 = vmatpush1.bf16.msra.mxu0 %v2828
        %2900 = vmatprep.subr.bf16.mxu0 %v2831
        %2901 = vmatpush1.bf16.msra.mxu0 %v2830
        %2902 = vmatprep.subr.bf16.mxu0 %v2833
        %2903 = vmatpush1.bf16.msra.mxu0 %v2832
        %2904 = vmatprep.subr.bf16.mxu0 %v2835
        %2905 = vmatpush1.bf16.msra.mxu0 %v2834
        %2906 = vmatprep.subr.bf16.mxu0 %v2837
        %2907 = vmatpush1.bf16.msra.mxu0 %v2836
        %2908 = vmatprep.subr.bf16.mxu0 0
        %2909 = vmatpush1.bf16.msra.mxu0 0
        %2910 = vmatprep.subr.bf16.mxu0 0
        %2911 = vmatpush1.bf16.msra.mxu0 0
        %2912 = vmatprep.subr.bf16.mxu0 0
        %2913 = vmatpush1.bf16.msra.mxu0 0
        %2914 = vmatprep.subr.bf16.mxu0 0
        %2915 = vmatpush1.bf16.msra.mxu0 0
        %2916 = vmatprep.subr.bf16.mxu0 0
        %2917 = vmatpush1.bf16.msra.mxu0 0
        %2918 = vmatprep.subr.bf16.mxu0 0
        %2919 = vmatpush1.bf16.msra.mxu0 0
        %2920 = vmatprep.subr.bf16.mxu0 0
        %2921 = vmatpush1.bf16.msra.mxu0 0
        %2922 = vmatprep.subr.bf16.mxu0 0
        %2923 = vmatpush1.bf16.msra.mxu0 0
        %2924 = vmatprep.mubr.bf16.mxu0 0
        %2925 = vmatmul.mubr.bf16.gmra.mrb[0].mxu0 %v2886
        %v2926 = vpop.f32.mrb[0].mxu0
        %v2927 = vadd.f32 %v2847, %v2926
        %v2928 = vpop.f32.mrb[0].mxu0
        %v2929 = vadd.f32 %v2847, %v2928
        %v2930 = vpop.f32.mrb[0].mxu0
        %v2931 = vadd.f32 %v2852, %v2930
        %v2932 = vpop.f32.mrb[0].mxu0
        %v2933 = vadd.f32 %v2852, %v2932
        %2934 = vmatprep.mubr.bf16.mxu0 0
        %2935 = vmatmul.mubr.bf16.gmra.mrb[0].mxu0 %v2887
        %v2936 = vpop.f32.mrb[0].mxu0
        %v2937 = vadd.f32 %v2857, %v2936
        %v2938 = vpop.f32.mrb[0].mxu0
        %v2939 = vadd.f32 %v2857, %v2938
        %v2940 = vpop.f32.mrb[0].mxu0
        %v2941 = vadd.f32 %v2862, %v2940
        %v2942 = vpop.f32.mrb[0].mxu0
        %v2943 = vadd.f32 %v2862, %v2942
        %2944 = vmatprep.mubr.bf16.mxu0 0
        %2945 = vmatmul.mubr.bf16.gmra.mrb[0].mxu0 %v2888
        %v2946 = vpop.f32.mrb[0].mxu0
        %v2947 = vadd.f32 %v2867, %v2946
        %v2948 = vpop.f32.mrb[0].mxu0
        %v2949 = vadd.f32 %v2867, %v2948
        %v2950 = vpop.f32.mrb[0].mxu0
        %v2951 = vadd.f32 %v2872, %v2950
        %v2952 = vpop.f32.mrb[0].mxu0
        %v2953 = vadd.f32 %v2872, %v2952
        %2954 = vdwg.mxu0
        %v2955 = vxor.u32 %v2927, 2147483648
        %v2956 = vxor.u32 %v2929, 2147483648
        %v2957 = vxor.u32 %v2931, 2147483648
        %v2958 = vxor.u32 %v2933, 2147483648
        %v2959 = vxor.u32 %v2937, 2147483648
        %v2960 = vxor.u32 %v2939, 2147483648
        %v2961 = vxor.u32 %v2941, 2147483648
        %v2962 = vxor.u32 %v2943, 2147483648
        %v2963 = vxor.u32 %v2947, 2147483648
        %v2964 = vxor.u32 %v2949, 2147483648
        %v2965 = vxor.u32 %v2951, 2147483648
        %v2966 = vxor.u32 %v2953, 2147483648
        %v2967 = vmul.f32 %v2955, 1.442695
        %v2968 = vpow.pop %v2967
        %v2969 = vmul.f32 %v2956, 1.442695
        %v2970 = vpow.pop %v2969
        %v2971 = vmul.f32 %v2957, 1.442695
        %v2972 = vpow.pop %v2971
        %v2973 = vmul.f32 %v2958, 1.442695
        %v2974 = vpow.pop %v2973
        %v2975 = vmul.f32 %v2959, 1.442695
        %v2976 = vpow.pop %v2975
        %v2977 = vmul.f32 %v2960, 1.442695
        %v2978 = vpow.pop %v2977
        %v2979 = vmul.f32 %v2961, 1.442695
        %v2980 = vpow.pop %v2979
        %v2981 = vmul.f32 %v2962, 1.442695
        %v2982 = vpow.pop %v2981
        %v2983 = vmul.f32 %v2963, 1.442695
        %v2984 = vpow.pop %v2983
        %v2985 = vmul.f32 %v2964, 1.442695
        %v2986 = vpow.pop %v2985
        %v2987 = vmul.f32 %v2965, 1.442695
        %v2988 = vpow.pop %v2987
        %v2989 = vmul.f32 %v2966, 1.442695
        %v2990 = vpow.pop %v2989
        %v2991 = vadd.f32 %v2968, 1.0
        %v2992 = vadd.f32 %v2970, 1.0
        %v2993 = vadd.f32 %v2972, 1.0
        %v2994 = vadd.f32 %v2974, 1.0
        %v2995 = vadd.f32 %v2976, 1.0
        %v2996 = vadd.f32 %v2978, 1.0
        %v2997 = vadd.f32 %v2980, 1.0
        %v2998 = vadd.f32 %v2982, 1.0
        %v2999 = vadd.f32 %v2984, 1.0
        %v3000 = vadd.f32 %v2986, 1.0
        %v3001 = vadd.f32 %v2988, 1.0
        %v3002 = vadd.f32 %v2990, 1.0
        %v3003 = vrcp.pop %v2991
        %v3004 = vmul.f32 1.0, %v3003
        %v3005 = vrcp.pop %v2992
        %v3006 = vmul.f32 1.0, %v3005
        %v3007 = vrcp.pop %v2993
        %v3008 = vmul.f32 1.0, %v3007
        %v3009 = vrcp.pop %v2994
        %v3010 = vmul.f32 1.0, %v3009
        %v3011 = vrcp.pop %v2995
        %v3012 = vmul.f32 1.0, %v3011
        %v3013 = vrcp.pop %v2996
        %v3014 = vmul.f32 1.0, %v3013
        %v3015 = vrcp.pop %v2997
        %v3016 = vmul.f32 1.0, %v3015
        %v3017 = vrcp.pop %v2998
        %v3018 = vmul.f32 1.0, %v3017
        %v3019 = vrcp.pop %v2999
        %v3020 = vmul.f32 1.0, %v3019
        %v3021 = vrcp.pop %v3000
        %v3022 = vmul.f32 1.0, %v3021
        %v3023 = vrcp.pop %v3001
        %v3024 = vmul.f32 1.0, %v3023
        %v3025 = vrcp.pop %v3002
        %v3026 = vmul.f32 1.0, %v3025
        %v3027 = vld [vmem:[%s616] sm:$0xf]
        %v3028 = vld [vmem:[%s616 + $0x4] sm:$0xf]
        %v3029 = vld [vmem:[%s616 + $0x8] sm:$0xf]
        %v3030 = vld [vmem:[%s616 + $0xc] sm:$0xf]
        %v3031 = vld [vmem:[%s616 + $0x10] sm:$0xf]
        %v3032 = vld [vmem:[%s616 + $0x14] sm:$0xf]
        %v3033 = vld [vmem:[%s616 + $0x18] sm:$0xf]
        %v3034 = vld [vmem:[%s616 + $0x1c] sm:$0xf]
        %v3035 = vld [vmem:[%s616 + $0x20] sm:$0xf]
        %v3036 = vld [vmem:[%s616 + $0x24] sm:$0xf]
        %v3037 = vld [vmem:[%s616 + $0x28] sm:$0xf]
        %v3038 = vld [vmem:[%s616 + $0x2c] sm:$0xf]
        %v3039 = vpack.c.bf16 %v3008, %v3004
        %v3040 = vpack.c.bf16 %v3010, %v3006
        %v3041 = vpack.c.bf16 %v3016, %v3012
        %v3042 = vpack.c.bf16 %v3018, %v3014
        %v3043 = vpack.c.bf16 %v3024, %v3020
        %v3044 = vpack.c.bf16 %v3026, %v3022
        %v3057 = vunpack.c.l.b16 %v3027
        %v3058 = vunpack.c.l.b16 %v3028
        %v3059 = vunpack.c.l.b16 %v3029
        %v3060 = vunpack.c.l.b16 %v3030
        %v3061 = vunpack.c.l.b16 %v3031
        %v3062 = vunpack.c.l.b16 %v3032
        %v3063 = vunpack.c.l.b16 %v3033
        %v3064 = vunpack.c.l.b16 %v3034
        %v3065 = vunpack.c.l.b16 %v3035
        %v3066 = vunpack.c.l.b16 %v3036
        %v3067 = vunpack.c.l.b16 %v3037
        %v3068 = vunpack.c.l.b16 %v3038
        %v3069 = vpack.c.b16 %v3058, %v3057
        %v3070 = vpack.c.b16 %v3060, %v3059
        %v3071 = vpack.c.b16 %v3062, %v3061
        %v3072 = vpack.c.b16 %v3064, %v3063
        %v3073 = vpack.c.b16 %v3066, %v3065
        %v3074 = vpack.c.b16 %v3068, %v3067
        %vm3075 = vcmask 392192
        %v3077 = vsel %vm3075, %v3069, 0
        %v3080 = vsel %vm3075, %v3070, 0
        %v3083 = vsel %vm3075, %v3071, 0
        %v3086 = vsel %vm3075, %v3072, 0
        %v3089 = vsel %vm3075, %v3073, 0
        %v3092 = vsel %vm3075, %v3074, 0
        %3094 = vmatprep.subr.bf16.mxu0 %v3040
        %3095 = vmatpush1.bf16.msra.mxu0 %v3039
        %3096 = vmatprep.subr.bf16.mxu0 %v3042
        %3097 = vmatpush1.bf16.msra.mxu0 %v3041
        %3098 = vmatprep.subr.bf16.mxu0 %v3044
        %3099 = vmatpush1.bf16.msra.mxu0 %v3043
        %3100 = vmatprep.subr.bf16.mxu0 0
        %3101 = vmatpush1.bf16.msra.mxu0 0
        %3102 = vmatprep.subr.bf16.mxu0 0
        %3103 = vmatpush1.bf16.msra.mxu0 0
        %3104 = vmatprep.subr.bf16.mxu0 0
        %3105 = vmatpush1.bf16.msra.mxu0 0
        %3106 = vmatprep.subr.bf16.mxu0 0
        %3107 = vmatpush1.bf16.msra.mxu0 0
        %3108 = vmatprep.subr.bf16.mxu0 0
        %3109 = vmatpush1.bf16.msra.mxu0 0
        %3110 = vmatprep.subr.bf16.mxu0 0
        %3111 = vmatpush1.bf16.msra.mxu0 0
        %3112 = vmatprep.subr.bf16.mxu0 0
        %3113 = vmatpush1.bf16.msra.mxu0 0
        %3114 = vmatprep.subr.bf16.mxu0 0
        %3115 = vmatpush1.bf16.msra.mxu0 0
        %3116 = vmatprep.subr.bf16.mxu0 0
        %3117 = vmatpush1.bf16.msra.mxu0 0
        %3118 = vmatprep.subr.bf16.mxu0 0
        %3119 = vmatpush1.bf16.msra.mxu0 0
        %3120 = vmatprep.subr.bf16.mxu0 0
        %3121 = vmatpush1.bf16.msra.mxu0 0
        %3122 = vmatprep.subr.bf16.mxu0 0
        %3123 = vmatpush1.bf16.msra.mxu0 0
        %3124 = vmatprep.subr.bf16.mxu0 0
        %3125 = vmatpush1.bf16.msra.mxu0 0
        %3126 = vmatprep.mubr.bf16.mxu0 0
        %3127 = vmatmul.mubr.bf16.gmra.mrb[0].mxu0 %v3077
        %v3128 = vpop.f32.mrb[0].mxu0
        %v3129 = vadd.f32 0.0, %v3128
        %v3130 = vpop.f32.mrb[0].mxu0
        %v3131 = vadd.f32 0.0, %v3130
        %v3132 = vpop.f32.mrb[0].mxu0
        %v3133 = vadd.f32 0.0, %v3132
        %v3134 = vpop.f32.mrb[0].mxu0
        %v3135 = vadd.f32 0.0, %v3134
        %3136 = vmatprep.mubr.bf16.mxu0 0
        %3137 = vmatmul.mubr.bf16.gmra.mrb[0].mxu0 %v3080
        %v3138 = vpop.f32.mrb[0].mxu0
        %v3139 = vadd.f32 0.0, %v3138
        %v3140 = vpop.f32.mrb[0].mxu0
        %v3141 = vadd.f32 0.0, %v3140
        %v3142 = vpop.f32.mrb[0].mxu0
        %v3143 = vadd.f32 0.0, %v3142
        %v3144 = vpop.f32.mrb[0].mxu0
        %v3145 = vadd.f32 0.0, %v3144
        %3146 = vmatprep.mubr.bf16.mxu0 0
        %3147 = vmatmul.mubr.bf16.gmra.mrb[0].mxu0 %v3083
        %v3148 = vpop.f32.mrb[0].mxu0
        %v3149 = vadd.f32 0.0, %v3148
        %v3150 = vpop.f32.mrb[0].mxu0
        %v3151 = vadd.f32 0.0, %v3150
        %v3152 = vpop.f32.mrb[0].mxu0
        %v3153 = vadd.f32 0.0, %v3152
        %v3154 = vpop.f32.mrb[0].mxu0
        %v3155 = vadd.f32 0.0, %v3154
        %3156 = vmatprep.mubr.bf16.mxu0 0
        %3157 = vmatmul.mubr.bf16.gmra.mrb[0].mxu0 %v3086
        %v3158 = vpop.f32.mrb[0].mxu0
        %v3159 = vadd.f32 0.0, %v3158
        %v3160 = vpop.f32.mrb[0].mxu0
        %v3161 = vadd.f32 0.0, %v3160
        %v3162 = vpop.f32.mrb[0].mxu0
        %v3163 = vadd.f32 0.0, %v3162
        %v3164 = vpop.f32.mrb[0].mxu0
        %v3165 = vadd.f32 0.0, %v3164
        %3166 = vmatprep.mubr.bf16.mxu0 0
        %3167 = vmatmul.mubr.bf16.gmra.mrb[0].mxu0 %v3089
        %v3168 = vpop.f32.mrb[0].mxu0
        %v3169 = vadd.f32 0.0, %v3168
        %v3170 = vpop.f32.mrb[0].mxu0
        %v3171 = vadd.f32 0.0, %v3170
        %v3172 = vpop.f32.mrb[0].mxu0
        %v3173 = vadd.f32 0.0, %v3172
        %v3174 = vpop.f32.mrb[0].mxu0
        %v3175 = vadd.f32 0.0, %v3174
        %3176 = vmatprep.mubr.bf16.mxu0 0
        %3177 = vmatmul.mubr.bf16.gmra.mrb[0].mxu0 %v3092
        %v3178 = vpop.f32.mrb[0].mxu0
        %v3179 = vadd.f32 0.0, %v3178
        %v3180 = vpop.f32.mrb[0].mxu0
        %v3181 = vadd.f32 0.0, %v3180
        %v3182 = vpop.f32.mrb[0].mxu0
        %v3183 = vadd.f32 0.0, %v3182
        %v3184 = vpop.f32.mrb[0].mxu0
        %v3185 = vadd.f32 0.0, %v3184
        %3186 = vdwg.mxu0
        %v3187 = vpack.c.bf16 %v3133, %v3129
        %v3188 = vpack.c.bf16 %v3135, %v3131
        %v3189 = vpack.c.bf16 %v3143, %v3139
        %v3190 = vpack.c.bf16 %v3145, %v3141
        %v3191 = vpack.c.bf16 %v3153, %v3149
        %v3192 = vpack.c.bf16 %v3155, %v3151
        %v3193 = vpack.c.bf16 %v3163, %v3159
        %v3194 = vpack.c.bf16 %v3165, %v3161
        %v3195 = vpack.c.bf16 %v3173, %v3169
        %v3196 = vpack.c.bf16 %v3175, %v3171
        %v3197 = vpack.c.bf16 %v3183, %v3179
        %v3198 = vpack.c.bf16 %v3185, %v3181
        %v3199 = vld [vmem:[%s543] sm:$0xff]
        %v3200 = vld [vmem:[%s543 + $0x8] sm:$0xff]
        %v3201 = vld [vmem:[%s543 + $0x10] sm:$0xff]
        %v3202 = vld [vmem:[%s543 + $0x18] sm:$0xff]
        %v3203 = vld [vmem:[%s543 + $0x20] sm:$0xff]
        %v3204 = vld [vmem:[%s543 + $0x28] sm:$0xff]
        %v3205 = vld [vmem:[%s543 + $0x30] sm:$0xff]
        %v3206 = vld [vmem:[%s543 + $0x38] sm:$0xff]
        %v3207 = vld [vmem:[%s543 + $0x40] sm:$0xff]
        %v3208 = vld [vmem:[%s543 + $0x48] sm:$0xff]
        %v3209 = vld [vmem:[%s543 + $0x50] sm:$0xff]
        %v3210 = vld [vmem:[%s543 + $0x58] sm:$0xff]
        %v3211 = vld [vmem:[%s543 + $0x60] sm:$0xff]
        %v3212 = vld [vmem:[%s543 + $0x68] sm:$0xff]
        %v3213 = vld [vmem:[%s543 + $0x70] sm:$0xff]
        %v3214 = vld [vmem:[%s543 + $0x78] sm:$0xff]
        %v3215 = vld [vmem:[%s543 + $0x80] sm:$0xff]
        %v3216 = vld [vmem:[%s543 + $0x88] sm:$0xff]
        %v3217 = vld [vmem:[%s543 + $0x90] sm:$0xff]
        %v3218 = vld [vmem:[%s543 + $0x98] sm:$0xff]
        %v3219 = vld [vmem:[%s543 + $0xa0] sm:$0xff]
        %v3220 = vld [vmem:[%s543 + $0xa8] sm:$0xff]
        %v3221 = vld [vmem:[%s543 + $0xb0] sm:$0xff]
        %v3222 = vld [vmem:[%s543 + $0xb8] sm:$0xff]
        %v3223 = vld [vmem:[%s543 + $0xc0] sm:$0xff]
        %v3224 = vld [vmem:[%s543 + $0xc8] sm:$0xff]
        %v3225 = vld [vmem:[%s543 + $0xd0] sm:$0xff]
        %v3226 = vld [vmem:[%s543 + $0xd8] sm:$0xff]
        %v3227 = vld [vmem:[%s543 + $0xe0] sm:$0xff]
        %v3228 = vld [vmem:[%s543 + $0xe8] sm:$0xff]
        %v3229 = vld [vmem:[%s543 + $0xf0] sm:$0xff]
        %v3230 = vld [vmem:[%s543 + $0xf8] sm:$0xff]
        %v3231 = vld [vmem:[%s543 + $0x100] sm:$0xff]
        %v3232 = vld [vmem:[%s543 + $0x108] sm:$0xff]
        %v3233 = vld [vmem:[%s543 + $0x110] sm:$0xff]
        %v3234 = vld [vmem:[%s543 + $0x118] sm:$0xff]
        %v3235 = vld [vmem:[%s543 + $0x120] sm:$0xff]
        %v3236 = vld [vmem:[%s543 + $0x128] sm:$0xff]
        %v3237 = vld [vmem:[%s543 + $0x130] sm:$0xff]
        %v3238 = vld [vmem:[%s543 + $0x138] sm:$0xff]
        %v3239 = vld [vmem:[%s543 + $0x140] sm:$0xff]
        %v3240 = vld [vmem:[%s543 + $0x148] sm:$0xff]
        %v3241 = vld [vmem:[%s543 + $0x150] sm:$0xff]
        %v3242 = vld [vmem:[%s543 + $0x158] sm:$0xff]
        %v3243 = vld [vmem:[%s543 + $0x160] sm:$0xff]
        %v3244 = vld [vmem:[%s543 + $0x168] sm:$0xff]
        %v3245 = vld [vmem:[%s543 + $0x170] sm:$0xff]
        %v3246 = vld [vmem:[%s543 + $0x178] sm:$0xff]
        %v3247 = vld [vmem:[%s543 + $0x180] sm:$0xff]
        %v3248 = vld [vmem:[%s543 + $0x188] sm:$0xff]
        %v3249 = vld [vmem:[%s543 + $0x190] sm:$0xff]
        %v3250 = vld [vmem:[%s543 + $0x198] sm:$0xff]
        %v3251 = vld [vmem:[%s543 + $0x1a0] sm:$0xff]
        %v3252 = vld [vmem:[%s543 + $0x1a8] sm:$0xff]
        %v3253 = vld [vmem:[%s543 + $0x1b0] sm:$0xff]
        %v3254 = vld [vmem:[%s543 + $0x1b8] sm:$0xff]
        %v3255 = vld [vmem:[%s543 + $0x1c0] sm:$0xff]
        %v3256 = vld [vmem:[%s543 + $0x1c8] sm:$0xff]
        %v3257 = vld [vmem:[%s543 + $0x1d0] sm:$0xff]
        %v3258 = vld [vmem:[%s543 + $0x1d8] sm:$0xff]
        %v3259 = vld [vmem:[%s543 + $0x1e0] sm:$0xff]
        %v3260 = vld [vmem:[%s543 + $0x1e8] sm:$0xff]
        %v3261 = vld [vmem:[%s543 + $0x1f0] sm:$0xff]
        %v3262 = vld [vmem:[%s543 + $0x1f8] sm:$0xff]
        %v3263 = vld [vmem:[%s543 + $0x200] sm:$0xff]
        %v3264 = vld [vmem:[%s543 + $0x208] sm:$0xff]
        %v3265 = vld [vmem:[%s543 + $0x210] sm:$0xff]
        %v3266 = vld [vmem:[%s543 + $0x218] sm:$0xff]
        %v3267 = vld [vmem:[%s543 + $0x220] sm:$0xff]
        %v3268 = vld [vmem:[%s543 + $0x228] sm:$0xff]
        %v3269 = vld [vmem:[%s543 + $0x230] sm:$0xff]
        %v3270 = vld [vmem:[%s543 + $0x238] sm:$0xff]
        %v3271 = vld [vmem:[%s543 + $0x240] sm:$0xff]
        %v3272 = vld [vmem:[%s543 + $0x248] sm:$0xff]
        %v3273 = vld [vmem:[%s543 + $0x250] sm:$0xff]
        %v3274 = vld [vmem:[%s543 + $0x258] sm:$0xff]
        %v3275 = vld [vmem:[%s543 + $0x260] sm:$0xff]
        %v3276 = vld [vmem:[%s543 + $0x268] sm:$0xff]
        %v3277 = vld [vmem:[%s543 + $0x270] sm:$0xff]
        %v3278 = vld [vmem:[%s543 + $0x278] sm:$0xff]
        %v3279 = vld [vmem:[%s543 + $0x280] sm:$0xff]
        %v3280 = vld [vmem:[%s543 + $0x288] sm:$0xff]
        %v3281 = vld [vmem:[%s543 + $0x290] sm:$0xff]
        %v3282 = vld [vmem:[%s543 + $0x298] sm:$0xff]
        %v3283 = vld [vmem:[%s543 + $0x2a0] sm:$0xff]
        %v3284 = vld [vmem:[%s543 + $0x2a8] sm:$0xff]
        %v3285 = vld [vmem:[%s543 + $0x2b0] sm:$0xff]
        %v3286 = vld [vmem:[%s543 + $0x2b8] sm:$0xff]
        %v3287 = vld [vmem:[%s543 + $0x2c0] sm:$0xff]
        %v3288 = vld [vmem:[%s543 + $0x2c8] sm:$0xff]
        %v3289 = vld [vmem:[%s543 + $0x2d0] sm:$0xff]
        %v3290 = vld [vmem:[%s543 + $0x2d8] sm:$0xff]
        %v3291 = vld [vmem:[%s543 + $0x2e0] sm:$0xff]
        %v3292 = vld [vmem:[%s543 + $0x2e8] sm:$0xff]
        %v3293 = vld [vmem:[%s543 + $0x2f0] sm:$0xff]
        %v3294 = vld [vmem:[%s543 + $0x2f8] sm:$0xff]
        %v3295 = vld [vmem:[%s543 + $0x300] sm:$0xff]
        %v3296 = vld [vmem:[%s543 + $0x308] sm:$0xff]
        %v3297 = vld [vmem:[%s543 + $0x310] sm:$0xff]
        %v3298 = vld [vmem:[%s543 + $0x318] sm:$0xff]
        %v3299 = vld [vmem:[%s543 + $0x320] sm:$0xff]
        %v3300 = vld [vmem:[%s543 + $0x328] sm:$0xff]
        %v3301 = vld [vmem:[%s543 + $0x330] sm:$0xff]
        %v3302 = vld [vmem:[%s543 + $0x338] sm:$0xff]
        %v3303 = vld [vmem:[%s543 + $0x340] sm:$0xff]
        %v3304 = vld [vmem:[%s543 + $0x348] sm:$0xff]
        %v3305 = vld [vmem:[%s543 + $0x350] sm:$0xff]
        %v3306 = vld [vmem:[%s543 + $0x358] sm:$0xff]
        %v3307 = vld [vmem:[%s543 + $0x360] sm:$0xff]
        %v3308 = vld [vmem:[%s543 + $0x368] sm:$0xff]
        %v3309 = vld [vmem:[%s543 + $0x370] sm:$0xff]
        %v3310 = vld [vmem:[%s543 + $0x378] sm:$0xff]
        %v3311 = vld [vmem:[%s543 + $0x380] sm:$0xff]
        %v3312 = vld [vmem:[%s543 + $0x388] sm:$0xff]
        %v3313 = vld [vmem:[%s543 + $0x390] sm:$0xff]
        %v3314 = vld [vmem:[%s543 + $0x398] sm:$0xff]
        %v3315 = vld [vmem:[%s543 + $0x3a0] sm:$0xff]
        %v3316 = vld [vmem:[%s543 + $0x3a8] sm:$0xff]
        %v3317 = vld [vmem:[%s543 + $0x3b0] sm:$0xff]
        %v3318 = vld [vmem:[%s543 + $0x3b8] sm:$0xff]
        %v3319 = vld [vmem:[%s543 + $0x3c0] sm:$0xff]
        %v3320 = vld [vmem:[%s543 + $0x3c8] sm:$0xff]
        %v3321 = vld [vmem:[%s543 + $0x3d0] sm:$0xff]
        %v3322 = vld [vmem:[%s543 + $0x3d8] sm:$0xff]
        %v3323 = vld [vmem:[%s543 + $0x3e0] sm:$0xff]
        %v3324 = vld [vmem:[%s543 + $0x3e8] sm:$0xff]
        %v3325 = vld [vmem:[%s543 + $0x3f0] sm:$0xff]
        %v3326 = vld [vmem:[%s543 + $0x3f8] sm:$0xff]
        %v3455 = vunpack.c.l.b16 %v3199
        %v3456 = vunpack.c.h.b16 %v3199
        %v3457 = vunpack.c.l.b16 %v3200
        %v3458 = vunpack.c.h.b16 %v3200
        %v3459 = vunpack.c.l.b16 %v3201
        %v3460 = vunpack.c.h.b16 %v3201
        %v3461 = vunpack.c.l.b16 %v3202
        %v3462 = vunpack.c.h.b16 %v3202
        %v3463 = vunpack.c.l.b16 %v3203
        %v3464 = vunpack.c.h.b16 %v3203
        %v3465 = vunpack.c.l.b16 %v3204
        %v3466 = vunpack.c.h.b16 %v3204
        %v3467 = vunpack.c.l.b16 %v3205
        %v3468 = vunpack.c.h.b16 %v3205
        %v3469 = vunpack.c.l.b16 %v3206
        %v3470 = vunpack.c.h.b16 %v3206
        %v3471 = vunpack.c.l.b16 %v3207
        %v3472 = vunpack.c.h.b16 %v3207
        %v3473 = vunpack.c.l.b16 %v3208
        %v3474 = vunpack.c.h.b16 %v3208
        %v3475 = vunpack.c.l.b16 %v3209
        %v3476 = vunpack.c.h.b16 %v3209
        %v3477 = vunpack.c.l.b16 %v3210
        %v3478 = vunpack.c.h.b16 %v3210
        %v3479 = vunpack.c.l.b16 %v3211
        %v3480 = vunpack.c.h.b16 %v3211
        %v3481 = vunpack.c.l.b16 %v3212
        %v3482 = vunpack.c.h.b16 %v3212
        %v3483 = vunpack.c.l.b16 %v3213
        %v3484 = vunpack.c.h.b16 %v3213
        %v3485 = vunpack.c.l.b16 %v3214
        %v3486 = vunpack.c.h.b16 %v3214
        %v3487 = vunpack.c.l.b16 %v3215
        %v3488 = vunpack.c.h.b16 %v3215
        %v3489 = vunpack.c.l.b16 %v3216
        %v3490 = vunpack.c.h.b16 %v3216
        %v3491 = vunpack.c.l.b16 %v3217
        %v3492 = vunpack.c.h.b16 %v3217
        %v3493 = vunpack.c.l.b16 %v3218
        %v3494 = vunpack.c.h.b16 %v3218
        %v3495 = vunpack.c.l.b16 %v3219
        %v3496 = vunpack.c.h.b16 %v3219
        %v3497 = vunpack.c.l.b16 %v3220
        %v3498 = vunpack.c.h.b16 %v3220
        %v3499 = vunpack.c.l.b16 %v3221
        %v3500 = vunpack.c.h.b16 %v3221
        %v3501 = vunpack.c.l.b16 %v3222
        %v3502 = vunpack.c.h.b16 %v3222
        %v3503 = vunpack.c.l.b16 %v3223
        %v3504 = vunpack.c.h.b16 %v3223
        %v3505 = vunpack.c.l.b16 %v3224
        %v3506 = vunpack.c.h.b16 %v3224
        %v3507 = vunpack.c.l.b16 %v3225
        %v3508 = vunpack.c.h.b16 %v3225
        %v3509 = vunpack.c.l.b16 %v3226
        %v3510 = vunpack.c.h.b16 %v3226
        %v3511 = vunpack.c.l.b16 %v3227
        %v3512 = vunpack.c.h.b16 %v3227
        %v3513 = vunpack.c.l.b16 %v3228
        %v3514 = vunpack.c.h.b16 %v3228
        %v3515 = vunpack.c.l.b16 %v3229
        %v3516 = vunpack.c.h.b16 %v3229
        %v3517 = vunpack.c.l.b16 %v3230
        %v3518 = vunpack.c.h.b16 %v3230
        %v3519 = vunpack.c.l.b16 %v3231
        %v3520 = vunpack.c.h.b16 %v3231
        %v3521 = vunpack.c.l.b16 %v3232
        %v3522 = vunpack.c.h.b16 %v3232
        %v3523 = vunpack.c.l.b16 %v3233
        %v3524 = vunpack.c.h.b16 %v3233
        %v3525 = vunpack.c.l.b16 %v3234
        %v3526 = vunpack.c.h.b16 %v3234
        %v3527 = vunpack.c.l.b16 %v3235
        %v3528 = vunpack.c.h.b16 %v3235
        %v3529 = vunpack.c.l.b16 %v3236
        %v3530 = vunpack.c.h.b16 %v3236
        %v3531 = vunpack.c.l.b16 %v3237
        %v3532 = vunpack.c.h.b16 %v3237
        %v3533 = vunpack.c.l.b16 %v3238
        %v3534 = vunpack.c.h.b16 %v3238
        %v3535 = vunpack.c.l.b16 %v3239
        %v3536 = vunpack.c.h.b16 %v3239
        %v3537 = vunpack.c.l.b16 %v3240
        %v3538 = vunpack.c.h.b16 %v3240
        %v3539 = vunpack.c.l.b16 %v3241
        %v3540 = vunpack.c.h.b16 %v3241
        %v3541 = vunpack.c.l.b16 %v3242
        %v3542 = vunpack.c.h.b16 %v3242
        %v3543 = vunpack.c.l.b16 %v3243
        %v3544 = vunpack.c.h.b16 %v3243
        %v3545 = vunpack.c.l.b16 %v3244
        %v3546 = vunpack.c.h.b16 %v3244
        %v3547 = vunpack.c.l.b16 %v3245
        %v3548 = vunpack.c.h.b16 %v3245
        %v3549 = vunpack.c.l.b16 %v3246
        %v3550 = vunpack.c.h.b16 %v3246
        %v3551 = vunpack.c.l.b16 %v3247
        %v3552 = vunpack.c.h.b16 %v3247
        %v3553 = vunpack.c.l.b16 %v3248
        %v3554 = vunpack.c.h.b16 %v3248
        %v3555 = vunpack.c.l.b16 %v3249
        %v3556 = vunpack.c.h.b16 %v3249
        %v3557 = vunpack.c.l.b16 %v3250
        %v3558 = vunpack.c.h.b16 %v3250
        %v3559 = vunpack.c.l.b16 %v3251
        %v3560 = vunpack.c.h.b16 %v3251
        %v3561 = vunpack.c.l.b16 %v3252
        %v3562 = vunpack.c.h.b16 %v3252
        %v3563 = vunpack.c.l.b16 %v3253
        %v3564 = vunpack.c.h.b16 %v3253
        %v3565 = vunpack.c.l.b16 %v3254
        %v3566 = vunpack.c.h.b16 %v3254
        %v3567 = vunpack.c.l.b16 %v3255
        %v3568 = vunpack.c.h.b16 %v3255
        %v3569 = vunpack.c.l.b16 %v3256
        %v3570 = vunpack.c.h.b16 %v3256
        %v3571 = vunpack.c.l.b16 %v3257
        %v3572 = vunpack.c.h.b16 %v3257
        %v3573 = vunpack.c.l.b16 %v3258
        %v3574 = vunpack.c.h.b16 %v3258
        %v3575 = vunpack.c.l.b16 %v3259
        %v3576 = vunpack.c.h.b16 %v3259
        %v3577 = vunpack.c.l.b16 %v3260
        %v3578 = vunpack.c.h.b16 %v3260
        %v3579 = vunpack.c.l.b16 %v3261
        %v3580 = vunpack.c.h.b16 %v3261
        %v3581 = vunpack.c.l.b16 %v3262
        %v3582 = vunpack.c.h.b16 %v3262
        %v3583 = vunpack.c.l.b16 %v3263
        %v3584 = vunpack.c.h.b16 %v3263
        %v3585 = vunpack.c.l.b16 %v3264
        %v3586 = vunpack.c.h.b16 %v3264
        %v3587 = vunpack.c.l.b16 %v3265
        %v3588 = vunpack.c.h.b16 %v3265
        %v3589 = vunpack.c.l.b16 %v3266
        %v3590 = vunpack.c.h.b16 %v3266
        %v3591 = vunpack.c.l.b16 %v3267
        %v3592 = vunpack.c.h.b16 %v3267
        %v3593 = vunpack.c.l.b16 %v3268
        %v3594 = vunpack.c.h.b16 %v3268
        %v3595 = vunpack.c.l.b16 %v3269
        %v3596 = vunpack.c.h.b16 %v3269
        %v3597 = vunpack.c.l.b16 %v3270
        %v3598 = vunpack.c.h.b16 %v3270
        %v3599 = vunpack.c.l.b16 %v3271
        %v3600 = vunpack.c.h.b16 %v3271
        %v3601 = vunpack.c.l.b16 %v3272
        %v3602 = vunpack.c.h.b16 %v3272
        %v3603 = vunpack.c.l.b16 %v3273
        %v3604 = vunpack.c.h.b16 %v3273
        %v3605 = vunpack.c.l.b16 %v3274
        %v3606 = vunpack.c.h.b16 %v3274
        %v3607 = vunpack.c.l.b16 %v3275
        %v3608 = vunpack.c.h.b16 %v3275
        %v3609 = vunpack.c.l.b16 %v3276
        %v3610 = vunpack.c.h.b16 %v3276
        %v3611 = vunpack.c.l.b16 %v3277
        %v3612 = vunpack.c.h.b16 %v3277
        %v3613 = vunpack.c.l.b16 %v3278
        %v3614 = vunpack.c.h.b16 %v3278
        %v3615 = vunpack.c.l.b16 %v3279
        %v3616 = vunpack.c.h.b16 %v3279
        %v3617 = vunpack.c.l.b16 %v3280
        %v3618 = vunpack.c.h.b16 %v3280
        %v3619 = vunpack.c.l.b16 %v3281
        %v3620 = vunpack.c.h.b16 %v3281
        %v3621 = vunpack.c.l.b16 %v3282
        %v3622 = vunpack.c.h.b16 %v3282
        %v3623 = vunpack.c.l.b16 %v3283
        %v3624 = vunpack.c.h.b16 %v3283
        %v3625 = vunpack.c.l.b16 %v3284
        %v3626 = vunpack.c.h.b16 %v3284
        %v3627 = vunpack.c.l.b16 %v3285
        %v3628 = vunpack.c.h.b16 %v3285
        %v3629 = vunpack.c.l.b16 %v3286
        %v3630 = vunpack.c.h.b16 %v3286
        %v3631 = vunpack.c.l.b16 %v3287
        %v3632 = vunpack.c.h.b16 %v3287
        %v3633 = vunpack.c.l.b16 %v3288
        %v3634 = vunpack.c.h.b16 %v3288
        %v3635 = vunpack.c.l.b16 %v3289
        %v3636 = vunpack.c.h.b16 %v3289
        %v3637 = vunpack.c.l.b16 %v3290
        %v3638 = vunpack.c.h.b16 %v3290
        %v3639 = vunpack.c.l.b16 %v3291
        %v3640 = vunpack.c.h.b16 %v3291
        %v3641 = vunpack.c.l.b16 %v3292
        %v3642 = vunpack.c.h.b16 %v3292
        %v3643 = vunpack.c.l.b16 %v3293
        %v3644 = vunpack.c.h.b16 %v3293
        %v3645 = vunpack.c.l.b16 %v3294
        %v3646 = vunpack.c.h.b16 %v3294
        %v3647 = vunpack.c.l.b16 %v3295
        %v3648 = vunpack.c.h.b16 %v3295
        %v3649 = vunpack.c.l.b16 %v3296
        %v3650 = vunpack.c.h.b16 %v3296
        %v3651 = vunpack.c.l.b16 %v3297
        %v3652 = vunpack.c.h.b16 %v3297
        %v3653 = vunpack.c.l.b16 %v3298
        %v3654 = vunpack.c.h.b16 %v3298
        %v3655 = vunpack.c.l.b16 %v3299
        %v3656 = vunpack.c.h.b16 %v3299
        %v3657 = vunpack.c.l.b16 %v3300
        %v3658 = vunpack.c.h.b16 %v3300
        %v3659 = vunpack.c.l.b16 %v3301
        %v3660 = vunpack.c.h.b16 %v3301
        %v3661 = vunpack.c.l.b16 %v3302
        %v3662 = vunpack.c.h.b16 %v3302
        %v3663 = vunpack.c.l.b16 %v3303
        %v3664 = vunpack.c.h.b16 %v3303
        %v3665 = vunpack.c.l.b16 %v3304
        %v3666 = vunpack.c.h.b16 %v3304
        %v3667 = vunpack.c.l.b16 %v3305
        %v3668 = vunpack.c.h.b16 %v3305
        %v3669 = vunpack.c.l.b16 %v3306
        %v3670 = vunpack.c.h.b16 %v3306
        %v3671 = vunpack.c.l.b16 %v3307
        %v3672 = vunpack.c.h.b16 %v3307
        %v3673 = vunpack.c.l.b16 %v3308
        %v3674 = vunpack.c.h.b16 %v3308
        %v3675 = vunpack.c.l.b16 %v3309
        %v3676 = vunpack.c.h.b16 %v3309
        %v3677 = vunpack.c.l.b16 %v3310
        %v3678 = vunpack.c.h.b16 %v3310
        %v3679 = vunpack.c.l.b16 %v3311
        %v3680 = vunpack.c.h.b16 %v3311
        %v3681 = vunpack.c.l.b16 %v3312
        %v3682 = vunpack.c.h.b16 %v3312
        %v3683 = vunpack.c.l.b16 %v3313
        %v3684 = vunpack.c.h.b16 %v3313
        %v3685 = vunpack.c.l.b16 %v3314
        %v3686 = vunpack.c.h.b16 %v3314
        %v3687 = vunpack.c.l.b16 %v3315
        %v3688 = vunpack.c.h.b16 %v3315
        %v3689 = vunpack.c.l.b16 %v3316
        %v3690 = vunpack.c.h.b16 %v3316
        %v3691 = vunpack.c.l.b16 %v3317
        %v3692 = vunpack.c.h.b16 %v3317
        %v3693 = vunpack.c.l.b16 %v3318
        %v3694 = vunpack.c.h.b16 %v3318
        %v3695 = vunpack.c.l.b16 %v3319
        %v3696 = vunpack.c.h.b16 %v3319
        %v3697 = vunpack.c.l.b16 %v3320
        %v3698 = vunpack.c.h.b16 %v3320
        %v3699 = vunpack.c.l.b16 %v3321
        %v3700 = vunpack.c.h.b16 %v3321
        %v3701 = vunpack.c.l.b16 %v3322
        %v3702 = vunpack.c.h.b16 %v3322
        %v3703 = vunpack.c.l.b16 %v3323
        %v3704 = vunpack.c.h.b16 %v3323
        %v3705 = vunpack.c.l.b16 %v3324
        %v3706 = vunpack.c.h.b16 %v3324
        %v3707 = vunpack.c.l.b16 %v3325
        %v3708 = vunpack.c.h.b16 %v3325
        %v3709 = vunpack.c.l.b16 %v3326
        %v3710 = vunpack.c.h.b16 %v3326
        %v3711 = vpack.c.b16 %v3463, %v3455
        %v3712 = vpack.c.b16 %v3464, %v3456
        %v3713 = vpack.c.b16 %v3465, %v3457
        %v3714 = vpack.c.b16 %v3466, %v3458
        %v3715 = vpack.c.b16 %v3467, %v3459
        %v3716 = vpack.c.b16 %v3468, %v3460
        %v3717 = vpack.c.b16 %v3469, %v3461
        %v3718 = vpack.c.b16 %v3470, %v3462
        %v3719 = vpack.c.b16 %v3479, %v3471
        %v3720 = vpack.c.b16 %v3480, %v3472
        %v3721 = vpack.c.b16 %v3481, %v3473
        %v3722 = vpack.c.b16 %v3482, %v3474
        %v3723 = vpack.c.b16 %v3483, %v3475
        %v3724 = vpack.c.b16 %v3484, %v3476
        %v3725 = vpack.c.b16 %v3485, %v3477
        %v3726 = vpack.c.b16 %v3486, %v3478
        %v3727 = vpack.c.b16 %v3495, %v3487
        %v3728 = vpack.c.b16 %v3496, %v3488
        %v3729 = vpack.c.b16 %v3497, %v3489
        %v3730 = vpack.c.b16 %v3498, %v3490
        %v3731 = vpack.c.b16 %v3499, %v3491
        %v3732 = vpack.c.b16 %v3500, %v3492
        %v3733 = vpack.c.b16 %v3501, %v3493
        %v3734 = vpack.c.b16 %v3502, %v3494
        %v3735 = vpack.c.b16 %v3511, %v3503
        %v3736 = vpack.c.b16 %v3512, %v3504
        %v3737 = vpack.c.b16 %v3513, %v3505
        %v3738 = vpack.c.b16 %v3514, %v3506
        %v3739 = vpack.c.b16 %v3515, %v3507
        %v3740 = vpack.c.b16 %v3516, %v3508
        %v3741 = vpack.c.b16 %v3517, %v3509
        %v3742 = vpack.c.b16 %v3518, %v3510
        %v3743 = vpack.c.b16 %v3527, %v3519
        %v3744 = vpack.c.b16 %v3528, %v3520
        %v3745 = vpack.c.b16 %v3529, %v3521
        %v3746 = vpack.c.b16 %v3530, %v3522
        %v3747 = vpack.c.b16 %v3531, %v3523
        %v3748 = vpack.c.b16 %v3532, %v3524
        %v3749 = vpack.c.b16 %v3533, %v3525
        %v3750 = vpack.c.b16 %v3534, %v3526
        %v3751 = vpack.c.b16 %v3543, %v3535
        %v3752 = vpack.c.b16 %v3544, %v3536
        %v3753 = vpack.c.b16 %v3545, %v3537
        %v3754 = vpack.c.b16 %v3546, %v3538
        %v3755 = vpack.c.b16 %v3547, %v3539
        %v3756 = vpack.c.b16 %v3548, %v3540
        %v3757 = vpack.c.b16 %v3549, %v3541
        %v3758 = vpack.c.b16 %v3550, %v3542
        %v3759 = vpack.c.b16 %v3559, %v3551
        %v3760 = vpack.c.b16 %v3560, %v3552
        %v3761 = vpack.c.b16 %v3561, %v3553
        %v3762 = vpack.c.b16 %v3562, %v3554
        %v3763 = vpack.c.b16 %v3563, %v3555
        %v3764 = vpack.c.b16 %v3564, %v3556
        %v3765 = vpack.c.b16 %v3565, %v3557
        %v3766 = vpack.c.b16 %v3566, %v3558
        %v3767 = vpack.c.b16 %v3575, %v3567
        %v3768 = vpack.c.b16 %v3576, %v3568
        %v3769 = vpack.c.b16 %v3577, %v3569
        %v3770 = vpack.c.b16 %v3578, %v3570
        %v3771 = vpack.c.b16 %v3579, %v3571
        %v3772 = vpack.c.b16 %v3580, %v3572
        %v3773 = vpack.c.b16 %v3581, %v3573
        %v3774 = vpack.c.b16 %v3582, %v3574
        %v3775 = vpack.c.b16 %v3591, %v3583
        %v3776 = vpack.c.b16 %v3592, %v3584
        %v3777 = vpack.c.b16 %v3593, %v3585
        %v3778 = vpack.c.b16 %v3594, %v3586
        %v3779 = vpack.c.b16 %v3595, %v3587
        %v3780 = vpack.c.b16 %v3596, %v3588
        %v3781 = vpack.c.b16 %v3597, %v3589
        %v3782 = vpack.c.b16 %v3598, %v3590
        %v3783 = vpack.c.b16 %v3607, %v3599
        %v3784 = vpack.c.b16 %v3608, %v3600
        %v3785 = vpack.c.b16 %v3609, %v3601
        %v3786 = vpack.c.b16 %v3610, %v3602
        %v3787 = vpack.c.b16 %v3611, %v3603
        %v3788 = vpack.c.b16 %v3612, %v3604
        %v3789 = vpack.c.b16 %v3613, %v3605
        %v3790 = vpack.c.b16 %v3614, %v3606
        %v3791 = vpack.c.b16 %v3623, %v3615
        %v3792 = vpack.c.b16 %v3624, %v3616
        %v3793 = vpack.c.b16 %v3625, %v3617
        %v3794 = vpack.c.b16 %v3626, %v3618
        %v3795 = vpack.c.b16 %v3627, %v3619
        %v3796 = vpack.c.b16 %v3628, %v3620
        %v3797 = vpack.c.b16 %v3629, %v3621
        %v3798 = vpack.c.b16 %v3630, %v3622
        %v3799 = vpack.c.b16 %v3639, %v3631
        %v3800 = vpack.c.b16 %v3640, %v3632
        %v3801 = vpack.c.b16 %v3641, %v3633
        %v3802 = vpack.c.b16 %v3642, %v3634
        %v3803 = vpack.c.b16 %v3643, %v3635
        %v3804 = vpack.c.b16 %v3644, %v3636
        %v3805 = vpack.c.b16 %v3645, %v3637
        %v3806 = vpack.c.b16 %v3646, %v3638
        %v3807 = vpack.c.b16 %v3655, %v3647
        %v3808 = vpack.c.b16 %v3656, %v3648
        %v3809 = vpack.c.b16 %v3657, %v3649
        %v3810 = vpack.c.b16 %v3658, %v3650
        %v3811 = vpack.c.b16 %v3659, %v3651
        %v3812 = vpack.c.b16 %v3660, %v3652
        %v3813 = vpack.c.b16 %v3661, %v3653
        %v3814 = vpack.c.b16 %v3662, %v3654
        %v3815 = vpack.c.b16 %v3671, %v3663
        %v3816 = vpack.c.b16 %v3672, %v3664
        %v3817 = vpack.c.b16 %v3673, %v3665
        %v3818 = vpack.c.b16 %v3674, %v3666
        %v3819 = vpack.c.b16 %v3675, %v3667
        %v3820 = vpack.c.b16 %v3676, %v3668
        %v3821 = vpack.c.b16 %v3677, %v3669
        %v3822 = vpack.c.b16 %v3678, %v3670
        %v3823 = vpack.c.b16 %v3687, %v3679
        %v3824 = vpack.c.b16 %v3688, %v3680
        %v3825 = vpack.c.b16 %v3689, %v3681
        %v3826 = vpack.c.b16 %v3690, %v3682
        %v3827 = vpack.c.b16 %v3691, %v3683
        %v3828 = vpack.c.b16 %v3692, %v3684
        %v3829 = vpack.c.b16 %v3693, %v3685
        %v3830 = vpack.c.b16 %v3694, %v3686
        %v3831 = vpack.c.b16 %v3703, %v3695
        %v3832 = vpack.c.b16 %v3704, %v3696
        %v3833 = vpack.c.b16 %v3705, %v3697
        %v3834 = vpack.c.b16 %v3706, %v3698
        %v3835 = vpack.c.b16 %v3707, %v3699
        %v3836 = vpack.c.b16 %v3708, %v3700
        %v3837 = vpack.c.b16 %v3709, %v3701
        %v3838 = vpack.c.b16 %v3710, %v3702
        %3967 = vmatprep.subr.bf16.mxu0 %v3712
        %3968 = vmatpush1.bf16.msra.mxu0 %v3711
        %3969 = vmatprep.subr.bf16.mxu0 %v3720
        %3970 = vmatpush1.bf16.msra.mxu0 %v3719
        %3971 = vmatprep.subr.bf16.mxu0 %v3728
        %3972 = vmatpush1.bf16.msra.mxu0 %v3727
        %3973 = vmatprep.subr.bf16.mxu0 %v3736
        %3974 = vmatpush1.bf16.msra.mxu0 %v3735
        %3975 = vmatprep.subr.bf16.mxu0 %v3744
        %3976 = vmatpush1.bf16.msra.mxu0 %v3743
        %3977 = vmatprep.subr.bf16.mxu0 %v3752
        %3978 = vmatpush1.bf16.msra.mxu0 %v3751
        %3979 = vmatprep.subr.bf16.mxu0 %v3760
        %3980 = vmatpush1.bf16.msra.mxu0 %v3759
        %3981 = vmatprep.subr.bf16.mxu0 %v3768
        %3982 = vmatpush1.bf16.msra.mxu0 %v3767
        %3983 = vmatprep.subr.bf16.mxu0 %v3776
        %3984 = vmatpush1.bf16.msra.mxu0 %v3775
        %3985 = vmatprep.subr.bf16.mxu0 %v3784
        %3986 = vmatpush1.bf16.msra.mxu0 %v3783
        %3987 = vmatprep.subr.bf16.mxu0 %v3792
        %3988 = vmatpush1.bf16.msra.mxu0 %v3791
        %3989 = vmatprep.subr.bf16.mxu0 %v3800
        %3990 = vmatpush1.bf16.msra.mxu0 %v3799
        %3991 = vmatprep.subr.bf16.mxu0 %v3808
        %3992 = vmatpush1.bf16.msra.mxu0 %v3807
        %3993 = vmatprep.subr.bf16.mxu0 %v3816
        %3994 = vmatpush1.bf16.msra.mxu0 %v3815
        %3995 = vmatprep.subr.bf16.mxu0 %v3824
        %3996 = vmatpush1.bf16.msra.mxu0 %v3823
        %3997 = vmatprep.subr.bf16.mxu0 %v3832
        %3998 = vmatpush1.bf16.msra.mxu0 %v3831
        %3999 = vmatprep.mubr.bf16.mxu0 %v3188
        %4000 = vmatmul.mubr.bf16.gmra.mrb[0].mxu0 %v3187
        %v4001 = vpop.f32.mrb[0].mxu0
        %v4002 = vadd.f32 0.0, %v4001
        %v4003 = vpop.f32.mrb[0].mxu0
        %v4004 = vadd.f32 0.0, %v4003
        %v4005 = vpop.f32.mrb[0].mxu0
        %v4006 = vadd.f32 0.0, %v4005
        %v4007 = vpop.f32.mrb[0].mxu0
        %v4008 = vadd.f32 0.0, %v4007
        %4009 = vmatprep.mubr.bf16.mxu0 %v3190
        %4010 = vmatmul.mubr.bf16.gmra.mrb[0].mxu0 %v3189
        %v4011 = vpop.f32.mrb[0].mxu0
        %v4012 = vadd.f32 0.0, %v4011
        %v4013 = vpop.f32.mrb[0].mxu0
        %v4014 = vadd.f32 0.0, %v4013
        %v4015 = vpop.f32.mrb[0].mxu0
        %v4016 = vadd.f32 0.0, %v4015
        %v4017 = vpop.f32.mrb[0].mxu0
        %v4018 = vadd.f32 0.0, %v4017
        %4019 = vmatprep.mubr.bf16.mxu0 %v3192
        %4020 = vmatmul.mubr.bf16.gmra.mrb[0].mxu0 %v3191
        %v4021 = vpop.f32.mrb[0].mxu0
        %v4022 = vadd.f32 0.0, %v4021
        %v4023 = vpop.f32.mrb[0].mxu0
        %v4024 = vadd.f32 0.0, %v4023
        %v4025 = vpop.f32.mrb[0].mxu0
        %v4026 = vadd.f32 0.0, %v4025
        %v4027 = vpop.f32.mrb[0].mxu0
        %v4028 = vadd.f32 0.0, %v4027
        %4029 = vmatprep.mubr.bf16.mxu0 %v3194
        %4030 = vmatmul.mubr.bf16.gmra.mrb[0].mxu0 %v3193
        %v4031 = vpop.f32.mrb[0].mxu0
        %v4032 = vadd.f32 0.0, %v4031
        %v4033 = vpop.f32.mrb[0].mxu0
        %v4034 = vadd.f32 0.0, %v4033
        %v4035 = vpop.f32.mrb[0].mxu0
        %v4036 = vadd.f32 0.0, %v4035
        %v4037 = vpop.f32.mrb[0].mxu0
        %v4038 = vadd.f32 0.0, %v4037
        %4039 = vmatprep.mubr.bf16.mxu0 %v3196
        %4040 = vmatmul.mubr.bf16.gmra.mrb[0].mxu0 %v3195
        %v4041 = vpop.f32.mrb[0].mxu0
        %v4042 = vadd.f32 0.0, %v4041
        %v4043 = vpop.f32.mrb[0].mxu0
        %v4044 = vadd.f32 0.0, %v4043
        %v4045 = vpop.f32.mrb[0].mxu0
        %v4046 = vadd.f32 0.0, %v4045
        %v4047 = vpop.f32.mrb[0].mxu0
        %v4048 = vadd.f32 0.0, %v4047
        %4049 = vmatprep.mubr.bf16.mxu0 %v3198
        %4050 = vmatmul.mubr.bf16.gmra.mrb[0].mxu0 %v3197
        %v4051 = vpop.f32.mrb[0].mxu0
        %v4052 = vadd.f32 0.0, %v4051
        %v4053 = vpop.f32.mrb[0].mxu0
        %v4054 = vadd.f32 0.0, %v4053
        %v4055 = vpop.f32.mrb[0].mxu0
        %v4056 = vadd.f32 0.0, %v4055
        %v4057 = vpop.f32.mrb[0].mxu0
        %v4058 = vadd.f32 0.0, %v4057
        %4059 = vdwg.mxu0
        %4060 = vmatprep.subr.bf16.mxu0 %v3714
        %4061 = vmatpush1.bf16.msra.mxu0 %v3713
        %4062 = vmatprep.subr.bf16.mxu0 %v3722
        %4063 = vmatpush1.bf16.msra.mxu0 %v3721
        %4064 = vmatprep.subr.bf16.mxu0 %v3730
        %4065 = vmatpush1.bf16.msra.mxu0 %v3729
        %4066 = vmatprep.subr.bf16.mxu0 %v3738
        %4067 = vmatpush1.bf16.msra.mxu0 %v3737
        %4068 = vmatprep.subr.bf16.mxu0 %v3746
        %4069 = vmatpush1.bf16.msra.mxu0 %v3745
        %4070 = vmatprep.subr.bf16.mxu0 %v3754
        %4071 = vmatpush1.bf16.msra.mxu0 %v3753
        %4072 = vmatprep.subr.bf16.mxu0 %v3762
        %4073 = vmatpush1.bf16.msra.mxu0 %v3761
        %4074 = vmatprep.subr.bf16.mxu0 %v3770
        %4075 = vmatpush1.bf16.msra.mxu0 %v3769
        %4076 = vmatprep.subr.bf16.mxu0 %v3778
        %4077 = vmatpush1.bf16.msra.mxu0 %v3777
        %4078 = vmatprep.subr.bf16.mxu0 %v3786
        %4079 = vmatpush1.bf16.msra.mxu0 %v3785
        %4080 = vmatprep.subr.bf16.mxu0 %v3794
        %4081 = vmatpush1.bf16.msra.mxu0 %v3793
        %4082 = vmatprep.subr.bf16.mxu0 %v3802
        %4083 = vmatpush1.bf16.msra.mxu0 %v3801
        %4084 = vmatprep.subr.bf16.mxu0 %v3810
        %4085 = vmatpush1.bf16.msra.mxu0 %v3809
        %4086 = vmatprep.subr.bf16.mxu0 %v3818
        %4087 = vmatpush1.bf16.msra.mxu0 %v3817
        %4088 = vmatprep.subr.bf16.mxu0 %v3826
        %4089 = vmatpush1.bf16.msra.mxu0 %v3825
        %4090 = vmatprep.subr.bf16.mxu0 %v3834
        %4091 = vmatpush1.bf16.msra.mxu0 %v3833
        %4092 = vmatprep.mubr.bf16.mxu0 %v3188
        %4093 = vmatmul.mubr.bf16.gmra.mrb[0].mxu0 %v3187
        %v4094 = vpop.f32.mrb[0].mxu0
        %v4095 = vadd.f32 0.0, %v4094
        %v4096 = vpop.f32.mrb[0].mxu0
        %v4097 = vadd.f32 0.0, %v4096
        %v4098 = vpop.f32.mrb[0].mxu0
        %v4099 = vadd.f32 0.0, %v4098
        %v4100 = vpop.f32.mrb[0].mxu0
        %v4101 = vadd.f32 0.0, %v4100
        %4102 = vmatprep.mubr.bf16.mxu0 %v3190
        %4103 = vmatmul.mubr.bf16.gmra.mrb[0].mxu0 %v3189
        %v4104 = vpop.f32.mrb[0].mxu0
        %v4105 = vadd.f32 0.0, %v4104
        %v4106 = vpop.f32.mrb[0].mxu0
        %v4107 = vadd.f32 0.0, %v4106
        %v4108 = vpop.f32.mrb[0].mxu0
        %v4109 = vadd.f32 0.0, %v4108
        %v4110 = vpop.f32.mrb[0].mxu0
        %v4111 = vadd.f32 0.0, %v4110
        %4112 = vmatprep.mubr.bf16.mxu0 %v3192
        %4113 = vmatmul.mubr.bf16.gmra.mrb[0].mxu0 %v3191
        %v4114 = vpop.f32.mrb[0].mxu0
        %v4115 = vadd.f32 0.0, %v4114
        %v4116 = vpop.f32.mrb[0].mxu0
        %v4117 = vadd.f32 0.0, %v4116
        %v4118 = vpop.f32.mrb[0].mxu0
        %v4119 = vadd.f32 0.0, %v4118
        %v4120 = vpop.f32.mrb[0].mxu0
        %v4121 = vadd.f32 0.0, %v4120
        %4122 = vmatprep.mubr.bf16.mxu0 %v3194
        %4123 = vmatmul.mubr.bf16.gmra.mrb[0].mxu0 %v3193
        %v4124 = vpop.f32.mrb[0].mxu0
        %v4125 = vadd.f32 0.0, %v4124
        %v4126 = vpop.f32.mrb[0].mxu0
        %v4127 = vadd.f32 0.0, %v4126
        %v4128 = vpop.f32.mrb[0].mxu0
        %v4129 = vadd.f32 0.0, %v4128
        %v4130 = vpop.f32.mrb[0].mxu0
        %v4131 = vadd.f32 0.0, %v4130
        %4132 = vmatprep.mubr.bf16.mxu0 %v3196
        %4133 = vmatmul.mubr.bf16.gmra.mrb[0].mxu0 %v3195
        %v4134 = vpop.f32.mrb[0].mxu0
        %v4135 = vadd.f32 0.0, %v4134
        %v4136 = vpop.f32.mrb[0].mxu0
        %v4137 = vadd.f32 0.0, %v4136
        %v4138 = vpop.f32.mrb[0].mxu0
        %v4139 = vadd.f32 0.0, %v4138
        %v4140 = vpop.f32.mrb[0].mxu0
        %v4141 = vadd.f32 0.0, %v4140
        %4142 = vmatprep.mubr.bf16.mxu0 %v3198
        %4143 = vmatmul.mubr.bf16.gmra.mrb[0].mxu0 %v3197
        %v4144 = vpop.f32.mrb[0].mxu0
        %v4145 = vadd.f32 0.0, %v4144
        %v4146 = vpop.f32.mrb[0].mxu0
        %v4147 = vadd.f32 0.0, %v4146
        %v4148 = vpop.f32.mrb[0].mxu0
        %v4149 = vadd.f32 0.0, %v4148
        %v4150 = vpop.f32.mrb[0].mxu0
        %v4151 = vadd.f32 0.0, %v4150
        %4152 = vdwg.mxu0
        %4153 = vmatprep.subr.bf16.mxu0 %v3716
        %4154 = vmatpush1.bf16.msra.mxu0 %v3715
        %4155 = vmatprep.subr.bf16.mxu0 %v3724
        %4156 = vmatpush1.bf16.msra.mxu0 %v3723
        %4157 = vmatprep.subr.bf16.mxu0 %v3732
        %4158 = vmatpush1.bf16.msra.mxu0 %v3731
        %4159 = vmatprep.subr.bf16.mxu0 %v3740
        %4160 = vmatpush1.bf16.msra.mxu0 %v3739
        %4161 = vmatprep.subr.bf16.mxu0 %v3748
        %4162 = vmatpush1.bf16.msra.mxu0 %v3747
        %4163 = vmatprep.subr.bf16.mxu0 %v3756
        %4164 = vmatpush1.bf16.msra.mxu0 %v3755
        %4165 = vmatprep.subr.bf16.mxu0 %v3764
        %4166 = vmatpush1.bf16.msra.mxu0 %v3763
        %4167 = vmatprep.subr.bf16.mxu0 %v3772
        %4168 = vmatpush1.bf16.msra.mxu0 %v3771
        %4169 = vmatprep.subr.bf16.mxu0 %v3780
        %4170 = vmatpush1.bf16.msra.mxu0 %v3779
        %4171 = vmatprep.subr.bf16.mxu0 %v3788
        %4172 = vmatpush1.bf16.msra.mxu0 %v3787
        %4173 = vmatprep.subr.bf16.mxu0 %v3796
        %4174 = vmatpush1.bf16.msra.mxu0 %v3795
        %4175 = vmatprep.subr.bf16.mxu0 %v3804
        %4176 = vmatpush1.bf16.msra.mxu0 %v3803
        %4177 = vmatprep.subr.bf16.mxu0 %v3812
        %4178 = vmatpush1.bf16.msra.mxu0 %v3811
        %4179 = vmatprep.subr.bf16.mxu0 %v3820
        %4180 = vmatpush1.bf16.msra.mxu0 %v3819
        %4181 = vmatprep.subr.bf16.mxu0 %v3828
        %4182 = vmatpush1.bf16.msra.mxu0 %v3827
        %4183 = vmatprep.subr.bf16.mxu0 %v3836
        %4184 = vmatpush1.bf16.msra.mxu0 %v3835
        %4185 = vmatprep.mubr.bf16.mxu0 %v3188
        %4186 = vmatmul.mubr.bf16.gmra.mrb[0].mxu0 %v3187
        %v4187 = vpop.f32.mrb[0].mxu0
        %v4188 = vadd.f32 0.0, %v4187
        %v4189 = vpop.f32.mrb[0].mxu0
        %v4190 = vadd.f32 0.0, %v4189
        %v4191 = vpop.f32.mrb[0].mxu0
        %v4192 = vadd.f32 0.0, %v4191
        %v4193 = vpop.f32.mrb[0].mxu0
        %v4194 = vadd.f32 0.0, %v4193
        %4195 = vmatprep.mubr.bf16.mxu0 %v3190
        %4196 = vmatmul.mubr.bf16.gmra.mrb[0].mxu0 %v3189
        %v4197 = vpop.f32.mrb[0].mxu0
        %v4198 = vadd.f32 0.0, %v4197
        %v4199 = vpop.f32.mrb[0].mxu0
        %v4200 = vadd.f32 0.0, %v4199
        %v4201 = vpop.f32.mrb[0].mxu0
        %v4202 = vadd.f32 0.0, %v4201
        %v4203 = vpop.f32.mrb[0].mxu0
        %v4204 = vadd.f32 0.0, %v4203
        %4205 = vmatprep.mubr.bf16.mxu0 %v3192
        %4206 = vmatmul.mubr.bf16.gmra.mrb[0].mxu0 %v3191
        %v4207 = vpop.f32.mrb[0].mxu0
        %v4208 = vadd.f32 0.0, %v4207
        %v4209 = vpop.f32.mrb[0].mxu0
        %v4210 = vadd.f32 0.0, %v4209
        %v4211 = vpop.f32.mrb[0].mxu0
        %v4212 = vadd.f32 0.0, %v4211
        %v4213 = vpop.f32.mrb[0].mxu0
        %v4214 = vadd.f32 0.0, %v4213
        %4215 = vmatprep.mubr.bf16.mxu0 %v3194
        %4216 = vmatmul.mubr.bf16.gmra.mrb[0].mxu0 %v3193
        %v4217 = vpop.f32.mrb[0].mxu0
        %v4218 = vadd.f32 0.0, %v4217
        %v4219 = vpop.f32.mrb[0].mxu0
        %v4220 = vadd.f32 0.0, %v4219
        %v4221 = vpop.f32.mrb[0].mxu0
        %v4222 = vadd.f32 0.0, %v4221
        %v4223 = vpop.f32.mrb[0].mxu0
        %v4224 = vadd.f32 0.0, %v4223
        %4225 = vmatprep.mubr.bf16.mxu0 %v3196
        %4226 = vmatmul.mubr.bf16.gmra.mrb[0].mxu0 %v3195
        %v4227 = vpop.f32.mrb[0].mxu0
        %v4228 = vadd.f32 0.0, %v4227
        %v4229 = vpop.f32.mrb[0].mxu0
        %v4230 = vadd.f32 0.0, %v4229
        %v4231 = vpop.f32.mrb[0].mxu0
        %v4232 = vadd.f32 0.0, %v4231
        %v4233 = vpop.f32.mrb[0].mxu0
        %v4234 = vadd.f32 0.0, %v4233
        %4235 = vmatprep.mubr.bf16.mxu0 %v3198
        %4236 = vmatmul.mubr.bf16.gmra.mrb[0].mxu0 %v3197
        %v4237 = vpop.f32.mrb[0].mxu0
        %v4238 = vadd.f32 0.0, %v4237
        %v4239 = vpop.f32.mrb[0].mxu0
        %v4240 = vadd.f32 0.0, %v4239
        %v4241 = vpop.f32.mrb[0].mxu0
        %v4242 = vadd.f32 0.0, %v4241
        %v4243 = vpop.f32.mrb[0].mxu0
        %v4244 = vadd.f32 0.0, %v4243
        %4245 = vdwg.mxu0
        %4246 = vmatprep.subr.bf16.mxu0 %v3718
        %4247 = vmatpush1.bf16.msra.mxu0 %v3717
        %4248 = vmatprep.subr.bf16.mxu0 %v3726
        %4249 = vmatpush1.bf16.msra.mxu0 %v3725
        %4250 = vmatprep.subr.bf16.mxu0 %v3734
        %4251 = vmatpush1.bf16.msra.mxu0 %v3733
        %4252 = vmatprep.subr.bf16.mxu0 %v3742
        %4253 = vmatpush1.bf16.msra.mxu0 %v3741
        %4254 = vmatprep.subr.bf16.mxu0 %v3750
        %4255 = vmatpush1.bf16.msra.mxu0 %v3749
        %4256 = vmatprep.subr.bf16.mxu0 %v3758
        %4257 = vmatpush1.bf16.msra.mxu0 %v3757
        %4258 = vmatprep.subr.bf16.mxu0 %v3766
        %4259 = vmatpush1.bf16.msra.mxu0 %v3765
        %4260 = vmatprep.subr.bf16.mxu0 %v3774
        %4261 = vmatpush1.bf16.msra.mxu0 %v3773
        %4262 = vmatprep.subr.bf16.mxu0 %v3782
        %4263 = vmatpush1.bf16.msra.mxu0 %v3781
        %4264 = vmatprep.subr.bf16.mxu0 %v3790
        %4265 = vmatpush1.bf16.msra.mxu0 %v3789
        %4266 = vmatprep.subr.bf16.mxu0 %v3798
        %4267 = vmatpush1.bf16.msra.mxu0 %v3797
        %4268 = vmatprep.subr.bf16.mxu0 %v3806
        %4269 = vmatpush1.bf16.msra.mxu0 %v3805
        %4270 = vmatprep.subr.bf16.mxu0 %v3814
        %4271 = vmatpush1.bf16.msra.mxu0 %v3813
        %4272 = vmatprep.subr.bf16.mxu0 %v3822
        %4273 = vmatpush1.bf16.msra.mxu0 %v3821
        %4274 = vmatprep.subr.bf16.mxu0 %v3830
        %4275 = vmatpush1.bf16.msra.mxu0 %v3829
        %4276 = vmatprep.subr.bf16.mxu0 %v3838
        %4277 = vmatpush1.bf16.msra.mxu0 %v3837
        %4278 = vmatprep.mubr.bf16.mxu0 %v3188
        %4279 = vmatmul.mubr.bf16.gmra.mrb[0].mxu0 %v3187
        %v4280 = vpop.f32.mrb[0].mxu0
        %v4281 = vadd.f32 0.0, %v4280
        %v4282 = vpop.f32.mrb[0].mxu0
        %v4283 = vadd.f32 0.0, %v4282
        %v4284 = vpop.f32.mrb[0].mxu0
        %v4285 = vadd.f32 0.0, %v4284
        %v4286 = vpop.f32.mrb[0].mxu0
        %v4287 = vadd.f32 0.0, %v4286
        %4288 = vmatprep.mubr.bf16.mxu0 %v3190
        %4289 = vmatmul.mubr.bf16.gmra.mrb[0].mxu0 %v3189
        %v4290 = vpop.f32.mrb[0].mxu0
        %v4291 = vadd.f32 0.0, %v4290
        %v4292 = vpop.f32.mrb[0].mxu0
        %v4293 = vadd.f32 0.0, %v4292
        %v4294 = vpop.f32.mrb[0].mxu0
        %v4295 = vadd.f32 0.0, %v4294
        %v4296 = vpop.f32.mrb[0].mxu0
        %v4297 = vadd.f32 0.0, %v4296
        %4298 = vmatprep.mubr.bf16.mxu0 %v3192
        %4299 = vmatmul.mubr.bf16.gmra.mrb[0].mxu0 %v3191
        %v4300 = vpop.f32.mrb[0].mxu0
        %v4301 = vadd.f32 0.0, %v4300
        %v4302 = vpop.f32.mrb[0].mxu0
        %v4303 = vadd.f32 0.0, %v4302
        %v4304 = vpop.f32.mrb[0].mxu0
        %v4305 = vadd.f32 0.0, %v4304
        %v4306 = vpop.f32.mrb[0].mxu0
        %v4307 = vadd.f32 0.0, %v4306
        %4308 = vmatprep.mubr.bf16.mxu0 %v3194
        %4309 = vmatmul.mubr.bf16.gmra.mrb[0].mxu0 %v3193
        %v4310 = vpop.f32.mrb[0].mxu0
        %v4311 = vadd.f32 0.0, %v4310
        %v4312 = vpop.f32.mrb[0].mxu0
        %v4313 = vadd.f32 0.0, %v4312
        %v4314 = vpop.f32.mrb[0].mxu0
        %v4315 = vadd.f32 0.0, %v4314
        %v4316 = vpop.f32.mrb[0].mxu0
        %v4317 = vadd.f32 0.0, %v4316
        %4318 = vmatprep.mubr.bf16.mxu0 %v3196
        %4319 = vmatmul.mubr.bf16.gmra.mrb[0].mxu0 %v3195
        %v4320 = vpop.f32.mrb[0].mxu0
        %v4321 = vadd.f32 0.0, %v4320
        %v4322 = vpop.f32.mrb[0].mxu0
        %v4323 = vadd.f32 0.0, %v4322
        %v4324 = vpop.f32.mrb[0].mxu0
        %v4325 = vadd.f32 0.0, %v4324
        %v4326 = vpop.f32.mrb[0].mxu0
        %v4327 = vadd.f32 0.0, %v4326
        %4328 = vmatprep.mubr.bf16.mxu0 %v3198
        %4329 = vmatmul.mubr.bf16.gmra.mrb[0].mxu0 %v3197
        %v4330 = vpop.f32.mrb[0].mxu0
        %v4331 = vadd.f32 0.0, %v4330
        %v4332 = vpop.f32.mrb[0].mxu0
        %v4333 = vadd.f32 0.0, %v4332
        %v4334 = vpop.f32.mrb[0].mxu0
        %v4335 = vadd.f32 0.0, %v4334
        %v4336 = vpop.f32.mrb[0].mxu0
        %v4337 = vadd.f32 0.0, %v4336
        %4338 = vdwg.mxu0
        %4339 = vst [vmem:[%s609] sm:$0xff] %v4002
        %4340 = vst [vmem:[%s609 + $0x8] sm:$0xff] %v4004
        %4341 = vst [vmem:[%s609 + $0x10] sm:$0xff] %v4095
        %4342 = vst [vmem:[%s609 + $0x18] sm:$0xff] %v4097
        %4343 = vst [vmem:[%s609 + $0x20] sm:$0xff] %v4188
        %4344 = vst [vmem:[%s609 + $0x28] sm:$0xff] %v4190
        %4345 = vst [vmem:[%s609 + $0x30] sm:$0xff] %v4281
        %4346 = vst [vmem:[%s609 + $0x38] sm:$0xff] %v4283
        %4347 = vst [vmem:[%s609 + $0x40] sm:$0xff] %v4006
        %4348 = vst [vmem:[%s609 + $0x48] sm:$0xff] %v4008
        %4349 = vst [vmem:[%s609 + $0x50] sm:$0xff] %v4099
        %4350 = vst [vmem:[%s609 + $0x58] sm:$0xff] %v4101
        %4351 = vst [vmem:[%s609 + $0x60] sm:$0xff] %v4192
        %4352 = vst [vmem:[%s609 + $0x68] sm:$0xff] %v4194
        %4353 = vst [vmem:[%s609 + $0x70] sm:$0xff] %v4285
        %4354 = vst [vmem:[%s609 + $0x78] sm:$0xff] %v4287
        %4355 = vst [vmem:[%s609 + $0x80] sm:$0xff] %v4012
        %4356 = vst [vmem:[%s609 + $0x88] sm:$0xff] %v4014
        %4357 = vst [vmem:[%s609 + $0x90] sm:$0xff] %v4105
        %4358 = vst [vmem:[%s609 + $0x98] sm:$0xff] %v4107
        %4359 = vst [vmem:[%s609 + $0xa0] sm:$0xff] %v4198
        %4360 = vst [vmem:[%s609 + $0xa8] sm:$0xff] %v4200
        %4361 = vst [vmem:[%s609 + $0xb0] sm:$0xff] %v4291
        %4362 = vst [vmem:[%s609 + $0xb8] sm:$0xff] %v4293
        %4363 = vst [vmem:[%s609 + $0xc0] sm:$0xff] %v4016
        %4364 = vst [vmem:[%s609 + $0xc8] sm:$0xff] %v4018
        %4365 = vst [vmem:[%s609 + $0xd0] sm:$0xff] %v4109
        %4366 = vst [vmem:[%s609 + $0xd8] sm:$0xff] %v4111
        %4367 = vst [vmem:[%s609 + $0xe0] sm:$0xff] %v4202
        %4368 = vst [vmem:[%s609 + $0xe8] sm:$0xff] %v4204
        %4369 = vst [vmem:[%s609 + $0xf0] sm:$0xff] %v4295
        %4370 = vst [vmem:[%s609 + $0xf8] sm:$0xff] %v4297
        %4371 = vst [vmem:[%s609 + $0x100] sm:$0xff] %v4022
        %4372 = vst [vmem:[%s609 + $0x108] sm:$0xff] %v4024
        %4373 = vst [vmem:[%s609 + $0x110] sm:$0xff] %v4115
        %4374 = vst [vmem:[%s609 + $0x118] sm:$0xff] %v4117
        %4375 = vst [vmem:[%s609 + $0x120] sm:$0xff] %v4208
        %4376 = vst [vmem:[%s609 + $0x128] sm:$0xff] %v4210
        %4377 = vst [vmem:[%s609 + $0x130] sm:$0xff] %v4301
        %4378 = vst [vmem:[%s609 + $0x138] sm:$0xff] %v4303
        %4379 = vst [vmem:[%s609 + $0x140] sm:$0xff] %v4026
        %4380 = vst [vmem:[%s609 + $0x148] sm:$0xff] %v4028
        %4381 = vst [vmem:[%s609 + $0x150] sm:$0xff] %v4119
        %4382 = vst [vmem:[%s609 + $0x158] sm:$0xff] %v4121
        %4383 = vst [vmem:[%s609 + $0x160] sm:$0xff] %v4212
        %4384 = vst [vmem:[%s609 + $0x168] sm:$0xff] %v4214
        %4385 = vst [vmem:[%s609 + $0x170] sm:$0xff] %v4305
        %4386 = vst [vmem:[%s609 + $0x178] sm:$0xff] %v4307
        %4387 = vst [vmem:[%s609 + $0x180] sm:$0xff] %v4032
        %4388 = vst [vmem:[%s609 + $0x188] sm:$0xff] %v4034
        %4389 = vst [vmem:[%s609 + $0x190] sm:$0xff] %v4125
        %4390 = vst [vmem:[%s609 + $0x198] sm:$0xff] %v4127
        %4391 = vst [vmem:[%s609 + $0x1a0] sm:$0xff] %v4218
        %4392 = vst [vmem:[%s609 + $0x1a8] sm:$0xff] %v4220
        %4393 = vst [vmem:[%s609 + $0x1b0] sm:$0xff] %v4311
        %4394 = vst [vmem:[%s609 + $0x1b8] sm:$0xff] %v4313
        %4395 = vst [vmem:[%s609 + $0x1c0] sm:$0xff] %v4036
        %4396 = vst [vmem:[%s609 + $0x1c8] sm:$0xff] %v4038
        %4397 = vst [vmem:[%s609 + $0x1d0] sm:$0xff] %v4129
        %4398 = vst [vmem:[%s609 + $0x1d8] sm:$0xff] %v4131
        %4399 = vst [vmem:[%s609 + $0x1e0] sm:$0xff] %v4222
        %4400 = vst [vmem:[%s609 + $0x1e8] sm:$0xff] %v4224
        %4401 = vst [vmem:[%s609 + $0x1f0] sm:$0xff] %v4315
        %4402 = vst [vmem:[%s609 + $0x1f8] sm:$0xff] %v4317
        %4403 = vst [vmem:[%s609 + $0x200] sm:$0xff] %v4042
        %4404 = vst [vmem:[%s609 + $0x208] sm:$0xff] %v4044
        %4405 = vst [vmem:[%s609 + $0x210] sm:$0xff] %v4135
        %4406 = vst [vmem:[%s609 + $0x218] sm:$0xff] %v4137
        %4407 = vst [vmem:[%s609 + $0x220] sm:$0xff] %v4228
        %4408 = vst [vmem:[%s609 + $0x228] sm:$0xff] %v4230
        %4409 = vst [vmem:[%s609 + $0x230] sm:$0xff] %v4321
        %4410 = vst [vmem:[%s609 + $0x238] sm:$0xff] %v4323
        %4411 = vst [vmem:[%s609 + $0x240] sm:$0xff] %v4046
        %4412 = vst [vmem:[%s609 + $0x248] sm:$0xff] %v4048
        %4413 = vst [vmem:[%s609 + $0x250] sm:$0xff] %v4139
        %4414 = vst [vmem:[%s609 + $0x258] sm:$0xff] %v4141
        %4415 = vst [vmem:[%s609 + $0x260] sm:$0xff] %v4232
        %4416 = vst [vmem:[%s609 + $0x268] sm:$0xff] %v4234
        %4417 = vst [vmem:[%s609 + $0x270] sm:$0xff] %v4325
        %4418 = vst [vmem:[%s609 + $0x278] sm:$0xff] %v4327
        %4419 = vst [vmem:[%s609 + $0x280] sm:$0xff] %v4052
        %4420 = vst [vmem:[%s609 + $0x288] sm:$0xff] %v4054
        %4421 = vst [vmem:[%s609 + $0x290] sm:$0xff] %v4145
        %4422 = vst [vmem:[%s609 + $0x298] sm:$0xff] %v4147
        %4423 = vst [vmem:[%s609 + $0x2a0] sm:$0xff] %v4238
        %4424 = vst [vmem:[%s609 + $0x2a8] sm:$0xff] %v4240
        %4425 = vst [vmem:[%s609 + $0x2b0] sm:$0xff] %v4331
        %4426 = vst [vmem:[%s609 + $0x2b8] sm:$0xff] %v4333
        %4427 = vst [vmem:[%s609 + $0x2c0] sm:$0xff] %v4056
        %4428 = vst [vmem:[%s609 + $0x2c8] sm:$0xff] %v4058
        %4429 = vst [vmem:[%s609 + $0x2d0] sm:$0xff] %v4149
        %4430 = vst [vmem:[%s609 + $0x2d8] sm:$0xff] %v4151
        %4431 = vst [vmem:[%s609 + $0x2e0] sm:$0xff] %v4242
        %4432 = vst [vmem:[%s609 + $0x2e8] sm:$0xff] %v4244
        %4433 = vst [vmem:[%s609 + $0x2f0] sm:$0xff] %v4335
        %4434 = vst [vmem:[%s609 + $0x2f8] sm:$0xff] %v4337
        %s4435 = sand.u32 %s296, 1
        %s4436 = scalar_lea.sflag [#allocation7], %s4435
        %s4437 = sand.u32 %s296, 1
        %s4438 = smul.addr %s4437, 768
        %s4439 = scalar_lea.vmem [#allocation17], %s4438
        // Predicated region
        $region89: #{tpu_custom_call.1} parent=59 // pred_check
          %p4440 = pneg %p306
        $region90: #{tpu_custom_call.1} parent=59 // pred_check_branch
          %4442 = sbr.rel (%p4440) target = $region92
        $region91: #{tpu_custom_call.1} parent=59 // pred_region
          %s4444 = ssub.s32 12288, 12288
          %4445 = vsyncadd %s4436, %s4444
          %s4446 = smul.addr %s39, 96
          %s4447 = smul.addr %s4446, 128
          %s4448 = scalar_lea.hbm %s11, %s4447
          %s4449 = sshll.u32 %s4439, 4
          %s4450 = int_to_ptr.vmem [resolvable:$true] %s4449
          %4455 = dma.vmem_to_hbm [thread:$0]  %s4450, 12288, %s4448, %s4436, 1024, 1024, 64
        $region92: #{tpu_custom_call.1} parent=59 // pred_fallthru
          _
      $region60: #{tpu_custom_call.1} parent=5 // pred_fallthru
        _
      %p4456 = scmp.le.s32.totalorder 2, %s34
      // Predicated region
      $region93: #{tpu_custom_call.1} parent=5 // pred_check
        %p4457 = pneg %p4456
      $region94: #{tpu_custom_call.1} parent=5 // pred_check_branch
        %4459 = sbr.rel (%p4457) target = $region96
      $region95: #{tpu_custom_call.1} parent=5 // pred_region
        %s4460 = ssub.s32 %s34, 2
        // Predicated region
        $region97: #{tpu_custom_call.1} parent=95 // pred_check
          %p4461 = pneg %p312
        $region98: #{tpu_custom_call.1} parent=95 // pred_check_branch
          %4463 = sbr.rel (%p4461) target = $region100
        $region99: #{tpu_custom_call.1} parent=95 // pred_region
          %s4464 = sand.u32 %s297, 1
          %s4465 = scalar_lea.sflag [#allocation7], %s4464
          %s4466 = sand.u32 %s297, 1
          %s4467 = smul.addr %s4466, 768
          %s4468 = scalar_lea.vmem [#allocation17], %s4467
          %4469 = dma.done %s4465, 12288
        $region100: #{tpu_custom_call.1} parent=95 // pred_fallthru
          _
      $region96: #{tpu_custom_call.1} parent=5 // pred_fallthru
        _
    $region6: #{tpu_custom_call.1} parent=1 // loop_footer
      %s38 = sadd.s32 1, %s34
    $region7: #{tpu_custom_call.1} parent=1 // loop_footer_branch
      %33 = sbr.rel target = $region3
    $region8: #{tpu_custom_call.1} parent=1 // loop_exit
      _
    %4470 = vsyncpa [#allocation6], 1
    %s4471 = scalar_lea.sflag [#allocation6], 1
    %4472 = vsyncpa %s4471, 1
    %4473 = vsyncpa [#allocation9], 1
    %s4474 = scalar_lea.sflag [#allocation9], 1
    %4475 = vsyncpa %s4474, 1
    %4476 = vsyncpa [#allocation12], 1
    %s4477 = scalar_lea.sflag [#allocation12], 1
    %4478 = vsyncpa %s4477, 1
    %4479 = vsyncpa [#allocation15], 1
    %4480 = vsyncpa [#allocation7], 1
    %s4481 = scalar_lea.sflag [#allocation7], 1
    %4482 = vsyncpa %s4481, 1

</llo_original>
